<compile_context>
chip_gen: v6e
topology: v6e:2x2x1
jax: 0.10.0
libtpu: 0.0.40
codegen_flags: <defaults>
</compile_context>

<pallas_src>
import math
import jax
import jax.numpy as jnp
from jax import lax
from jax.experimental import pallas as pl
from jax.experimental.pallas import tpu as pltpu

# ---------------- tiny synthetic Llama config ----------------
B, S = 2, 8          # batch, sequence length
H = 32               # hidden size
NH, HD = 4, 8        # attention heads, head dim (NH * HD == H)
I = 64               # MLP intermediate size
V = 64               # vocab size
VP = 128             # lm_head output padded to a full lane width
N_LAYERS = 2         # decoder layers
TARGET_LAYER = 1     # layer whose output the forward hook captures
EPS = 1e-5
NEG = -1e9
ROPE_THETA = 10000.0
BS = B * S


# ---------------- fused Pallas kernel ----------------
def _llama_fused_kernel(x_ref, mask_ref, cos_ref, sin_ref,
                        wqkv_ref, wo_ref, wgu_ref, wd_ref,
                        ln1_ref, ln2_ref, lnf_ref, wlm_ref,
                        logits_ref, hook_ref):
    """Full Llama forward: N_LAYERS decoder layers + final norm + lm_head.

    x_ref:    (B*S, H)  bf16 embedded tokens
    mask_ref: (B, S)    f32  (1 = keep, 0 = pad)
    cos/sin:  (S, HD)   f32  RoPE tables
    wqkv:     (L, H, 3H)  wo: (L, H, H)  wgu: (L, H, 2I)  wd: (L, I, H)   (bf16)
    ln1/ln2:  (L, 1, H)   lnf: (1, H)    wlm: (H, VP)                     (bf16)
    logits_ref: (B*S, VP) f32   hook_ref: (B*S, H) bf16
    """
    f32 = jnp.float32
    bf16 = jnp.bfloat16

    x = x_ref[...].astype(f32)                                   # (BS, H)

    # ---- attention bias (causal + key padding), hoisted out of all loops ----
    q_idx = lax.broadcasted_iota(jnp.int32, (S, S), 0)
    k_idx = lax.broadcasted_iota(jnp.int32, (S, S), 1)
    causal = k_idx <= q_idx                                      # (S, S)
    key_ok = mask_ref[...].astype(f32) > 0.5                     # (B, S)
    bias = jnp.where(causal[None, :, :] & key_ok[:, None, :], 0.0, NEG)  # (B, S, S)

    # ---- RoPE tables broadcast once (JAX does not CSE broadcast_in_dim) ----
    cosb = jnp.broadcast_to(cos_ref[...][None, :, :], (B, S, HD))
    sinb = jnp.broadcast_to(sin_ref[...][None, :, :], (B, S, HD))

    scale = 1.0 / math.sqrt(HD)

    def rmsnorm(t, w_row):                                       # t (BS,H) f32, w (1,H)
        var = jnp.mean(t * t, axis=-1, keepdims=True)
        return t * lax.rsqrt(var + EPS) * w_row.astype(f32)

    def rope(t):                                                 # t (B, S, HD) f32
        t1 = t[..., : HD // 2]
        t2 = t[..., HD // 2:]
        rot = jnp.concatenate([-t2, t1], axis=-1)                # rotate_half
        return t * cosb + rot * sinb

    for li in range(N_LAYERS):                                   # static layer loop
        # ---- self-attention ----
        h = rmsnorm(x, ln1_ref[li]).astype(bf16)                 # bf16 matmul operand
        qkv = jnp.dot(h, wqkv_ref[li], preferred_element_type=f32)   # (BS, 3H) f32
        q = qkv[:, :H]
        k = qkv[:, H:2 * H]
        v = qkv[:, 2 * H:]

        heads = []
        for hh in range(NH):                                     # static head loop
            lo = hh * HD
            qh = rope(q[:, lo:lo + HD].reshape(B, S, HD))
            kh = rope(k[:, lo:lo + HD].reshape(B, S, HD))
            vh = v[:, lo:lo + HD].reshape(B, S, HD)
            s = jnp.einsum('bqd,bkd->bqk', qh.astype(bf16), kh.astype(bf16),
                           preferred_element_type=f32) * scale + bias     # (B,S,S)
            s = s - jnp.max(s, axis=-1, keepdims=True)
            p = jnp.exp(s)
            p = p * pl.reciprocal(jnp.sum(p, axis=-1, keepdims=True), approx=True)
            heads.append(jnp.einsum('bqk,bkd->bqd', p.astype(bf16), vh.astype(bf16),
                                    preferred_element_type=f32))          # (B,S,HD)

        attn = jnp.concatenate(heads, axis=-1).reshape(BS, H)    # (BS, H) f32
        attn = jnp.dot(attn.astype(bf16), wo_ref[li], preferred_element_type=f32)
        x = x + attn                                             # residual

        # ---- SwiGLU MLP (gate/up fused -> 128-lane output) ----
        h2 = rmsnorm(x, ln2_ref[li]).astype(bf16)
        gu = jnp.dot(h2, wgu_ref[li], preferred_element_type=f32)    # (BS, 2I)
        g = gu[:, :I]
        u = gu[:, I:]
        act = (g * jax.nn.sigmoid(g) * u).astype(bf16)           # SiLU(gate) * up
        d = jnp.dot(act, wd_ref[li], preferred_element_type=f32)
        x = x + d                                                # residual

        # hidden states between layers are bf16 (matches the bf16 torch model)
        xb = x.astype(bf16)
        if li == TARGET_LAYER:
            hook_ref[...] = xb                                   # forward-hook capture
        x = xb.astype(f32)

    # ---- final RMSNorm + lm_head (V padded to 128 lanes) ----
    hf = rmsnorm(x, lnf_ref[...]).astype(bf16)
    logits_ref[...] = jnp.dot(hf, wlm_ref[...], preferred_element_type=f32)


# ---------------- wrappers ----------------
def rope_tables():
    inv_freq = 1.0 / (ROPE_THETA ** (jnp.arange(0, HD, 2, dtype=jnp.float32) / HD))
    pos = jnp.arange(S, dtype=jnp.float32)
    ang = pos[:, None] * inv_freq[None, :]                   # (S, HD/2)
    ang = jnp.concatenate([ang, ang], axis=-1)               # (S, HD) HF convention
    return jnp.cos(ang), jnp.sin(ang)


def init_params(key):
    """Deterministic synthetic weights; target layer linears use kaiming-normal
    (fan_in, gain ~ sqrt(2)) to mirror the module's re-initialisation.  QKV and
    gate/up weights are stored fused; all per-layer weights are stacked on a
    leading layer axis so one pallas_call sees the whole model."""
    keys = jax.random.split(key, 2 + N_LAYERS)
    params = {}
    params["embed"] = (0.02 * jax.random.normal(keys[0], (V, H))).astype(jnp.bfloat16)
    params["ln_f"] = jnp.ones((1, H), jnp.bfloat16)
    w_lm = (0.02 * jax.random.normal(keys[1], (H, V))).astype(jnp.bfloat16)
    params["w_lm"] = jnp.zeros((H, VP), jnp.bfloat16).at[:, :V].set(w_lm)

    def linear(k, fan_in, fan_out, kaiming):
        std = math.sqrt(2.0 / fan_in) if kaiming else 0.02
        return (std * jax.random.normal(k, (fan_in, fan_out))).astype(jnp.bfloat16)

    wqkv, wo, wgu, wd = [], [], [], []
    for li in range(N_LAYERS):
        kaiming = (li == TARGET_LAYER)
        ks = jax.random.split(keys[2 + li], 4)
        wqkv.append(linear(ks[0], H, 3 * H, kaiming))
        wo.append(linear(ks[1], H, H, kaiming))
        wgu.append(linear(ks[2], H, 2 * I, kaiming))
        wd.append(linear(ks[3], I, H, kaiming))
    params["w_qkv"] = jnp.stack(wqkv)     # (L, H, 3H)
    params["w_o"] = jnp.stack(wo)         # (L, H, H)
    params["w_gu"] = jnp.stack(wgu)       # (L, H, 2I)
    params["w_d"] = jnp.stack(wd)         # (L, I, H)
    params["ln1"] = jnp.ones((N_LAYERS, 1, H), jnp.bfloat16)
    params["ln2"] = jnp.ones((N_LAYERS, 1, H), jnp.bfloat16)
    return params


def llama_forward(params, input_ids, attention_mask):
    """Returns (logits, hook_output) mirroring LlamaLayerTrainer: the model forward
    plus the captured hidden state of the target decoder layer."""
    cos, sin = rope_tables()
    x = jnp.take(params["embed"], input_ids, axis=0)          # glue: embedding lookup
    x2d = x.reshape(BS, H)
    mask = attention_mask.astype(jnp.float32)                 # (B, S)

    logits_p, hook2d = pl.pallas_call(
        _llama_fused_kernel,
        out_shape=(jax.ShapeDtypeStruct((BS, VP), jnp.float32),
                   jax.ShapeDtypeStruct((BS, H), jnp.bfloat16)),
        compiler_params=pltpu.CompilerParams(vmem_limit_bytes=32 * 1024 * 1024),
    )(x2d, mask, cos, sin,
      params["w_qkv"], params["w_o"], params["w_gu"], params["w_d"],
      params["ln1"], params["ln2"], params["ln_f"], params["w_lm"])

    logits = logits_p[:, :V].reshape(B, S, V)                 # drop lane padding
    hook_output = hook2d.reshape(B, S, H)
    return logits, hook_output

# TODO(synk): checkpoint loading, tokenizer, requires_grad freezing, hook
# registration machinery and gradient_checkpointing_enable are training-infra
# concerns with no Pallas-kernel equivalent; only the forward math is implemented.


if __name__ == "__main__":
    key = jax.random.PRNGKey(0)
    k_param, k_ids = jax.random.split(key)
    params = init_params(k_param)

    input_ids = jax.random.randint(k_ids, (B, S), 0, V, dtype=jnp.int32)
    attention_mask = jnp.ones((B, S), dtype=jnp.int32).at[1, S - 1].set(0)  # one pad

    logits, hook_out = llama_forward(params, input_ids, attention_mask)
    jax.block_until_ready(logits)
    jax.block_until_ready(hook_out)

    assert logits.shape == (B, S, V)
    assert hook_out.shape == (B, S, H)
    assert bool(jnp.all(jnp.isfinite(logits)))
    print("KERNEL_OK")
</pallas_src>

<mosaic_0001>
module attributes {stable_mosaic.version = 11 : i64} {
  func.func @_llama_fused_kernel(%arg0: memref<16x32xbf16, #tpu.memory_space<vmem>>, %arg1: memref<2x8xf32, #tpu.memory_space<vmem>>, %arg2: memref<8x8xf32, #tpu.memory_space<vmem>>, %arg3: memref<8x8xf32, #tpu.memory_space<vmem>>, %arg4: memref<2x32x96xbf16, #tpu.memory_space<vmem>>, %arg5: memref<2x32x32xbf16, #tpu.memory_space<vmem>>, %arg6: memref<2x32x128xbf16, #tpu.memory_space<vmem>>, %arg7: memref<2x64x32xbf16, #tpu.memory_space<vmem>>, %arg8: memref<2x1x32xbf16, #tpu.memory_space<vmem>>, %arg9: memref<2x1x32xbf16, #tpu.memory_space<vmem>>, %arg10: memref<1x32xbf16, #tpu.memory_space<vmem>>, %arg11: memref<32x128xbf16, #tpu.memory_space<vmem>>, %arg12: memref<16x128xf32, #tpu.memory_space<vmem>>, %arg13: memref<16x32xbf16, #tpu.memory_space<vmem>>) attributes {dimension_semantics = [], scalar_prefetch = 0 : i64, scratch_operands = 0 : i64, tpu.core_type = #tpu.core_type<tc>} {
    %c0 = arith.constant 0 : index
    %c0_0 = arith.constant 0 : index
    %0 = vector.load %arg0[%c0, %c0_0] : memref<16x32xbf16, #tpu.memory_space<vmem>>, vector<16x32xbf16>
    %1 = arith.extf %0 : vector<16x32xbf16> to vector<16x32xf32>
    %2 = tpu.iota {dimensions = array<i32: 0>} : vector<8x8xi32>
    %3 = tpu.iota {dimensions = array<i32: 1>} : vector<8x8xi32>
    %4 = arith.cmpi sle, %3, %2 : vector<8x8xi32>
    %c0_1 = arith.constant 0 : index
    %c0_2 = arith.constant 0 : index
    %5 = vector.load %arg1[%c0_1, %c0_2] : memref<2x8xf32, #tpu.memory_space<vmem>>, vector<2x8xf32>
    %cst = arith.constant 5.000000e-01 : f32
    %6 = vector.broadcast %cst : f32 to vector<2x8xf32>
    %7 = arith.cmpf ogt, %5, %6 : vector<2x8xf32>
    %8 = vector.shape_cast %4 : vector<8x8xi1> to vector<1x8x8xi1>
    %9 = vector.shape_cast %7 : vector<2x8xi1> to vector<2x1x8xi1>
    %10 = vector.broadcast %8 : vector<1x8x8xi1> to vector<2x8x8xi1>
    %11 = vector.broadcast %9 : vector<2x1x8xi1> to vector<2x8x8xi1>
    %12 = arith.andi %10, %11 : vector<2x8x8xi1>
    %cst_3 = arith.constant 0.000000e+00 : f32
    %cst_4 = arith.constant -1.000000e+09 : f32
    %13 = vector.broadcast %cst_3 : f32 to vector<2x8x8xf32>
    %14 = vector.broadcast %cst_4 : f32 to vector<2x8x8xf32>
    %15 = arith.select %12, %13, %14 : vector<2x8x8xi1>, vector<2x8x8xf32>
    %c0_5 = arith.constant 0 : index
    %c0_6 = arith.constant 0 : index
    %16 = vector.load %arg2[%c0_5, %c0_6] : memref<8x8xf32, #tpu.memory_space<vmem>>, vector<8x8xf32>
    %17 = vector.shape_cast %16 : vector<8x8xf32> to vector<1x8x8xf32>
    %18 = vector.shape_cast %17 : vector<1x8x8xf32> to vector<1x8x8xf32>
    %19 = vector.broadcast %18 : vector<1x8x8xf32> to vector<2x8x8xf32>
    %c0_7 = arith.constant 0 : index
    %c0_8 = arith.constant 0 : index
    %20 = vector.load %arg3[%c0_7, %c0_8] : memref<8x8xf32, #tpu.memory_space<vmem>>, vector<8x8xf32>
    %21 = vector.shape_cast %20 : vector<8x8xf32> to vector<1x8x8xf32>
    %22 = vector.shape_cast %21 : vector<1x8x8xf32> to vector<1x8x8xf32>
    %23 = vector.broadcast %22 : vector<1x8x8xf32> to vector<2x8x8xf32>
    %c0_9 = arith.constant 0 : index
    %c0_10 = arith.constant 0 : index
    %c0_11 = arith.constant 0 : index
    %24 = vector.load %arg8[%c0_9, %c0_10, %c0_11] : memref<2x1x32xbf16, #tpu.memory_space<vmem>>, vector<1x1x32xbf16>
    %25 = vector.shape_cast %24 : vector<1x1x32xbf16> to vector<1x32xbf16>
    %26 = arith.mulf %1, %1 : vector<16x32xf32>
    %cst_12 = arith.constant dense<0.000000e+00> : vector<16xf32>
    %27 = vector.multi_reduction <add>, %26, %cst_12 [1] : vector<16x32xf32> to vector<16xf32>
    %28 = vector.shape_cast %27 : vector<16xf32> to vector<16x1xf32>
    %cst_13 = arith.constant 3.200000e+01 : f32
    %29 = vector.broadcast %cst_13 : f32 to vector<16x1xf32>
    %30 = arith.divf %28, %29 : vector<16x1xf32>
    %cst_14 = arith.constant 9.99999974E-6 : f32
    %31 = vector.broadcast %cst_14 : f32 to vector<16x1xf32>
    %32 = arith.addf %30, %31 : vector<16x1xf32>
    %33 = math.rsqrt %32 : vector<16x1xf32>
    %34 = vector.broadcast %33 : vector<16x1xf32> to vector<16x32xf32>
    %35 = arith.mulf %1, %34 : vector<16x32xf32>
    %36 = arith.extf %25 : vector<1x32xbf16> to vector<1x32xf32>
    %37 = vector.broadcast %36 : vector<1x32xf32> to vector<16x32xf32>
    %38 = arith.mulf %35, %37 : vector<16x32xf32>
    %39 = arith.truncf %38 : vector<16x32xf32> to vector<16x32xbf16>
    %c0_15 = arith.constant 0 : index
    %c0_16 = arith.constant 0 : index
    %c0_17 = arith.constant 0 : index
    %40 = vector.load %arg4[%c0_15, %c0_16, %c0_17] : memref<2x32x96xbf16, #tpu.memory_space<vmem>>, vector<1x32x96xbf16>
    %41 = vector.shape_cast %40 : vector<1x32x96xbf16> to vector<32x96xbf16>
    %cst_18 = arith.constant dense<0.000000e+00> : vector<16x96xf32>
    %42 = tpu.matmul %39, %41, %cst_18 {dimension_numbers = #tpu.dot_dimension_numbers<[1], [0], [0], [1], [0, 0, 1, 1], [], []>} : vector<16x32xbf16>, vector<32x96xbf16>, vector<16x96xf32> -> vector<16x96xf32>
    %43 = vector.extract_strided_slice %42 {offsets = [0, 0], sizes = [16, 32], strides = [1, 1]} : vector<16x96xf32> to vector<16x32xf32>
    %44 = vector.extract_strided_slice %42 {offsets = [0, 32], sizes = [16, 32], strides = [1, 1]} : vector<16x96xf32> to vector<16x32xf32>
    %45 = vector.extract_strided_slice %42 {offsets = [0, 64], sizes = [16, 32], strides = [1, 1]} : vector<16x96xf32> to vector<16x32xf32>
    %46 = vector.extract_strided_slice %43 {offsets = [0, 0], sizes = [16, 8], strides = [1, 1]} : vector<16x32xf32> to vector<16x8xf32>
    %47 = vector.shape_cast %46 : vector<16x8xf32> to vector<2x8x8xf32>
    %48 = vector.extract_strided_slice %47 {offsets = [0, 0, 0], sizes = [2, 8, 4], strides = [1, 1, 1]} : vector<2x8x8xf32> to vector<2x8x4xf32>
    %49 = vector.extract_strided_slice %47 {offsets = [0, 0, 4], sizes = [2, 8, 4], strides = [1, 1, 1]} : vector<2x8x8xf32> to vector<2x8x4xf32>
    %cst_19 = arith.constant 0.000000e+00 : f32
    %50 = vector.broadcast %cst_19 : f32 to vector<2x8x4xf32>
    %51 = arith.subf %50, %49 : vector<2x8x4xf32>
    %52 = tpu.concatenate %51, %48 in 2 : vector<2x8x4xf32>, vector<2x8x4xf32> -> vector<2x8x8xf32>
    %53 = arith.mulf %47, %19 : vector<2x8x8xf32>
    %54 = arith.mulf %52, %23 : vector<2x8x8xf32>
    %55 = arith.addf %53, %54 : vector<2x8x8xf32>
    %56 = vector.extract_strided_slice %44 {offsets = [0, 0], sizes = [16, 8], strides = [1, 1]} : vector<16x32xf32> to vector<16x8xf32>
    %57 = vector.shape_cast %56 : vector<16x8xf32> to vector<2x8x8xf32>
    %58 = vector.extract_strided_slice %57 {offsets = [0, 0, 0], sizes = [2, 8, 4], strides = [1, 1, 1]} : vector<2x8x8xf32> to vector<2x8x4xf32>
    %59 = vector.extract_strided_slice %57 {offsets = [0, 0, 4], sizes = [2, 8, 4], strides = [1, 1, 1]} : vector<2x8x8xf32> to vector<2x8x4xf32>
    %cst_20 = arith.constant 0.000000e+00 : f32
    %60 = vector.broadcast %cst_20 : f32 to vector<2x8x4xf32>
    %61 = arith.subf %60, %59 : vector<2x8x4xf32>
    %62 = tpu.concatenate %61, %58 in 2 : vector<2x8x4xf32>, vector<2x8x4xf32> -> vector<2x8x8xf32>
    %63 = arith.mulf %57, %19 : vector<2x8x8xf32>
    %64 = arith.mulf %62, %23 : vector<2x8x8xf32>
    %65 = arith.addf %63, %64 : vector<2x8x8xf32>
    %66 = vector.extract_strided_slice %45 {offsets = [0, 0], sizes = [16, 8], strides = [1, 1]} : vector<16x32xf32> to vector<16x8xf32>
    %67 = vector.shape_cast %66 : vector<16x8xf32> to vector<2x8x8xf32>
    %68 = arith.truncf %55 : vector<2x8x8xf32> to vector<2x8x8xbf16>
    %69 = arith.truncf %65 : vector<2x8x8xf32> to vector<2x8x8xbf16>
    "tpu.trace_start"() <{level = 10 : i32, message = "bqd,bkd->bqk"}> : () -> ()
    %cst_21 = arith.constant dense<0.000000e+00> : vector<2x8x8xf32>
    %70 = tpu.matmul %68, %69, %cst_21 {dimension_numbers = #tpu.dot_dimension_numbers<[2], [2], [1], [1], [0, 0, 0, 1, 1, 1], [0], [0]>} : vector<2x8x8xbf16>, vector<2x8x8xbf16>, vector<2x8x8xf32> -> vector<2x8x8xf32>
    "tpu.trace_stop"() : () -> ()
    %cst_22 = arith.constant 0.353553385 : f32
    %71 = vector.broadcast %cst_22 : f32 to vector<2x8x8xf32>
    %72 = arith.mulf %70, %71 : vector<2x8x8xf32>
    %73 = arith.addf %72, %15 : vector<2x8x8xf32>
    %cst_23 = arith.constant dense<0xFF800000> : vector<2x8xf32>
    %74 = vector.multi_reduction <maximumf>, %73, %cst_23 [2] : vector<2x8x8xf32> to vector<2x8xf32>
    %75 = vector.shape_cast %74 : vector<2x8xf32> to vector<2x8x1xf32>
    %76 = vector.broadcast %75 : vector<2x8x1xf32> to vector<2x8x8xf32>
    %77 = arith.subf %73, %76 : vector<2x8x8xf32>
    %78 = math.exp %77 : vector<2x8x8xf32>
    %cst_24 = arith.constant dense<0.000000e+00> : vector<2x8xf32>
    %79 = vector.multi_reduction <add>, %78, %cst_24 [2] : vector<2x8x8xf32> to vector<2x8xf32>
    %80 = vector.shape_cast %79 : vector<2x8xf32> to vector<2x8x1xf32>
    %81 = tpu.reciprocal %80 {approx = true} : vector<2x8x1xf32> -> vector<2x8x1xf32>
    %82 = vector.broadcast %81 : vector<2x8x1xf32> to vector<2x8x8xf32>
    %83 = arith.mulf %78, %82 : vector<2x8x8xf32>
    %84 = arith.truncf %83 : vector<2x8x8xf32> to vector<2x8x8xbf16>
    %85 = arith.truncf %67 : vector<2x8x8xf32> to vector<2x8x8xbf16>
    "tpu.trace_start"() <{level = 10 : i32, message = "bqk,bkd->bqd"}> : () -> ()
    %cst_25 = arith.constant dense<0.000000e+00> : vector<2x8x8xf32>
    %86 = tpu.matmul %84, %85, %cst_25 {dimension_numbers = #tpu.dot_dimension_numbers<[2], [1], [1], [2], [0, 0, 0, 1, 1, 2], [0], [0]>} : vector<2x8x8xbf16>, vector<2x8x8xbf16>, vector<2x8x8xf32> -> vector<2x8x8xf32>
    "tpu.trace_stop"() : () -> ()
    %87 = vector.extract_strided_slice %43 {offsets = [0, 8], sizes = [16, 8], strides = [1, 1]} : vector<16x32xf32> to vector<16x8xf32>
    %88 = vector.shape_cast %87 : vector<16x8xf32> to vector<2x8x8xf32>
    %89 = vector.extract_strided_slice %88 {offsets = [0, 0, 0], sizes = [2, 8, 4], strides = [1, 1, 1]} : vector<2x8x8xf32> to vector<2x8x4xf32>
    %90 = vector.extract_strided_slice %88 {offsets = [0, 0, 4], sizes = [2, 8, 4], strides = [1, 1, 1]} : vector<2x8x8xf32> to vector<2x8x4xf32>
    %cst_26 = arith.constant 0.000000e+00 : f32
    %91 = vector.broadcast %cst_26 : f32 to vector<2x8x4xf32>
    %92 = arith.subf %91, %90 : vector<2x8x4xf32>
    %93 = tpu.concatenate %92, %89 in 2 : vector<2x8x4xf32>, vector<2x8x4xf32> -> vector<2x8x8xf32>
    %94 = arith.mulf %88, %19 : vector<2x8x8xf32>
    %95 = arith.mulf %93, %23 : vector<2x8x8xf32>
    %96 = arith.addf %94, %95 : vector<2x8x8xf32>
    %97 = vector.extract_strided_slice %44 {offsets = [0, 8], sizes = [16, 8], strides = [1, 1]} : vector<16x32xf32> to vector<16x8xf32>
    %98 = vector.shape_cast %97 : vector<16x8xf32> to vector<2x8x8xf32>
    %99 = vector.extract_strided_slice %98 {offsets = [0, 0, 0], sizes = [2, 8, 4], strides = [1, 1, 1]} : vector<2x8x8xf32> to vector<2x8x4xf32>
    %100 = vector.extract_strided_slice %98 {offsets = [0, 0, 4], sizes = [2, 8, 4], strides = [1, 1, 1]} : vector<2x8x8xf32> to vector<2x8x4xf32>
    %cst_27 = arith.constant 0.000000e+00 : f32
    %101 = vector.broadcast %cst_27 : f32 to vector<2x8x4xf32>
    %102 = arith.subf %101, %100 : vector<2x8x4xf32>
    %103 = tpu.concatenate %102, %99 in 2 : vector<2x8x4xf32>, vector<2x8x4xf32> -> vector<2x8x8xf32>
    %104 = arith.mulf %98, %19 : vector<2x8x8xf32>
    %105 = arith.mulf %103, %23 : vector<2x8x8xf32>
    %106 = arith.addf %104, %105 : vector<2x8x8xf32>
    %107 = vector.extract_strided_slice %45 {offsets = [0, 8], sizes = [16, 8], strides = [1, 1]} : vector<16x32xf32> to vector<16x8xf32>
    %108 = vector.shape_cast %107 : vector<16x8xf32> to vector<2x8x8xf32>
    %109 = arith.truncf %96 : vector<2x8x8xf32> to vector<2x8x8xbf16>
    %110 = arith.truncf %106 : vector<2x8x8xf32> to vector<2x8x8xbf16>
    "tpu.trace_start"() <{level = 10 : i32, message = "bqd,bkd->bqk"}> : () -> ()
    %cst_28 = arith.constant dense<0.000000e+00> : vector<2x8x8xf32>
    %111 = tpu.matmul %109, %110, %cst_28 {dimension_numbers = #tpu.dot_dimension_numbers<[2], [2], [1], [1], [0, 0, 0, 1, 1, 1], [0], [0]>} : vector<2x8x8xbf16>, vector<2x8x8xbf16>, vector<2x8x8xf32> -> vector<2x8x8xf32>
    "tpu.trace_stop"() : () -> ()
    %cst_29 = arith.constant 0.353553385 : f32
    %112 = vector.broadcast %cst_29 : f32 to vector<2x8x8xf32>
    %113 = arith.mulf %111, %112 : vector<2x8x8xf32>
    %114 = arith.addf %113, %15 : vector<2x8x8xf32>
    %cst_30 = arith.constant dense<0xFF800000> : vector<2x8xf32>
    %115 = vector.multi_reduction <maximumf>, %114, %cst_30 [2] : vector<2x8x8xf32> to vector<2x8xf32>
    %116 = vector.shape_cast %115 : vector<2x8xf32> to vector<2x8x1xf32>
    %117 = vector.broadcast %116 : vector<2x8x1xf32> to vector<2x8x8xf32>
    %118 = arith.subf %114, %117 : vector<2x8x8xf32>
    %119 = math.exp %118 : vector<2x8x8xf32>
    %cst_31 = arith.constant dense<0.000000e+00> : vector<2x8xf32>
    %120 = vector.multi_reduction <add>, %119, %cst_31 [2] : vector<2x8x8xf32> to vector<2x8xf32>
    %121 = vector.shape_cast %120 : vector<2x8xf32> to vector<2x8x1xf32>
    %122 = tpu.reciprocal %121 {approx = true} : vector<2x8x1xf32> -> vector<2x8x1xf32>
    %123 = vector.broadcast %122 : vector<2x8x1xf32> to vector<2x8x8xf32>
    %124 = arith.mulf %119, %123 : vector<2x8x8xf32>
    %125 = arith.truncf %124 : vector<2x8x8xf32> to vector<2x8x8xbf16>
    %126 = arith.truncf %108 : vector<2x8x8xf32> to vector<2x8x8xbf16>
    "tpu.trace_start"() <{level = 10 : i32, message = "bqk,bkd->bqd"}> : () -> ()
    %cst_32 = arith.constant dense<0.000000e+00> : vector<2x8x8xf32>
    %127 = tpu.matmul %125, %126, %cst_32 {dimension_numbers = #tpu.dot_dimension_numbers<[2], [1], [1], [2], [0, 0, 0, 1, 1, 2], [0], [0]>} : vector<2x8x8xbf16>, vector<2x8x8xbf16>, vector<2x8x8xf32> -> vector<2x8x8xf32>
    "tpu.trace_stop"() : () -> ()
    %128 = vector.extract_strided_slice %43 {offsets = [0, 16], sizes = [16, 8], strides = [1, 1]} : vector<16x32xf32> to vector<16x8xf32>
    %129 = vector.shape_cast %128 : vector<16x8xf32> to vector<2x8x8xf32>
    %130 = vector.extract_strided_slice %129 {offsets = [0, 0, 0], sizes = [2, 8, 4], strides = [1, 1, 1]} : vector<2x8x8xf32> to vector<2x8x4xf32>
    %131 = vector.extract_strided_slice %129 {offsets = [0, 0, 4], sizes = [2, 8, 4], strides = [1, 1, 1]} : vector<2x8x8xf32> to vector<2x8x4xf32>
    %cst_33 = arith.constant 0.000000e+00 : f32
    %132 = vector.broadcast %cst_33 : f32 to vector<2x8x4xf32>
    %133 = arith.subf %132, %131 : vector<2x8x4xf32>
    %134 = tpu.concatenate %133, %130 in 2 : vector<2x8x4xf32>, vector<2x8x4xf32> -> vector<2x8x8xf32>
    %135 = arith.mulf %129, %19 : vector<2x8x8xf32>
    %136 = arith.mulf %134, %23 : vector<2x8x8xf32>
    %137 = arith.addf %135, %136 : vector<2x8x8xf32>
    %138 = vector.extract_strided_slice %44 {offsets = [0, 16], sizes = [16, 8], strides = [1, 1]} : vector<16x32xf32> to vector<16x8xf32>
    %139 = vector.shape_cast %138 : vector<16x8xf32> to vector<2x8x8xf32>
    %140 = vector.extract_strided_slice %139 {offsets = [0, 0, 0], sizes = [2, 8, 4], strides = [1, 1, 1]} : vector<2x8x8xf32> to vector<2x8x4xf32>
    %141 = vector.extract_strided_slice %139 {offsets = [0, 0, 4], sizes = [2, 8, 4], strides = [1, 1, 1]} : vector<2x8x8xf32> to vector<2x8x4xf32>
    %cst_34 = arith.constant 0.000000e+00 : f32
    %142 = vector.broadcast %cst_34 : f32 to vector<2x8x4xf32>
    %143 = arith.subf %142, %141 : vector<2x8x4xf32>
    %144 = tpu.concatenate %143, %140 in 2 : vector<2x8x4xf32>, vector<2x8x4xf32> -> vector<2x8x8xf32>
    %145 = arith.mulf %139, %19 : vector<2x8x8xf32>
    %146 = arith.mulf %144, %23 : vector<2x8x8xf32>
    %147 = arith.addf %145, %146 : vector<2x8x8xf32>
    %148 = vector.extract_strided_slice %45 {offsets = [0, 16], sizes = [16, 8], strides = [1, 1]} : vector<16x32xf32> to vector<16x8xf32>
    %149 = vector.shape_cast %148 : vector<16x8xf32> to vector<2x8x8xf32>
    %150 = arith.truncf %137 : vector<2x8x8xf32> to vector<2x8x8xbf16>
    %151 = arith.truncf %147 : vector<2x8x8xf32> to vector<2x8x8xbf16>
    "tpu.trace_start"() <{level = 10 : i32, message = "bqd,bkd->bqk"}> : () -> ()
    %cst_35 = arith.constant dense<0.000000e+00> : vector<2x8x8xf32>
    %152 = tpu.matmul %150, %151, %cst_35 {dimension_numbers = #tpu.dot_dimension_numbers<[2], [2], [1], [1], [0, 0, 0, 1, 1, 1], [0], [0]>} : vector<2x8x8xbf16>, vector<2x8x8xbf16>, vector<2x8x8xf32> -> vector<2x8x8xf32>
    "tpu.trace_stop"() : () -> ()
    %cst_36 = arith.constant 0.353553385 : f32
    %153 = vector.broadcast %cst_36 : f32 to vector<2x8x8xf32>
    %154 = arith.mulf %152, %153 : vector<2x8x8xf32>
    %155 = arith.addf %154, %15 : vector<2x8x8xf32>
    %cst_37 = arith.constant dense<0xFF800000> : vector<2x8xf32>
    %156 = vector.multi_reduction <maximumf>, %155, %cst_37 [2] : vector<2x8x8xf32> to vector<2x8xf32>
    %157 = vector.shape_cast %156 : vector<2x8xf32> to vector<2x8x1xf32>
    %158 = vector.broadcast %157 : vector<2x8x1xf32> to vector<2x8x8xf32>
    %159 = arith.subf %155, %158 : vector<2x8x8xf32>
    %160 = math.exp %159 : vector<2x8x8xf32>
    %cst_38 = arith.constant dense<0.000000e+00> : vector<2x8xf32>
    %161 = vector.multi_reduction <add>, %160, %cst_38 [2] : vector<2x8x8xf32> to vector<2x8xf32>
    %162 = vector.shape_cast %161 : vector<2x8xf32> to vector<2x8x1xf32>
    %163 = tpu.reciprocal %162 {approx = true} : vector<2x8x1xf32> -> vector<2x8x1xf32>
    %164 = vector.broadcast %163 : vector<2x8x1xf32> to vector<2x8x8xf32>
    %165 = arith.mulf %160, %164 : vector<2x8x8xf32>
    %166 = arith.truncf %165 : vector<2x8x8xf32> to vector<2x8x8xbf16>
    %167 = arith.truncf %149 : vector<2x8x8xf32> to vector<2x8x8xbf16>
    "tpu.trace_start"() <{level = 10 : i32, message = "bqk,bkd->bqd"}> : () -> ()
    %cst_39 = arith.constant dense<0.000000e+00> : vector<2x8x8xf32>
    %168 = tpu.matmul %166, %167, %cst_39 {dimension_numbers = #tpu.dot_dimension_numbers<[2], [1], [1], [2], [0, 0, 0, 1, 1, 2], [0], [0]>} : vector<2x8x8xbf16>, vector<2x8x8xbf16>, vector<2x8x8xf32> -> vector<2x8x8xf32>
    "tpu.trace_stop"() : () -> ()
    %169 = vector.extract_strided_slice %43 {offsets = [0, 24], sizes = [16, 8], strides = [1, 1]} : vector<16x32xf32> to vector<16x8xf32>
    %170 = vector.shape_cast %169 : vector<16x8xf32> to vector<2x8x8xf32>
    %171 = vector.extract_strided_slice %170 {offsets = [0, 0, 0], sizes = [2, 8, 4], strides = [1, 1, 1]} : vector<2x8x8xf32> to vector<2x8x4xf32>
    %172 = vector.extract_strided_slice %170 {offsets = [0, 0, 4], sizes = [2, 8, 4], strides = [1, 1, 1]} : vector<2x8x8xf32> to vector<2x8x4xf32>
    %cst_40 = arith.constant 0.000000e+00 : f32
    %173 = vector.broadcast %cst_40 : f32 to vector<2x8x4xf32>
    %174 = arith.subf %173, %172 : vector<2x8x4xf32>
    %175 = tpu.concatenate %174, %171 in 2 : vector<2x8x4xf32>, vector<2x8x4xf32> -> vector<2x8x8xf32>
    %176 = arith.mulf %170, %19 : vector<2x8x8xf32>
    %177 = arith.mulf %175, %23 : vector<2x8x8xf32>
    %178 = arith.addf %176, %177 : vector<2x8x8xf32>
    %179 = vector.extract_strided_slice %44 {offsets = [0, 24], sizes = [16, 8], strides = [1, 1]} : vector<16x32xf32> to vector<16x8xf32>
    %180 = vector.shape_cast %179 : vector<16x8xf32> to vector<2x8x8xf32>
    %181 = vector.extract_strided_slice %180 {offsets = [0, 0, 0], sizes = [2, 8, 4], strides = [1, 1, 1]} : vector<2x8x8xf32> to vector<2x8x4xf32>
    %182 = vector.extract_strided_slice %180 {offsets = [0, 0, 4], sizes = [2, 8, 4], strides = [1, 1, 1]} : vector<2x8x8xf32> to vector<2x8x4xf32>
    %cst_41 = arith.constant 0.000000e+00 : f32
    %183 = vector.broadcast %cst_41 : f32 to vector<2x8x4xf32>
    %184 = arith.subf %183, %182 : vector<2x8x4xf32>
    %185 = tpu.concatenate %184, %181 in 2 : vector<2x8x4xf32>, vector<2x8x4xf32> -> vector<2x8x8xf32>
    %186 = arith.mulf %180, %19 : vector<2x8x8xf32>
    %187 = arith.mulf %185, %23 : vector<2x8x8xf32>
    %188 = arith.addf %186, %187 : vector<2x8x8xf32>
    %189 = vector.extract_strided_slice %45 {offsets = [0, 24], sizes = [16, 8], strides = [1, 1]} : vector<16x32xf32> to vector<16x8xf32>
    %190 = vector.shape_cast %189 : vector<16x8xf32> to vector<2x8x8xf32>
    %191 = arith.truncf %178 : vector<2x8x8xf32> to vector<2x8x8xbf16>
    %192 = arith.truncf %188 : vector<2x8x8xf32> to vector<2x8x8xbf16>
    "tpu.trace_start"() <{level = 10 : i32, message = "bqd,bkd->bqk"}> : () -> ()
    %cst_42 = arith.constant dense<0.000000e+00> : vector<2x8x8xf32>
    %193 = tpu.matmul %191, %192, %cst_42 {dimension_numbers = #tpu.dot_dimension_numbers<[2], [2], [1], [1], [0, 0, 0, 1, 1, 1], [0], [0]>} : vector<2x8x8xbf16>, vector<2x8x8xbf16>, vector<2x8x8xf32> -> vector<2x8x8xf32>
    "tpu.trace_stop"() : () -> ()
    %cst_43 = arith.constant 0.353553385 : f32
    %194 = vector.broadcast %cst_43 : f32 to vector<2x8x8xf32>
    %195 = arith.mulf %193, %194 : vector<2x8x8xf32>
    %196 = arith.addf %195, %15 : vector<2x8x8xf32>
    %cst_44 = arith.constant dense<0xFF800000> : vector<2x8xf32>
    %197 = vector.multi_reduction <maximumf>, %196, %cst_44 [2] : vector<2x8x8xf32> to vector<2x8xf32>
    %198 = vector.shape_cast %197 : vector<2x8xf32> to vector<2x8x1xf32>
    %199 = vector.broadcast %198 : vector<2x8x1xf32> to vector<2x8x8xf32>
    %200 = arith.subf %196, %199 : vector<2x8x8xf32>
    %201 = math.exp %200 : vector<2x8x8xf32>
    %cst_45 = arith.constant dense<0.000000e+00> : vector<2x8xf32>
    %202 = vector.multi_reduction <add>, %201, %cst_45 [2] : vector<2x8x8xf32> to vector<2x8xf32>
    %203 = vector.shape_cast %202 : vector<2x8xf32> to vector<2x8x1xf32>
    %204 = tpu.reciprocal %203 {approx = true} : vector<2x8x1xf32> -> vector<2x8x1xf32>
    %205 = vector.broadcast %204 : vector<2x8x1xf32> to vector<2x8x8xf32>
    %206 = arith.mulf %201, %205 : vector<2x8x8xf32>
    %207 = arith.truncf %206 : vector<2x8x8xf32> to vector<2x8x8xbf16>
    %208 = arith.truncf %190 : vector<2x8x8xf32> to vector<2x8x8xbf16>
    "tpu.trace_start"() <{level = 10 : i32, message = "bqk,bkd->bqd"}> : () -> ()
    %cst_46 = arith.constant dense<0.000000e+00> : vector<2x8x8xf32>
    %209 = tpu.matmul %207, %208, %cst_46 {dimension_numbers = #tpu.dot_dimension_numbers<[2], [1], [1], [2], [0, 0, 0, 1, 1, 2], [0], [0]>} : vector<2x8x8xbf16>, vector<2x8x8xbf16>, vector<2x8x8xf32> -> vector<2x8x8xf32>
    "tpu.trace_stop"() : () -> ()
    %210 = tpu.concatenate %86, %127, %168, %209 in 2 : vector<2x8x8xf32>, vector<2x8x8xf32>, vector<2x8x8xf32>, vector<2x8x8xf32> -> vector<2x8x32xf32>
    %211 = vector.shape_cast %210 : vector<2x8x32xf32> to vector<16x32xf32>
    %212 = arith.truncf %211 : vector<16x32xf32> to vector<16x32xbf16>
    %c0_47 = arith.constant 0 : index
    %c0_48 = arith.constant 0 : index
    %c0_49 = arith.constant 0 : index
    %213 = vector.load %arg5[%c0_47, %c0_48, %c0_49] : memref<2x32x32xbf16, #tpu.memory_space<vmem>>, vector<1x32x32xbf16>
    %214 = vector.shape_cast %213 : vector<1x32x32xbf16> to vector<32x32xbf16>
    %cst_50 = arith.constant dense<0.000000e+00> : vector<16x32xf32>
    %215 = tpu.matmul %212, %214, %cst_50 {dimension_numbers = #tpu.dot_dimension_numbers<[1], [0], [0], [1], [0, 0, 1, 1], [], []>} : vector<16x32xbf16>, vector<32x32xbf16>, vector<16x32xf32> -> vector<16x32xf32>
    %216 = arith.addf %1, %215 : vector<16x32xf32>
    %c0_51 = arith.constant 0 : index
    %c0_52 = arith.constant 0 : index
    %c0_53 = arith.constant 0 : index
    %217 = vector.load %arg9[%c0_51, %c0_52, %c0_53] : memref<2x1x32xbf16, #tpu.memory_space<vmem>>, vector<1x1x32xbf16>
    %218 = vector.shape_cast %217 : vector<1x1x32xbf16> to vector<1x32xbf16>
    %219 = arith.mulf %216, %216 : vector<16x32xf32>
    %cst_54 = arith.constant dense<0.000000e+00> : vector<16xf32>
    %220 = vector.multi_reduction <add>, %219, %cst_54 [1] : vector<16x32xf32> to vector<16xf32>
    %221 = vector.shape_cast %220 : vector<16xf32> to vector<16x1xf32>
    %cst_55 = arith.constant 3.200000e+01 : f32
    %222 = vector.broadcast %cst_55 : f32 to vector<16x1xf32>
    %223 = arith.divf %221, %222 : vector<16x1xf32>
    %cst_56 = arith.constant 9.99999974E-6 : f32
    %224 = vector.broadcast %cst_56 : f32 to vector<16x1xf32>
    %225 = arith.addf %223, %224 : vector<16x1xf32>
    %226 = math.rsqrt %225 : vector<16x1xf32>
    %227 = vector.broadcast %226 : vector<16x1xf32> to vector<16x32xf32>
    %228 = arith.mulf %216, %227 : vector<16x32xf32>
    %229 = arith.extf %218 : vector<1x32xbf16> to vector<1x32xf32>
    %230 = vector.broadcast %229 : vector<1x32xf32> to vector<16x32xf32>
    %231 = arith.mulf %228, %230 : vector<16x32xf32>
    %232 = arith.truncf %231 : vector<16x32xf32> to vector<16x32xbf16>
    %c0_57 = arith.constant 0 : index
    %c0_58 = arith.constant 0 : index
    %c0_59 = arith.constant 0 : index
    %233 = vector.load %arg6[%c0_57, %c0_58, %c0_59] : memref<2x32x128xbf16, #tpu.memory_space<vmem>>, vector<1x32x128xbf16>
    %234 = vector.shape_cast %233 : vector<1x32x128xbf16> to vector<32x128xbf16>
    %cst_60 = arith.constant dense<0.000000e+00> : vector<16x128xf32>
    %235 = tpu.matmul %232, %234, %cst_60 {dimension_numbers = #tpu.dot_dimension_numbers<[1], [0], [0], [1], [0, 0, 1, 1], [], []>} : vector<16x32xbf16>, vector<32x128xbf16>, vector<16x128xf32> -> vector<16x128xf32>
    %236 = vector.extract_strided_slice %235 {offsets = [0, 0], sizes = [16, 64], strides = [1, 1]} : vector<16x128xf32> to vector<16x64xf32>
    %237 = vector.extract_strided_slice %235 {offsets = [0, 64], sizes = [16, 64], strides = [1, 1]} : vector<16x128xf32> to vector<16x64xf32>
    %238 = arith.negf %236 : vector<16x64xf32>
    %239 = math.exp %238 : vector<16x64xf32>
    %cst_61 = arith.constant 1.000000e+00 : f32
    %240 = vector.broadcast %cst_61 : f32 to vector<16x64xf32>
    %241 = arith.addf %240, %239 : vector<16x64xf32>
    %242 = arith.divf %240, %241 : vector<16x64xf32>
    %243 = arith.mulf %236, %242 : vector<16x64xf32>
    %244 = arith.mulf %243, %237 : vector<16x64xf32>
    %245 = arith.truncf %244 : vector<16x64xf32> to vector<16x64xbf16>
    %c0_62 = arith.constant 0 : index
    %c0_63 = arith.constant 0 : index
    %c0_64 = arith.constant 0 : index
    %246 = vector.load %arg7[%c0_62, %c0_63, %c0_64] : memref<2x64x32xbf16, #tpu.memory_space<vmem>>, vector<1x64x32xbf16>
    %247 = vector.shape_cast %246 : vector<1x64x32xbf16> to vector<64x32xbf16>
    %cst_65 = arith.constant dense<0.000000e+00> : vector<16x32xf32>
    %248 = tpu.matmul %245, %247, %cst_65 {dimension_numbers = #tpu.dot_dimension_numbers<[1], [0], [0], [1], [0, 0, 1, 1], [], []>} : vector<16x64xbf16>, vector<64x32xbf16>, vector<16x32xf32> -> vector<16x32xf32>
    %249 = arith.addf %216, %248 : vector<16x32xf32>
    %250 = arith.truncf %249 : vector<16x32xf32> to vector<16x32xbf16>
    %251 = arith.extf %250 : vector<16x32xbf16> to vector<16x32xf32>
    %c1 = arith.constant 1 : index
    %c0_66 = arith.constant 0 : index
    %c0_67 = arith.constant 0 : index
    %252 = vector.load %arg8[%c1, %c0_66, %c0_67] : memref<2x1x32xbf16, #tpu.memory_space<vmem>>, vector<1x1x32xbf16>
    %253 = vector.shape_cast %252 : vector<1x1x32xbf16> to vector<1x32xbf16>
    %254 = arith.mulf %251, %251 : vector<16x32xf32>
    %cst_68 = arith.constant dense<0.000000e+00> : vector<16xf32>
    %255 = vector.multi_reduction <add>, %254, %cst_68 [1] : vector<16x32xf32> to vector<16xf32>
    %256 = vector.shape_cast %255 : vector<16xf32> to vector<16x1xf32>
    %cst_69 = arith.constant 3.200000e+01 : f32
    %257 = vector.broadcast %cst_69 : f32 to vector<16x1xf32>
    %258 = arith.divf %256, %257 : vector<16x1xf32>
    %cst_70 = arith.constant 9.99999974E-6 : f32
    %259 = vector.broadcast %cst_70 : f32 to vector<16x1xf32>
    %260 = arith.addf %258, %259 : vector<16x1xf32>
    %261 = math.rsqrt %260 : vector<16x1xf32>
    %262 = vector.broadcast %261 : vector<16x1xf32> to vector<16x32xf32>
    %263 = arith.mulf %251, %262 : vector<16x32xf32>
    %264 = arith.extf %253 : vector<1x32xbf16> to vector<1x32xf32>
    %265 = vector.broadcast %264 : vector<1x32xf32> to vector<16x32xf32>
    %266 = arith.mulf %263, %265 : vector<16x32xf32>
    %267 = arith.truncf %266 : vector<16x32xf32> to vector<16x32xbf16>
    %c1_71 = arith.constant 1 : index
    %c0_72 = arith.constant 0 : index
    %c0_73 = arith.constant 0 : index
    %268 = vector.load %arg4[%c1_71, %c0_72, %c0_73] : memref<2x32x96xbf16, #tpu.memory_space<vmem>>, vector<1x32x96xbf16>
    %269 = vector.shape_cast %268 : vector<1x32x96xbf16> to vector<32x96xbf16>
    %cst_74 = arith.constant dense<0.000000e+00> : vector<16x96xf32>
    %270 = tpu.matmul %267, %269, %cst_74 {dimension_numbers = #tpu.dot_dimension_numbers<[1], [0], [0], [1], [0, 0, 1, 1], [], []>} : vector<16x32xbf16>, vector<32x96xbf16>, vector<16x96xf32> -> vector<16x96xf32>
    %271 = vector.extract_strided_slice %270 {offsets = [0, 0], sizes = [16, 32], strides = [1, 1]} : vector<16x96xf32> to vector<16x32xf32>
    %272 = vector.extract_strided_slice %270 {offsets = [0, 32], sizes = [16, 32], strides = [1, 1]} : vector<16x96xf32> to vector<16x32xf32>
    %273 = vector.extract_strided_slice %270 {offsets = [0, 64], sizes = [16, 32], strides = [1, 1]} : vector<16x96xf32> to vector<16x32xf32>
    %274 = vector.extract_strided_slice %271 {offsets = [0, 0], sizes = [16, 8], strides = [1, 1]} : vector<16x32xf32> to vector<16x8xf32>
    %275 = vector.shape_cast %274 : vector<16x8xf32> to vector<2x8x8xf32>
    %276 = vector.extract_strided_slice %275 {offsets = [0, 0, 0], sizes = [2, 8, 4], strides = [1, 1, 1]} : vector<2x8x8xf32> to vector<2x8x4xf32>
    %277 = vector.extract_strided_slice %275 {offsets = [0, 0, 4], sizes = [2, 8, 4], strides = [1, 1, 1]} : vector<2x8x8xf32> to vector<2x8x4xf32>
    %cst_75 = arith.constant 0.000000e+00 : f32
    %278 = vector.broadcast %cst_75 : f32 to vector<2x8x4xf32>
    %279 = arith.subf %278, %277 : vector<2x8x4xf32>
    %280 = tpu.concatenate %279, %276 in 2 : vector<2x8x4xf32>, vector<2x8x4xf32> -> vector<2x8x8xf32>
    %281 = arith.mulf %275, %19 : vector<2x8x8xf32>
    %282 = arith.mulf %280, %23 : vector<2x8x8xf32>
    %283 = arith.addf %281, %282 : vector<2x8x8xf32>
    %284 = vector.extract_strided_slice %272 {offsets = [0, 0], sizes = [16, 8], strides = [1, 1]} : vector<16x32xf32> to vector<16x8xf32>
    %285 = vector.shape_cast %284 : vector<16x8xf32> to vector<2x8x8xf32>
    %286 = vector.extract_strided_slice %285 {offsets = [0, 0, 0], sizes = [2, 8, 4], strides = [1, 1, 1]} : vector<2x8x8xf32> to vector<2x8x4xf32>
    %287 = vector.extract_strided_slice %285 {offsets = [0, 0, 4], sizes = [2, 8, 4], strides = [1, 1, 1]} : vector<2x8x8xf32> to vector<2x8x4xf32>
    %cst_76 = arith.constant 0.000000e+00 : f32
    %288 = vector.broadcast %cst_76 : f32 to vector<2x8x4xf32>
    %289 = arith.subf %288, %287 : vector<2x8x4xf32>
    %290 = tpu.concatenate %289, %286 in 2 : vector<2x8x4xf32>, vector<2x8x4xf32> -> vector<2x8x8xf32>
    %291 = arith.mulf %285, %19 : vector<2x8x8xf32>
    %292 = arith.mulf %290, %23 : vector<2x8x8xf32>
    %293 = arith.addf %291, %292 : vector<2x8x8xf32>
    %294 = vector.extract_strided_slice %273 {offsets = [0, 0], sizes = [16, 8], strides = [1, 1]} : vector<16x32xf32> to vector<16x8xf32>
    %295 = vector.shape_cast %294 : vector<16x8xf32> to vector<2x8x8xf32>
    %296 = arith.truncf %283 : vector<2x8x8xf32> to vector<2x8x8xbf16>
    %297 = arith.truncf %293 : vector<2x8x8xf32> to vector<2x8x8xbf16>
    "tpu.trace_start"() <{level = 10 : i32, message = "bqd,bkd->bqk"}> : () -> ()
    %cst_77 = arith.constant dense<0.000000e+00> : vector<2x8x8xf32>
    %298 = tpu.matmul %296, %297, %cst_77 {dimension_numbers = #tpu.dot_dimension_numbers<[2], [2], [1], [1], [0, 0, 0, 1, 1, 1], [0], [0]>} : vector<2x8x8xbf16>, vector<2x8x8xbf16>, vector<2x8x8xf32> -> vector<2x8x8xf32>
    "tpu.trace_stop"() : () -> ()
    %cst_78 = arith.constant 0.353553385 : f32
    %299 = vector.broadcast %cst_78 : f32 to vector<2x8x8xf32>
    %300 = arith.mulf %298, %299 : vector<2x8x8xf32>
    %301 = arith.addf %300, %15 : vector<2x8x8xf32>
    %cst_79 = arith.constant dense<0xFF800000> : vector<2x8xf32>
    %302 = vector.multi_reduction <maximumf>, %301, %cst_79 [2] : vector<2x8x8xf32> to vector<2x8xf32>
    %303 = vector.shape_cast %302 : vector<2x8xf32> to vector<2x8x1xf32>
    %304 = vector.broadcast %303 : vector<2x8x1xf32> to vector<2x8x8xf32>
    %305 = arith.subf %301, %304 : vector<2x8x8xf32>
    %306 = math.exp %305 : vector<2x8x8xf32>
    %cst_80 = arith.constant dense<0.000000e+00> : vector<2x8xf32>
    %307 = vector.multi_reduction <add>, %306, %cst_80 [2] : vector<2x8x8xf32> to vector<2x8xf32>
    %308 = vector.shape_cast %307 : vector<2x8xf32> to vector<2x8x1xf32>
    %309 = tpu.reciprocal %308 {approx = true} : vector<2x8x1xf32> -> vector<2x8x1xf32>
    %310 = vector.broadcast %309 : vector<2x8x1xf32> to vector<2x8x8xf32>
    %311 = arith.mulf %306, %310 : vector<2x8x8xf32>
    %312 = arith.truncf %311 : vector<2x8x8xf32> to vector<2x8x8xbf16>
    %313 = arith.truncf %295 : vector<2x8x8xf32> to vector<2x8x8xbf16>
    "tpu.trace_start"() <{level = 10 : i32, message = "bqk,bkd->bqd"}> : () -> ()
    %cst_81 = arith.constant dense<0.000000e+00> : vector<2x8x8xf32>
    %314 = tpu.matmul %312, %313, %cst_81 {dimension_numbers = #tpu.dot_dimension_numbers<[2], [1], [1], [2], [0, 0, 0, 1, 1, 2], [0], [0]>} : vector<2x8x8xbf16>, vector<2x8x8xbf16>, vector<2x8x8xf32> -> vector<2x8x8xf32>
    "tpu.trace_stop"() : () -> ()
    %315 = vector.extract_strided_slice %271 {offsets = [0, 8], sizes = [16, 8], strides = [1, 1]} : vector<16x32xf32> to vector<16x8xf32>
    %316 = vector.shape_cast %315 : vector<16x8xf32> to vector<2x8x8xf32>
    %317 = vector.extract_strided_slice %316 {offsets = [0, 0, 0], sizes = [2, 8, 4], strides = [1, 1, 1]} : vector<2x8x8xf32> to vector<2x8x4xf32>
    %318 = vector.extract_strided_slice %316 {offsets = [0, 0, 4], sizes = [2, 8, 4], strides = [1, 1, 1]} : vector<2x8x8xf32> to vector<2x8x4xf32>
    %cst_82 = arith.constant 0.000000e+00 : f32
    %319 = vector.broadcast %cst_82 : f32 to vector<2x8x4xf32>
    %320 = arith.subf %319, %318 : vector<2x8x4xf32>
    %321 = tpu.concatenate %320, %317 in 2 : vector<2x8x4xf32>, vector<2x8x4xf32> -> vector<2x8x8xf32>
    %322 = arith.mulf %316, %19 : vector<2x8x8xf32>
    %323 = arith.mulf %321, %23 : vector<2x8x8xf32>
    %324 = arith.addf %322, %323 : vector<2x8x8xf32>
    %325 = vector.extract_strided_slice %272 {offsets = [0, 8], sizes = [16, 8], strides = [1, 1]} : vector<16x32xf32> to vector<16x8xf32>
    %326 = vector.shape_cast %325 : vector<16x8xf32> to vector<2x8x8xf32>
    %327 = vector.extract_strided_slice %326 {offsets = [0, 0, 0], sizes = [2, 8, 4], strides = [1, 1, 1]} : vector<2x8x8xf32> to vector<2x8x4xf32>
    %328 = vector.extract_strided_slice %326 {offsets = [0, 0, 4], sizes = [2, 8, 4], strides = [1, 1, 1]} : vector<2x8x8xf32> to vector<2x8x4xf32>
    %cst_83 = arith.constant 0.000000e+00 : f32
    %329 = vector.broadcast %cst_83 : f32 to vector<2x8x4xf32>
    %330 = arith.subf %329, %328 : vector<2x8x4xf32>
    %331 = tpu.concatenate %330, %327 in 2 : vector<2x8x4xf32>, vector<2x8x4xf32> -> vector<2x8x8xf32>
    %332 = arith.mulf %326, %19 : vector<2x8x8xf32>
    %333 = arith.mulf %331, %23 : vector<2x8x8xf32>
    %334 = arith.addf %332, %333 : vector<2x8x8xf32>
    %335 = vector.extract_strided_slice %273 {offsets = [0, 8], sizes = [16, 8], strides = [1, 1]} : vector<16x32xf32> to vector<16x8xf32>
    %336 = vector.shape_cast %335 : vector<16x8xf32> to vector<2x8x8xf32>
    %337 = arith.truncf %324 : vector<2x8x8xf32> to vector<2x8x8xbf16>
    %338 = arith.truncf %334 : vector<2x8x8xf32> to vector<2x8x8xbf16>
    "tpu.trace_start"() <{level = 10 : i32, message = "bqd,bkd->bqk"}> : () -> ()
    %cst_84 = arith.constant dense<0.000000e+00> : vector<2x8x8xf32>
    %339 = tpu.matmul %337, %338, %cst_84 {dimension_numbers = #tpu.dot_dimension_numbers<[2], [2], [1], [1], [0, 0, 0, 1, 1, 1], [0], [0]>} : vector<2x8x8xbf16>, vector<2x8x8xbf16>, vector<2x8x8xf32> -> vector<2x8x8xf32>
    "tpu.trace_stop"() : () -> ()
    %cst_85 = arith.constant 0.353553385 : f32
    %340 = vector.broadcast %cst_85 : f32 to vector<2x8x8xf32>
    %341 = arith.mulf %339, %340 : vector<2x8x8xf32>
    %342 = arith.addf %341, %15 : vector<2x8x8xf32>
    %cst_86 = arith.constant dense<0xFF800000> : vector<2x8xf32>
    %343 = vector.multi_reduction <maximumf>, %342, %cst_86 [2] : vector<2x8x8xf32> to vector<2x8xf32>
    %344 = vector.shape_cast %343 : vector<2x8xf32> to vector<2x8x1xf32>
    %345 = vector.broadcast %344 : vector<2x8x1xf32> to vector<2x8x8xf32>
    %346 = arith.subf %342, %345 : vector<2x8x8xf32>
    %347 = math.exp %346 : vector<2x8x8xf32>
    %cst_87 = arith.constant dense<0.000000e+00> : vector<2x8xf32>
    %348 = vector.multi_reduction <add>, %347, %cst_87 [2] : vector<2x8x8xf32> to vector<2x8xf32>
    %349 = vector.shape_cast %348 : vector<2x8xf32> to vector<2x8x1xf32>
    %350 = tpu.reciprocal %349 {approx = true} : vector<2x8x1xf32> -> vector<2x8x1xf32>
    %351 = vector.broadcast %350 : vector<2x8x1xf32> to vector<2x8x8xf32>
    %352 = arith.mulf %347, %351 : vector<2x8x8xf32>
    %353 = arith.truncf %352 : vector<2x8x8xf32> to vector<2x8x8xbf16>
    %354 = arith.truncf %336 : vector<2x8x8xf32> to vector<2x8x8xbf16>
    "tpu.trace_start"() <{level = 10 : i32, message = "bqk,bkd->bqd"}> : () -> ()
    %cst_88 = arith.constant dense<0.000000e+00> : vector<2x8x8xf32>
    %355 = tpu.matmul %353, %354, %cst_88 {dimension_numbers = #tpu.dot_dimension_numbers<[2], [1], [1], [2], [0, 0, 0, 1, 1, 2], [0], [0]>} : vector<2x8x8xbf16>, vector<2x8x8xbf16>, vector<2x8x8xf32> -> vector<2x8x8xf32>
    "tpu.trace_stop"() : () -> ()
    %356 = vector.extract_strided_slice %271 {offsets = [0, 16], sizes = [16, 8], strides = [1, 1]} : vector<16x32xf32> to vector<16x8xf32>
    %357 = vector.shape_cast %356 : vector<16x8xf32> to vector<2x8x8xf32>
    %358 = vector.extract_strided_slice %357 {offsets = [0, 0, 0], sizes = [2, 8, 4], strides = [1, 1, 1]} : vector<2x8x8xf32> to vector<2x8x4xf32>
    %359 = vector.extract_strided_slice %357 {offsets = [0, 0, 4], sizes = [2, 8, 4], strides = [1, 1, 1]} : vector<2x8x8xf32> to vector<2x8x4xf32>
    %cst_89 = arith.constant 0.000000e+00 : f32
    %360 = vector.broadcast %cst_89 : f32 to vector<2x8x4xf32>
    %361 = arith.subf %360, %359 : vector<2x8x4xf32>
    %362 = tpu.concatenate %361, %358 in 2 : vector<2x8x4xf32>, vector<2x8x4xf32> -> vector<2x8x8xf32>
    %363 = arith.mulf %357, %19 : vector<2x8x8xf32>
    %364 = arith.mulf %362, %23 : vector<2x8x8xf32>
    %365 = arith.addf %363, %364 : vector<2x8x8xf32>
    %366 = vector.extract_strided_slice %272 {offsets = [0, 16], sizes = [16, 8], strides = [1, 1]} : vector<16x32xf32> to vector<16x8xf32>
    %367 = vector.shape_cast %366 : vector<16x8xf32> to vector<2x8x8xf32>
    %368 = vector.extract_strided_slice %367 {offsets = [0, 0, 0], sizes = [2, 8, 4], strides = [1, 1, 1]} : vector<2x8x8xf32> to vector<2x8x4xf32>
    %369 = vector.extract_strided_slice %367 {offsets = [0, 0, 4], sizes = [2, 8, 4], strides = [1, 1, 1]} : vector<2x8x8xf32> to vector<2x8x4xf32>
    %cst_90 = arith.constant 0.000000e+00 : f32
    %370 = vector.broadcast %cst_90 : f32 to vector<2x8x4xf32>
    %371 = arith.subf %370, %369 : vector<2x8x4xf32>
    %372 = tpu.concatenate %371, %368 in 2 : vector<2x8x4xf32>, vector<2x8x4xf32> -> vector<2x8x8xf32>
    %373 = arith.mulf %367, %19 : vector<2x8x8xf32>
    %374 = arith.mulf %372, %23 : vector<2x8x8xf32>
    %375 = arith.addf %373, %374 : vector<2x8x8xf32>
    %376 = vector.extract_strided_slice %273 {offsets = [0, 16], sizes = [16, 8], strides = [1, 1]} : vector<16x32xf32> to vector<16x8xf32>
    %377 = vector.shape_cast %376 : vector<16x8xf32> to vector<2x8x8xf32>
    %378 = arith.truncf %365 : vector<2x8x8xf32> to vector<2x8x8xbf16>
    %379 = arith.truncf %375 : vector<2x8x8xf32> to vector<2x8x8xbf16>
    "tpu.trace_start"() <{level = 10 : i32, message = "bqd,bkd->bqk"}> : () -> ()
    %cst_91 = arith.constant dense<0.000000e+00> : vector<2x8x8xf32>
    %380 = tpu.matmul %378, %379, %cst_91 {dimension_numbers = #tpu.dot_dimension_numbers<[2], [2], [1], [1], [0, 0, 0, 1, 1, 1], [0], [0]>} : vector<2x8x8xbf16>, vector<2x8x8xbf16>, vector<2x8x8xf32> -> vector<2x8x8xf32>
    "tpu.trace_stop"() : () -> ()
    %cst_92 = arith.constant 0.353553385 : f32
    %381 = vector.broadcast %cst_92 : f32 to vector<2x8x8xf32>
    %382 = arith.mulf %380, %381 : vector<2x8x8xf32>
    %383 = arith.addf %382, %15 : vector<2x8x8xf32>
    %cst_93 = arith.constant dense<0xFF800000> : vector<2x8xf32>
    %384 = vector.multi_reduction <maximumf>, %383, %cst_93 [2] : vector<2x8x8xf32> to vector<2x8xf32>
    %385 = vector.shape_cast %384 : vector<2x8xf32> to vector<2x8x1xf32>
    %386 = vector.broadcast %385 : vector<2x8x1xf32> to vector<2x8x8xf32>
    %387 = arith.subf %383, %386 : vector<2x8x8xf32>
    %388 = math.exp %387 : vector<2x8x8xf32>
    %cst_94 = arith.constant dense<0.000000e+00> : vector<2x8xf32>
    %389 = vector.multi_reduction <add>, %388, %cst_94 [2] : vector<2x8x8xf32> to vector<2x8xf32>
    %390 = vector.shape_cast %389 : vector<2x8xf32> to vector<2x8x1xf32>
    %391 = tpu.reciprocal %390 {approx = true} : vector<2x8x1xf32> -> vector<2x8x1xf32>
    %392 = vector.broadcast %391 : vector<2x8x1xf32> to vector<2x8x8xf32>
    %393 = arith.mulf %388, %392 : vector<2x8x8xf32>
    %394 = arith.truncf %393 : vector<2x8x8xf32> to vector<2x8x8xbf16>
    %395 = arith.truncf %377 : vector<2x8x8xf32> to vector<2x8x8xbf16>
    "tpu.trace_start"() <{level = 10 : i32, message = "bqk,bkd->bqd"}> : () -> ()
    %cst_95 = arith.constant dense<0.000000e+00> : vector<2x8x8xf32>
    %396 = tpu.matmul %394, %395, %cst_95 {dimension_numbers = #tpu.dot_dimension_numbers<[2], [1], [1], [2], [0, 0, 0, 1, 1, 2], [0], [0]>} : vector<2x8x8xbf16>, vector<2x8x8xbf16>, vector<2x8x8xf32> -> vector<2x8x8xf32>
    "tpu.trace_stop"() : () -> ()
    %397 = vector.extract_strided_slice %271 {offsets = [0, 24], sizes = [16, 8], strides = [1, 1]} : vector<16x32xf32> to vector<16x8xf32>
    %398 = vector.shape_cast %397 : vector<16x8xf32> to vector<2x8x8xf32>
    %399 = vector.extract_strided_slice %398 {offsets = [0, 0, 0], sizes = [2, 8, 4], strides = [1, 1, 1]} : vector<2x8x8xf32> to vector<2x8x4xf32>
    %400 = vector.extract_strided_slice %398 {offsets = [0, 0, 4], sizes = [2, 8, 4], strides = [1, 1, 1]} : vector<2x8x8xf32> to vector<2x8x4xf32>
    %cst_96 = arith.constant 0.000000e+00 : f32
    %401 = vector.broadcast %cst_96 : f32 to vector<2x8x4xf32>
    %402 = arith.subf %401, %400 : vector<2x8x4xf32>
    %403 = tpu.concatenate %402, %399 in 2 : vector<2x8x4xf32>, vector<2x8x4xf32> -> vector<2x8x8xf32>
    %404 = arith.mulf %398, %19 : vector<2x8x8xf32>
    %405 = arith.mulf %403, %23 : vector<2x8x8xf32>
    %406 = arith.addf %404, %405 : vector<2x8x8xf32>
    %407 = vector.extract_strided_slice %272 {offsets = [0, 24], sizes = [16, 8], strides = [1, 1]} : vector<16x32xf32> to vector<16x8xf32>
    %408 = vector.shape_cast %407 : vector<16x8xf32> to vector<2x8x8xf32>
    %409 = vector.extract_strided_slice %408 {offsets = [0, 0, 0], sizes = [2, 8, 4], strides = [1, 1, 1]} : vector<2x8x8xf32> to vector<2x8x4xf32>
    %410 = vector.extract_strided_slice %408 {offsets = [0, 0, 4], sizes = [2, 8, 4], strides = [1, 1, 1]} : vector<2x8x8xf32> to vector<2x8x4xf32>
    %cst_97 = arith.constant 0.000000e+00 : f32
    %411 = vector.broadcast %cst_97 : f32 to vector<2x8x4xf32>
    %412 = arith.subf %411, %410 : vector<2x8x4xf32>
    %413 = tpu.concatenate %412, %409 in 2 : vector<2x8x4xf32>, vector<2x8x4xf32> -> vector<2x8x8xf32>
    %414 = arith.mulf %408, %19 : vector<2x8x8xf32>
    %415 = arith.mulf %413, %23 : vector<2x8x8xf32>
    %416 = arith.addf %414, %415 : vector<2x8x8xf32>
    %417 = vector.extract_strided_slice %273 {offsets = [0, 24], sizes = [16, 8], strides = [1, 1]} : vector<16x32xf32> to vector<16x8xf32>
    %418 = vector.shape_cast %417 : vector<16x8xf32> to vector<2x8x8xf32>
    %419 = arith.truncf %406 : vector<2x8x8xf32> to vector<2x8x8xbf16>
    %420 = arith.truncf %416 : vector<2x8x8xf32> to vector<2x8x8xbf16>
    "tpu.trace_start"() <{level = 10 : i32, message = "bqd,bkd->bqk"}> : () -> ()
    %cst_98 = arith.constant dense<0.000000e+00> : vector<2x8x8xf32>
    %421 = tpu.matmul %419, %420, %cst_98 {dimension_numbers = #tpu.dot_dimension_numbers<[2], [2], [1], [1], [0, 0, 0, 1, 1, 1], [0], [0]>} : vector<2x8x8xbf16>, vector<2x8x8xbf16>, vector<2x8x8xf32> -> vector<2x8x8xf32>
    "tpu.trace_stop"() : () -> ()
    %cst_99 = arith.constant 0.353553385 : f32
    %422 = vector.broadcast %cst_99 : f32 to vector<2x8x8xf32>
    %423 = arith.mulf %421, %422 : vector<2x8x8xf32>
    %424 = arith.addf %423, %15 : vector<2x8x8xf32>
    %cst_100 = arith.constant dense<0xFF800000> : vector<2x8xf32>
    %425 = vector.multi_reduction <maximumf>, %424, %cst_100 [2] : vector<2x8x8xf32> to vector<2x8xf32>
    %426 = vector.shape_cast %425 : vector<2x8xf32> to vector<2x8x1xf32>
    %427 = vector.broadcast %426 : vector<2x8x1xf32> to vector<2x8x8xf32>
    %428 = arith.subf %424, %427 : vector<2x8x8xf32>
    %429 = math.exp %428 : vector<2x8x8xf32>
    %cst_101 = arith.constant dense<0.000000e+00> : vector<2x8xf32>
    %430 = vector.multi_reduction <add>, %429, %cst_101 [2] : vector<2x8x8xf32> to vector<2x8xf32>
    %431 = vector.shape_cast %430 : vector<2x8xf32> to vector<2x8x1xf32>
    %432 = tpu.reciprocal %431 {approx = true} : vector<2x8x1xf32> -> vector<2x8x1xf32>
    %433 = vector.broadcast %432 : vector<2x8x1xf32> to vector<2x8x8xf32>
    %434 = arith.mulf %429, %433 : vector<2x8x8xf32>
    %435 = arith.truncf %434 : vector<2x8x8xf32> to vector<2x8x8xbf16>
    %436 = arith.truncf %418 : vector<2x8x8xf32> to vector<2x8x8xbf16>
    "tpu.trace_start"() <{level = 10 : i32, message = "bqk,bkd->bqd"}> : () -> ()
    %cst_102 = arith.constant dense<0.000000e+00> : vector<2x8x8xf32>
    %437 = tpu.matmul %435, %436, %cst_102 {dimension_numbers = #tpu.dot_dimension_numbers<[2], [1], [1], [2], [0, 0, 0, 1, 1, 2], [0], [0]>} : vector<2x8x8xbf16>, vector<2x8x8xbf16>, vector<2x8x8xf32> -> vector<2x8x8xf32>
    "tpu.trace_stop"() : () -> ()
    %438 = tpu.concatenate %314, %355, %396, %437 in 2 : vector<2x8x8xf32>, vector<2x8x8xf32>, vector<2x8x8xf32>, vector<2x8x8xf32> -> vector<2x8x32xf32>
    %439 = vector.shape_cast %438 : vector<2x8x32xf32> to vector<16x32xf32>
    %440 = arith.truncf %439 : vector<16x32xf32> to vector<16x32xbf16>
    %c1_103 = arith.constant 1 : index
    %c0_104 = arith.constant 0 : index
    %c0_105 = arith.constant 0 : index
    %441 = vector.load %arg5[%c1_103, %c0_104, %c0_105] : memref<2x32x32xbf16, #tpu.memory_space<vmem>>, vector<1x32x32xbf16>
    %442 = vector.shape_cast %441 : vector<1x32x32xbf16> to vector<32x32xbf16>
    %cst_106 = arith.constant dense<0.000000e+00> : vector<16x32xf32>
    %443 = tpu.matmul %440, %442, %cst_106 {dimension_numbers = #tpu.dot_dimension_numbers<[1], [0], [0], [1], [0, 0, 1, 1], [], []>} : vector<16x32xbf16>, vector<32x32xbf16>, vector<16x32xf32> -> vector<16x32xf32>
    %444 = arith.addf %251, %443 : vector<16x32xf32>
    %c1_107 = arith.constant 1 : index
    %c0_108 = arith.constant 0 : index
    %c0_109 = arith.constant 0 : index
    %445 = vector.load %arg9[%c1_107, %c0_108, %c0_109] : memref<2x1x32xbf16, #tpu.memory_space<vmem>>, vector<1x1x32xbf16>
    %446 = vector.shape_cast %445 : vector<1x1x32xbf16> to vector<1x32xbf16>
    %447 = arith.mulf %444, %444 : vector<16x32xf32>
    %cst_110 = arith.constant dense<0.000000e+00> : vector<16xf32>
    %448 = vector.multi_reduction <add>, %447, %cst_110 [1] : vector<16x32xf32> to vector<16xf32>
    %449 = vector.shape_cast %448 : vector<16xf32> to vector<16x1xf32>
    %cst_111 = arith.constant 3.200000e+01 : f32
    %450 = vector.broadcast %cst_111 : f32 to vector<16x1xf32>
    %451 = arith.divf %449, %450 : vector<16x1xf32>
    %cst_112 = arith.constant 9.99999974E-6 : f32
    %452 = vector.broadcast %cst_112 : f32 to vector<16x1xf32>
    %453 = arith.addf %451, %452 : vector<16x1xf32>
    %454 = math.rsqrt %453 : vector<16x1xf32>
    %455 = vector.broadcast %454 : vector<16x1xf32> to vector<16x32xf32>
    %456 = arith.mulf %444, %455 : vector<16x32xf32>
    %457 = arith.extf %446 : vector<1x32xbf16> to vector<1x32xf32>
    %458 = vector.broadcast %457 : vector<1x32xf32> to vector<16x32xf32>
    %459 = arith.mulf %456, %458 : vector<16x32xf32>
    %460 = arith.truncf %459 : vector<16x32xf32> to vector<16x32xbf16>
    %c1_113 = arith.constant 1 : index
    %c0_114 = arith.constant 0 : index
    %c0_115 = arith.constant 0 : index
    %461 = vector.load %arg6[%c1_113, %c0_114, %c0_115] : memref<2x32x128xbf16, #tpu.memory_space<vmem>>, vector<1x32x128xbf16>
    %462 = vector.shape_cast %461 : vector<1x32x128xbf16> to vector<32x128xbf16>
    %cst_116 = arith.constant dense<0.000000e+00> : vector<16x128xf32>
    %463 = tpu.matmul %460, %462, %cst_116 {dimension_numbers = #tpu.dot_dimension_numbers<[1], [0], [0], [1], [0, 0, 1, 1], [], []>} : vector<16x32xbf16>, vector<32x128xbf16>, vector<16x128xf32> -> vector<16x128xf32>
    %464 = vector.extract_strided_slice %463 {offsets = [0, 0], sizes = [16, 64], strides = [1, 1]} : vector<16x128xf32> to vector<16x64xf32>
    %465 = vector.extract_strided_slice %463 {offsets = [0, 64], sizes = [16, 64], strides = [1, 1]} : vector<16x128xf32> to vector<16x64xf32>
    %466 = arith.negf %464 : vector<16x64xf32>
    %467 = math.exp %466 : vector<16x64xf32>
    %cst_117 = arith.constant 1.000000e+00 : f32
    %468 = vector.broadcast %cst_117 : f32 to vector<16x64xf32>
    %469 = arith.addf %468, %467 : vector<16x64xf32>
    %470 = arith.divf %468, %469 : vector<16x64xf32>
    %471 = arith.mulf %464, %470 : vector<16x64xf32>
    %472 = arith.mulf %471, %465 : vector<16x64xf32>
    %473 = arith.truncf %472 : vector<16x64xf32> to vector<16x64xbf16>
    %c1_118 = arith.constant 1 : index
    %c0_119 = arith.constant 0 : index
    %c0_120 = arith.constant 0 : index
    %474 = vector.load %arg7[%c1_118, %c0_119, %c0_120] : memref<2x64x32xbf16, #tpu.memory_space<vmem>>, vector<1x64x32xbf16>
    %475 = vector.shape_cast %474 : vector<1x64x32xbf16> to vector<64x32xbf16>
    %cst_121 = arith.constant dense<0.000000e+00> : vector<16x32xf32>
    %476 = tpu.matmul %473, %475, %cst_121 {dimension_numbers = #tpu.dot_dimension_numbers<[1], [0], [0], [1], [0, 0, 1, 1], [], []>} : vector<16x64xbf16>, vector<64x32xbf16>, vector<16x32xf32> -> vector<16x32xf32>
    %477 = arith.addf %444, %476 : vector<16x32xf32>
    %478 = arith.truncf %477 : vector<16x32xf32> to vector<16x32xbf16>
    %c0_122 = arith.constant 0 : index
    %c0_123 = arith.constant 0 : index
    %479 = vector.load %arg13[%c0_122, %c0_123] : memref<16x32xbf16, #tpu.memory_space<vmem>>, vector<16x32xbf16>
    tpu.vector_store %arg13[%c0_122, %c0_123], %478 {strides = array<i32>} : memref<16x32xbf16, #tpu.memory_space<vmem>>, vector<16x32xbf16>,
    %480 = arith.extf %478 : vector<16x32xbf16> to vector<16x32xf32>
    %c0_124 = arith.constant 0 : index
    %c0_125 = arith.constant 0 : index
    %481 = vector.load %arg10[%c0_124, %c0_125] : memref<1x32xbf16, #tpu.memory_space<vmem>>, vector<1x32xbf16>
    %482 = arith.mulf %480, %480 : vector<16x32xf32>
    %cst_126 = arith.constant dense<0.000000e+00> : vector<16xf32>
    %483 = vector.multi_reduction <add>, %482, %cst_126 [1] : vector<16x32xf32> to vector<16xf32>
    %484 = vector.shape_cast %483 : vector<16xf32> to vector<16x1xf32>
    %cst_127 = arith.constant 3.200000e+01 : f32
    %485 = vector.broadcast %cst_127 : f32 to vector<16x1xf32>
    %486 = arith.divf %484, %485 : vector<16x1xf32>
    %cst_128 = arith.constant 9.99999974E-6 : f32
    %487 = vector.broadcast %cst_128 : f32 to vector<16x1xf32>
    %488 = arith.addf %486, %487 : vector<16x1xf32>
    %489 = math.rsqrt %488 : vector<16x1xf32>
    %490 = vector.broadcast %489 : vector<16x1xf32> to vector<16x32xf32>
    %491 = arith.mulf %480, %490 : vector<16x32xf32>
    %492 = arith.extf %481 : vector<1x32xbf16> to vector<1x32xf32>
    %493 = vector.broadcast %492 : vector<1x32xf32> to vector<16x32xf32>
    %494 = arith.mulf %491, %493 : vector<16x32xf32>
    %495 = arith.truncf %494 : vector<16x32xf32> to vector<16x32xbf16>
    %c0_129 = arith.constant 0 : index
    %c0_130 = arith.constant 0 : index
    %496 = vector.load %arg11[%c0_129, %c0_130] : memref<32x128xbf16, #tpu.memory_space<vmem>>, vector<32x128xbf16>
    %cst_131 = arith.constant dense<0.000000e+00> : vector<16x128xf32>
    %497 = tpu.matmul %495, %496, %cst_131 {dimension_numbers = #tpu.dot_dimension_numbers<[1], [0], [0], [1], [0, 0, 1, 1], [], []>} : vector<16x32xbf16>, vector<32x128xbf16>, vector<16x128xf32> -> vector<16x128xf32>
    %c0_132 = arith.constant 0 : index
    %c0_133 = arith.constant 0 : index
    %498 = vector.load %arg12[%c0_132, %c0_133] : memref<16x128xf32, #tpu.memory_space<vmem>>, vector<16x128xf32>
    tpu.vector_store %arg12[%c0_132, %c0_133], %497 {strides = array<i32>} : memref<16x128xf32, #tpu.memory_space<vmem>>, vector<16x128xf32>,
    return
  }
}

</mosaic_0001>

<llo_original>
// kernel: tpu_custom_call.1
$region0: #{tpu_custom_call.1}
  #allocation0 [shape = 'u32[]', space=smem, size = 0x4, offset = 0x4, fixed_abs, tag = 'smem constant byte address 0x4 - core index']
  #allocation1 [shape = 'u32[144,128]{1,0:T(1,128)}', space=vmem, size = 0x12000, scoped, tag = 'internal scratch']
  %s0 = inlined_call_operand.hbm [shape: bf16[16,32], index: 0, kind: input, shape index: {}]
  %s1 = inlined_call_operand.hbm [shape: f32[2,8], index: 1, kind: input, shape index: {}]
  %s2 = inlined_call_operand.hbm [shape: f32[8,8], index: 2, kind: input, shape index: {}]
  %s3 = inlined_call_operand.hbm [shape: f32[8,8], index: 3, kind: input, shape index: {}]
  %s4 = inlined_call_operand.vmem [shape: bf16[2,32,96], index: 4, kind: input, shape index: {}]
  %s5 = inlined_call_operand.vmem [shape: bf16[2,32,32], index: 5, kind: input, shape index: {}]
  %s6 = inlined_call_operand.vmem [shape: bf16[2,32,128], index: 6, kind: input, shape index: {}]
  %s7 = inlined_call_operand.vmem [shape: bf16[2,64,32], index: 7, kind: input, shape index: {}]
  %s8 = inlined_call_operand.vmem [shape: bf16[2,1,32], index: 8, kind: input, shape index: {}]
  %s9 = inlined_call_operand.vmem [shape: bf16[2,1,32], index: 9, kind: input, shape index: {}]
  %s10 = inlined_call_operand.vmem [shape: bf16[1,32], index: 10, kind: input, shape index: {}]
  %s11 = inlined_call_operand.vmem [shape: bf16[32,128], index: 11, kind: input, shape index: {}]
  %s12 = inlined_call_operand.hbm [shape: f32[16,128], index: 12, kind: output, shape index: {0}]
  %s13 = inlined_call_operand.hbm [shape: bf16[16,32], index: 13, kind: output, shape index: {1}]
  %14 = xla_tuple %s12, %s13
  %s15 = sld [smem:[#allocation0]]
  $region82: #{tpu_custom_call.1} parent=0
    _
  %s17 = ssub.s32 1, %s15
  %s18 = scalar_select 0, %s17, %s15
  $region1: #{tpu_custom_call.1} parent=0
    #allocation2 [shape = 'u8[4096]{0}', space=vmem, size = 0x1000, scoped, tag = 'input window, operand 0, single buffered']
    #allocation3 [shape = 's32[1]{0}', space=sflag, size = 0x4, scoped, tag = 'scoped memory for tpu_custom_call.1']
    #allocation4 [shape = 's32[1]{0}', space=sflag, size = 0x4, scoped, tag = 'scoped memory for tpu_custom_call.1']
    #allocation5 [shape = 'u8[1024]{0}', space=vmem, size = 0x400, scoped, tag = 'input window, operand 1, single buffered']
    #allocation6 [shape = 's32[1]{0}', space=sflag, size = 0x4, scoped, tag = 'scoped memory for tpu_custom_call.1']
    #allocation7 [shape = 'u8[4096]{0}', space=vmem, size = 0x1000, scoped, tag = 'input window, operand 2, single buffered']
    #allocation8 [shape = 'u8[4096]{0}', space=vmem, size = 0x1000, scoped, tag = 'input window, operand 3, single buffered']
    #allocation9 [shape = 's32[1]{0}', space=sflag, size = 0x4, scoped, tag = 'scoped memory for tpu_custom_call.1']
    #allocation10 [shape = 'u8[8192]{0}', space=vmem, size = 0x2000, scoped, tag = 'output window, operand 0, single buffered']
    #allocation11 [shape = 'u8[4096]{0}', space=vmem, size = 0x1000, scoped, tag = 'output window, operand 1, single buffered']
    #allocation12 [shape = 's32[1]{0}', space=sflag, size = 0x4, scoped, tag = 'scoped memory for tpu_custom_call.1']
    %19 = vsyncpa [#allocation3], 0
    %20 = vsyncpa [#allocation6], 0
    %21 = vsyncpa [#allocation9], 0
    %22 = vsyncpa [#allocation4], 0
    %23 = vsyncpa [#allocation12], 0
    // Predicated region
    $region2: #{tpu_custom_call.1} parent=1 // pred_check
      _
    $region3: #{tpu_custom_call.1} parent=1 // pred_check_branch
      %25 = sbr.rel (0) target = $region5
    $region4: #{tpu_custom_call.1} parent=1 // pred_region
      %s27 = ssub.s32 128, 128
      %28 = vsyncadd [#allocation3], %s27
      %s29 = sshll.u32 [#allocation2], 4
      %s30 = int_to_ptr.vmem [resolvable:$true] %s29
      %35 = dma.hbm_to_vmem [thread:$0]  %s0, 128, %s30, [#allocation3], 64, 64, 4
    $region5: #{tpu_custom_call.1} parent=1 // pred_fallthru
      _
    // Predicated region
    $region6: #{tpu_custom_call.1} parent=1 // pred_check
      _
    $region7: #{tpu_custom_call.1} parent=1 // pred_check_branch
      %37 = sbr.rel (0) target = $region9
    $region8: #{tpu_custom_call.1} parent=1 // pred_region
      %s39 = ssub.s32 32, 32
      %40 = vsyncadd [#allocation6], %s39
      %s42 = sshll.u32 [#allocation5], 4
      %s43 = int_to_ptr.vmem [resolvable:$true] %s42
      %45 = dma.hbm_to_vmem [thread:$0]  %s1, 32, %s43, [#allocation6]
    $region9: #{tpu_custom_call.1} parent=1 // pred_fallthru
      _
    // Predicated region
    $region10: #{tpu_custom_call.1} parent=1 // pred_check
      _
    $region11: #{tpu_custom_call.1} parent=1 // pred_check_branch
      %47 = sbr.rel (0) target = $region13
    $region12: #{tpu_custom_call.1} parent=1 // pred_region
      %s49 = ssub.s32 128, 128
      %50 = vsyncadd [#allocation6], %s49
      %s52 = sshll.u32 [#allocation7], 4
      %s53 = int_to_ptr.vmem [resolvable:$true] %s52
      %55 = dma.hbm_to_vmem [thread:$0]  %s2, 128, %s53, [#allocation6]
    $region13: #{tpu_custom_call.1} parent=1 // pred_fallthru
      _
    // Predicated region
    $region14: #{tpu_custom_call.1} parent=1 // pred_check
      _
    $region15: #{tpu_custom_call.1} parent=1 // pred_check_branch
      %57 = sbr.rel (0) target = $region17
    $region16: #{tpu_custom_call.1} parent=1 // pred_region
      %s59 = ssub.s32 128, 128
      %60 = vsyncadd [#allocation9], %s59
      %s62 = sshll.u32 [#allocation8], 4
      %s63 = int_to_ptr.vmem [resolvable:$true] %s62
      %65 = dma.hbm_to_vmem [thread:$0]  %s3, 128, %s63, [#allocation9]
    $region17: #{tpu_custom_call.1} parent=1 // pred_fallthru
      _
    // Predicated region
    $region18: #{tpu_custom_call.1} parent=1 // pred_check
      _
    $region19: #{tpu_custom_call.1} parent=1 // pred_check_branch
      %67 = sbr.rel (0) target = $region21
    $region20: #{tpu_custom_call.1} parent=1 // pred_region
      _
    $region21: #{tpu_custom_call.1} parent=1 // pred_fallthru
      _
    // Predicated region
    $region22: #{tpu_custom_call.1} parent=1 // pred_check
      _
    $region23: #{tpu_custom_call.1} parent=1 // pred_check_branch
      %69 = sbr.rel (0) target = $region25
    $region24: #{tpu_custom_call.1} parent=1 // pred_region
      _
    $region25: #{tpu_custom_call.1} parent=1 // pred_fallthru
      _
    // Predicated region
    $region26: #{tpu_custom_call.1} parent=1 // pred_check
      _
    $region27: #{tpu_custom_call.1} parent=1 // pred_check_branch
      %71 = sbr.rel (0) target = $region29
    $region28: #{tpu_custom_call.1} parent=1 // pred_region
      _
    $region29: #{tpu_custom_call.1} parent=1 // pred_fallthru
      _
    // Predicated region
    $region30: #{tpu_custom_call.1} parent=1 // pred_check
      _
    $region31: #{tpu_custom_call.1} parent=1 // pred_check_branch
      %73 = sbr.rel (0) target = $region33
    $region32: #{tpu_custom_call.1} parent=1 // pred_region
      _
    $region33: #{tpu_custom_call.1} parent=1 // pred_fallthru
      _
    // Predicated region
    $region34: #{tpu_custom_call.1} parent=1 // pred_check
      _
    $region35: #{tpu_custom_call.1} parent=1 // pred_check_branch
      %75 = sbr.rel (0) target = $region37
    $region36: #{tpu_custom_call.1} parent=1 // pred_region
      _
    $region37: #{tpu_custom_call.1} parent=1 // pred_fallthru
      _
    // Predicated region
    $region38: #{tpu_custom_call.1} parent=1 // pred_check
      _
    $region39: #{tpu_custom_call.1} parent=1 // pred_check_branch
      %77 = sbr.rel (0) target = $region41
    $region40: #{tpu_custom_call.1} parent=1 // pred_region
      _
    $region41: #{tpu_custom_call.1} parent=1 // pred_fallthru
      _
    // Predicated region
    $region42: #{tpu_custom_call.1} parent=1 // pred_check
      _
    $region43: #{tpu_custom_call.1} parent=1 // pred_check_branch
      %79 = sbr.rel (0) target = $region45
    $region44: #{tpu_custom_call.1} parent=1 // pred_region
      _
    $region45: #{tpu_custom_call.1} parent=1 // pred_fallthru
      _
    // Predicated region
    $region46: #{tpu_custom_call.1} parent=1 // pred_check
      _
    $region47: #{tpu_custom_call.1} parent=1 // pred_check_branch
      %81 = sbr.rel (0) target = $region49
    $region48: #{tpu_custom_call.1} parent=1 // pred_region
      _
    $region49: #{tpu_custom_call.1} parent=1 // pred_fallthru
      _
    // Predicated region
    $region50: #{tpu_custom_call.1} parent=1 // pred_check
      _
    $region51: #{tpu_custom_call.1} parent=1 // pred_check_branch
      %83 = sbr.rel (0) target = $region53
    $region52: #{tpu_custom_call.1} parent=1 // pred_region
      %84 = dma.done [#allocation3], 128
    $region53: #{tpu_custom_call.1} parent=1 // pred_fallthru
      _
    // Predicated region
    $region54: #{tpu_custom_call.1} parent=1 // pred_check
      _
    $region55: #{tpu_custom_call.1} parent=1 // pred_check_branch
      %86 = sbr.rel (0) target = $region57
    $region56: #{tpu_custom_call.1} parent=1 // pred_region
      %87 = dma.done [#allocation6], 32
    $region57: #{tpu_custom_call.1} parent=1 // pred_fallthru
      _
    // Predicated region
    $region58: #{tpu_custom_call.1} parent=1 // pred_check
      _
    $region59: #{tpu_custom_call.1} parent=1 // pred_check_branch
      %89 = sbr.rel (0) target = $region61
    $region60: #{tpu_custom_call.1} parent=1 // pred_region
      %90 = dma.done [#allocation6], 128
    $region61: #{tpu_custom_call.1} parent=1 // pred_fallthru
      _
    // Predicated region
    $region62: #{tpu_custom_call.1} parent=1 // pred_check
      _
    $region63: #{tpu_custom_call.1} parent=1 // pred_check_branch
      %92 = sbr.rel (0) target = $region65
    $region64: #{tpu_custom_call.1} parent=1 // pred_region
      %93 = dma.done [#allocation9], 128
    $region65: #{tpu_custom_call.1} parent=1 // pred_fallthru
      _
    %v95 = vld [vmem:[#allocation2] sm:$0xf]
    %v96 = vld [vmem:[#allocation2 + $0x4] sm:$0xf]
    %v97 = vunpack.c.l.bf16 %v95
    %v98 = vunpack.c.l.bf16 %v96
    %v99 = vlaneseq
    %v100 = vshrl.u32 %v99, 7
    %v101 = vlaneseq
    %v102 = vand.u32 %v101, 127
    %vm103 = vcmp.le.s32.totalorder %v102, %v100
    %v104 = vld [vmem:[#allocation5] sm:$0x3]
    %vm105 = vcmp.gt.f32.partialorder %v104, 0.5
    %v106 = vsel %vm105, 1, 0
    %v108 = vunpack.c.l.s4 1966171168
    %v109 = vunpack.c.0.s8 %v108
    %v110 = vlaneseq
    %v111 = vshrl.u32 %v110, 7
    %v112 = vsub.s32 %v109, %v111
    %v113 = vrot.slane %v106, %v112
    %v114 = vcombine.high %v113, %v113
    %v116 = vunpack.c.l.s4 1966171168
    %v117 = vunpack.c.0.s8 %v116
    %v118 = vlaneseq
    %v119 = vshrl.u32 %v118, 7
    %v120 = vsub.s32 %v117, %v119
    %v121 = vrot.slane %v113, %v120
    %v123 = vunpack.c.l.s4 1966171168
    %v124 = vunpack.c.0.s8 %v123
    %v125 = vlaneseq
    %v126 = vshrl.u32 %v125, 7
    %v127 = vsub.s32 %v124, %v126
    %v128 = vrot.slane %v114, %v127
    %vm129 = vcmp.ne.s32.totalorder %v121, 0
    %vm130 = vcmp.ne.s32.totalorder %v128, 0
    %v131 = vsel %vm103, 1, 0
    %vm132 = vcmp.eq.s32.totalorder %v131, 1
    %v133 = vsel %vm129, 1, 0
    %v134 = vsel %vm130, 1, 0
    %v135 = vlaneseq
    %v136 = vshrl.u32 %v135, 7
    %v137 = vsub.s32 0, %v136
    %v138 = vrot.slane %v133, %v137
    %v139 = vlaneseq
    %v140 = vshrl.u32 %v139, 7
    %v141 = vsub.s32 0, %v140
    %v142 = vrot.slane %v134, %v141
    %vm143 = vcmp.eq.s32.totalorder %v138, 1
    %vm144 = vcmp.eq.s32.totalorder %v142, 1
    %vm145 = vmand %vm132, %vm143
    %vm146 = vmand %vm132, %vm144
    %v147 = vsel %vm145, 0.0, -1e+09
    %v148 = vsel %vm146, 0.0, -1e+09
    %v149 = vld [vmem:[#allocation7] sm:$0xff]
    %v150 = vld [vmem:[#allocation8] sm:$0xff]
    %v151 = vld [vmem:[%s8] sm:$0x1]
    %v152 = vmul.f32 %v97, %v97
    %v153 = vmul.f32 %v98, %v98
    %vm154 = vcmask 261120
    %v155 = vsel %vm154, %v152, 0.0
    %156 = vadd.xlane.f32.xlu0 %v155
    %v157 = vpop.xlane.xlu0 %156
    %v158 = vsel %vm154, %v153, 0.0
    %159 = vadd.xlane.f32.xlu0 %v158
    %v160 = vpop.xlane.xlu0 %159
    %v161 = vrcp.pop 32.0
    %v162 = vmul.f32 %v157, %v161
    %v163 = vmul.f32 %v160, %v161
    %v164 = vadd.f32 %v162, 1e-05
    %v165 = vadd.f32 %v163, 1e-05
    %v166 = vrsqrt.pop %v164
    %v167 = vrsqrt.pop %v165
    %v168 = vmul.f32 %v97, %v166
    %v169 = vmul.f32 %v98, %v167
    %v170 = vunpack.c.l.bf16 %v151
    %v171 = vlaneseq
    %v172 = vshrl.u32 %v171, 7
    %v173 = vsub.s32 0, %v172
    %v174 = vrot.slane %v170, %v173
    %v175 = vmul.f32 %v168, %v174
    %v176 = vmul.f32 %v169, %v174
    %v177 = vpack.c.bf16 %v176, %v175
    %v178 = vld [vmem:[%s4] sm:$0xf]
    %v179 = vld [vmem:[%s4 + $0x4] sm:$0xf]
    %v180 = vld [vmem:[%s4 + $0x8] sm:$0xf]
    %v181 = vld [vmem:[%s4 + $0xc] sm:$0xf]
    %v186 = vunpack.c.l.b16 %v178
    %v187 = vunpack.c.l.b16 %v179
    %v188 = vunpack.c.l.b16 %v180
    %v189 = vunpack.c.l.b16 %v181
    %v190 = vpack.c.b16 %v187, %v186
    %v191 = vpack.c.b16 %v189, %v188
    %v195 = vsel %vm154, %v177, 0
    %197 = vmatprep.subr.bf16.mxu0 0
    %198 = vmatpush1.bf16.msra.mxu0 0
    %199 = vmatprep.subr.bf16.mxu0 0
    %200 = vmatpush1.bf16.msra.mxu0 0
    %201 = vmatprep.subr.bf16.mxu0 0
    %202 = vmatpush1.bf16.msra.mxu0 0
    %203 = vmatprep.subr.bf16.mxu0 0
    %204 = vmatpush1.bf16.msra.mxu0 0
    %205 = vmatprep.subr.bf16.mxu0 0
    %206 = vmatpush1.bf16.msra.mxu0 0
    %207 = vmatprep.subr.bf16.mxu0 0
    %208 = vmatpush1.bf16.msra.mxu0 0
    %209 = vmatprep.subr.bf16.mxu0 0
    %210 = vmatpush1.bf16.msra.mxu0 %v191
    %211 = vmatprep.subr.bf16.mxu0 0
    %212 = vmatpush1.bf16.msra.mxu0 %v190
    %213 = vmatprep.subr.bf16.mxu0 0
    %214 = vmatpush2.bf16.msra.mxu0 0
    %215 = vmatprep.subr.bf16.mxu0 0
    %216 = vmatpush2.bf16.msra.mxu0 0
    %217 = vmatprep.subr.bf16.mxu0 0
    %218 = vmatpush2.bf16.msra.mxu0 0
    %219 = vmatprep.subr.bf16.mxu0 0
    %220 = vmatpush2.bf16.msra.mxu0 0
    %221 = vmatprep.subr.bf16.mxu0 0
    %222 = vmatpush2.bf16.msra.mxu0 0
    %223 = vmatprep.subr.bf16.mxu0 0
    %224 = vmatpush2.bf16.msra.mxu0 0
    %225 = vmatprep.subr.bf16.mxu0 0
    %226 = vmatpush2.bf16.msra.mxu0 0
    %227 = vmatprep.subr.bf16.mxu0 0
    %228 = vmatpush2.bf16.msra.mxu0 0
    %229 = vmatprep.mubr.bf16.mxu0 0
    %230 = vmatmul.mubr.bf16.gmra.mxu0 %v195
    %v231 = vpop.f32.mrf.mxu0
    %v232 = vadd.f32 0.0, %v231
    %v233 = vpop.f32.mrf.mxu0
    %v234 = vpop.f32.mrf.mxu0
    %v235 = vadd.f32 0.0, %v234
    %v236 = vpop.f32.mrf.mxu0
    %237 = vdwg.mxu0
    %v238 = vsub.f32 0.0, %v232
    %v239 = vsub.f32 0.0, %v235
    %242 = vrot.lane.b32.xlu0 %v238, 124
    %v243 = vpop.permute.xlu0 %242
    %244 = vrot.lane.b32.xlu0 %v239, 124
    %v245 = vpop.permute.xlu0 %244
    %250 = vrot.lane.b32.xlu0 %v232, 4
    %v251 = vpop.permute.xlu0 %250
    %252 = vrot.lane.b32.xlu0 %v235, 4
    %v253 = vpop.permute.xlu0 %252
    %vm256 = vcmask 31744
    %v257 = vsel %vm256, %v243, %v251
    %v258 = vsel %vm256, %v245, %v253
    %v259 = vmul.f32 %v232, %v149
    %v260 = vmul.f32 %v235, %v149
    %v261 = vmul.f32 %v257, %v150
    %v262 = vmul.f32 %v258, %v150
    %v263 = vadd.f32 %v259, %v261
    %v264 = vadd.f32 %v260, %v262
    %265 = vrot.lane.b32.xlu0 %v238, 92
    %v266 = vpop.permute.xlu0 %265
    %267 = vrot.lane.b32.xlu0 %v239, 92
    %v268 = vpop.permute.xlu0 %267
    %271 = vrot.lane.b32.xlu0 %v232, 100
    %v272 = vpop.permute.xlu0 %271
    %273 = vrot.lane.b32.xlu0 %v235, 100
    %v274 = vpop.permute.xlu0 %273
    %v277 = vsel %vm256, %v266, %v272
    %v278 = vsel %vm256, %v268, %v274
    %280 = vrot.lane.b32.xlu0 %v149, 32
    %v281 = vpop.permute.xlu0 %280
    %v283 = vmul.f32 %v232, %v281
    %v284 = vmul.f32 %v235, %v281
    %v285 = vmul.f32 %v277, %v150
    %v286 = vmul.f32 %v278, %v150
    %289 = vrot.lane.b32.xlu0 %v285, 32
    %v290 = vpop.permute.xlu0 %289
    %291 = vrot.lane.b32.xlu0 %v286, 32
    %v292 = vpop.permute.xlu0 %291
    %v295 = vadd.f32 %v283, %v290
    %v296 = vadd.f32 %v284, %v292
    %v297 = vpack.c.bf16 %v263, %v263
    %v298 = vpack.c.bf16 %v264, %v264
    %v299 = vpack.c.bf16 %v295, %v295
    %v300 = vpack.c.bf16 %v296, %v296
    %302 = vrot.lane.b32.xlu0 %v299, 96
    %v303 = vpop.permute.xlu0 %302
    %vm304 = vcmask 64512
    %v306 = vsel %vm304, %v297, 0
    %v309 = vsel %vm304, %v303, 0
    %311 = vmatprep.subr.bf16.mxu0 0
    %312 = vmatpush1.bf16.xpose.msra.mxu0 0
    %313 = vmatprep.subr.bf16.mxu0 0
    %314 = vmatpush1.bf16.xpose.msra.mxu0 0
    %315 = vmatprep.subr.bf16.mxu0 0
    %316 = vmatpush1.bf16.xpose.msra.mxu0 0
    %317 = vmatprep.subr.bf16.mxu0 0
    %318 = vmatpush1.bf16.xpose.msra.mxu0 0
    %319 = vmatprep.subr.bf16.mxu0 0
    %320 = vmatpush1.bf16.xpose.msra.mxu0 0
    %321 = vmatprep.subr.bf16.mxu0 0
    %322 = vmatpush1.bf16.xpose.msra.mxu0 0
    %323 = vmatprep.subr.bf16.mxu0 0
    %324 = vmatpush1.bf16.xpose.msra.mxu0 0
    %325 = vmatprep.subr.bf16.mxu0 0
    %326 = vmatpush1.bf16.xpose.msra.mxu0 %v309
    %327 = vmatprep.subr.bf16.mxu0 0
    %328 = vmatpush2.bf16.xpose.msra.mxu0 0
    %329 = vmatprep.subr.bf16.mxu0 0
    %330 = vmatpush2.bf16.xpose.msra.mxu0 0
    %331 = vmatprep.subr.bf16.mxu0 0
    %332 = vmatpush2.bf16.xpose.msra.mxu0 0
    %333 = vmatprep.subr.bf16.mxu0 0
    %334 = vmatpush2.bf16.xpose.msra.mxu0 0
    %335 = vmatprep.subr.bf16.mxu0 0
    %336 = vmatpush2.bf16.xpose.msra.mxu0 0
    %337 = vmatprep.subr.bf16.mxu0 0
    %338 = vmatpush2.bf16.xpose.msra.mxu0 0
    %339 = vmatprep.subr.bf16.mxu0 0
    %340 = vmatpush2.bf16.xpose.msra.mxu0 0
    %341 = vmatprep.subr.bf16.mxu0 0
    %342 = vmatpush2.bf16.xpose.msra.mxu0 0
    %343 = vmatprep.mubr.bf16.mxu0 0
    %344 = vmatmul.mubr.bf16.gmra.mxu0 %v306
    %v345 = vpop.f32.mrf.mxu0
    %v346 = vadd.f32 0.0, %v345
    %v347 = vpop.f32.mrf.mxu0
    %v348 = vpop.f32.mrf.mxu0
    %v349 = vpop.f32.mrf.mxu0
    %350 = vdwg.mxu0
    %352 = vrot.lane.b32.xlu0 %v300, 96
    %v353 = vpop.permute.xlu0 %352
    %v355 = vsel %vm304, %v298, 0
    %v358 = vsel %vm304, %v353, 0
    %360 = vmatprep.subr.bf16.mxu0 0
    %361 = vmatpush1.bf16.xpose.msra.mxu0 0
    %362 = vmatprep.subr.bf16.mxu0 0
    %363 = vmatpush1.bf16.xpose.msra.mxu0 0
    %364 = vmatprep.subr.bf16.mxu0 0
    %365 = vmatpush1.bf16.xpose.msra.mxu0 0
    %366 = vmatprep.subr.bf16.mxu0 0
    %367 = vmatpush1.bf16.xpose.msra.mxu0 0
    %368 = vmatprep.subr.bf16.mxu0 0
    %369 = vmatpush1.bf16.xpose.msra.mxu0 0
    %370 = vmatprep.subr.bf16.mxu0 0
    %371 = vmatpush1.bf16.xpose.msra.mxu0 0
    %372 = vmatprep.subr.bf16.mxu0 0
    %373 = vmatpush1.bf16.xpose.msra.mxu0 0
    %374 = vmatprep.subr.bf16.mxu0 0
    %375 = vmatpush1.bf16.xpose.msra.mxu0 %v358
    %376 = vmatprep.subr.bf16.mxu0 0
    %377 = vmatpush2.bf16.xpose.msra.mxu0 0
    %378 = vmatprep.subr.bf16.mxu0 0
    %379 = vmatpush2.bf16.xpose.msra.mxu0 0
    %380 = vmatprep.subr.bf16.mxu0 0
    %381 = vmatpush2.bf16.xpose.msra.mxu0 0
    %382 = vmatprep.subr.bf16.mxu0 0
    %383 = vmatpush2.bf16.xpose.msra.mxu0 0
    %384 = vmatprep.subr.bf16.mxu0 0
    %385 = vmatpush2.bf16.xpose.msra.mxu0 0
    %386 = vmatprep.subr.bf16.mxu0 0
    %387 = vmatpush2.bf16.xpose.msra.mxu0 0
    %388 = vmatprep.subr.bf16.mxu0 0
    %389 = vmatpush2.bf16.xpose.msra.mxu0 0
    %390 = vmatprep.subr.bf16.mxu0 0
    %391 = vmatpush2.bf16.xpose.msra.mxu0 0
    %392 = vmatprep.mubr.bf16.mxu0 0
    %393 = vmatmul.mubr.bf16.gmra.mxu0 %v355
    %v394 = vpop.f32.mrf.mxu0
    %v395 = vadd.f32 0.0, %v394
    %v396 = vpop.f32.mrf.mxu0
    %v397 = vpop.f32.mrf.mxu0
    %v398 = vpop.f32.mrf.mxu0
    %399 = vdwg.mxu0
    %v400 = vmul.f32 %v346, 0.35355338
    %v401 = vmul.f32 %v395, 0.35355338
    %v402 = vadd.f32 %v400, %v147
    %v403 = vadd.f32 %v401, %v148
    %v404 = vsel %vm304, %v402, -inf
    %405 = vmax.xlane.f32.xlu0 %v404
    %v406 = vpop.xlane.xlu0 %405
    %v407 = vsel %vm304, %v403, -inf
    %408 = vmax.xlane.f32.xlu0 %v407
    %v409 = vpop.xlane.xlu0 %408
    %v410 = vsub.f32 %v402, %v406
    %v411 = vsub.f32 %v403, %v409
    %v412 = vmul.f32 %v410, 1.442695
    %v413 = vpow.pop %v412
    %v414 = vmul.f32 %v411, 1.442695
    %v415 = vpow.pop %v414
    %v416 = vsel %vm304, %v413, 0.0
    %417 = vadd.xlane.f32.xlu0 %v416
    %v418 = vpop.xlane.xlu0 %417
    %v419 = vsel %vm304, %v415, 0.0
    %420 = vadd.xlane.f32.xlu0 %v419
    %v421 = vpop.xlane.xlu0 %420
    %v422 = vrcp.pop %v418
    %v423 = vrcp.pop %v421
    %v424 = vmul.f32 %v413, %v422
    %v425 = vmul.f32 %v415, %v423
    %v426 = vpack.c.bf16 %v424, %v424
    %v427 = vpack.c.bf16 %v425, %v425
    %v428 = vpack.c.bf16 %v232, %v232
    %v429 = vpack.c.bf16 %v235, %v235
    %431 = vrot.lane.b32.xlu0 %v428, 64
    %v432 = vpop.permute.xlu0 %431
    %v434 = vsel %vm304, %v426, 0
    %vm436 = vcmask 1043456
    %v438 = vsel %vm436, %v432, 0
    %440 = vmatprep.subr.bf16.mxu0 0
    %441 = vmatpush1.bf16.msra.mxu0 0
    %442 = vmatprep.subr.bf16.mxu0 0
    %443 = vmatpush1.bf16.msra.mxu0 0
    %444 = vmatprep.subr.bf16.mxu0 0
    %445 = vmatpush1.bf16.msra.mxu0 0
    %446 = vmatprep.subr.bf16.mxu0 0
    %447 = vmatpush1.bf16.msra.mxu0 0
    %448 = vmatprep.subr.bf16.mxu0 0
    %449 = vmatpush1.bf16.msra.mxu0 0
    %450 = vmatprep.subr.bf16.mxu0 0
    %451 = vmatpush1.bf16.msra.mxu0 0
    %452 = vmatprep.subr.bf16.mxu0 0
    %453 = vmatpush1.bf16.msra.mxu0 0
    %454 = vmatprep.subr.bf16.mxu0 0
    %455 = vmatpush1.bf16.msra.mxu0 %v438
    %456 = vmatprep.subr.bf16.mxu0 0
    %457 = vmatpush2.bf16.msra.mxu0 0
    %458 = vmatprep.subr.bf16.mxu0 0
    %459 = vmatpush2.bf16.msra.mxu0 0
    %460 = vmatprep.subr.bf16.mxu0 0
    %461 = vmatpush2.bf16.msra.mxu0 0
    %462 = vmatprep.subr.bf16.mxu0 0
    %463 = vmatpush2.bf16.msra.mxu0 0
    %464 = vmatprep.subr.bf16.mxu0 0
    %465 = vmatpush2.bf16.msra.mxu0 0
    %466 = vmatprep.subr.bf16.mxu0 0
    %467 = vmatpush2.bf16.msra.mxu0 0
    %468 = vmatprep.subr.bf16.mxu0 0
    %469 = vmatpush2.bf16.msra.mxu0 0
    %470 = vmatprep.subr.bf16.mxu0 0
    %471 = vmatpush2.bf16.msra.mxu0 0
    %472 = vmatprep.mubr.bf16.mxu0 0
    %473 = vmatmul.mubr.bf16.gmra.mxu0 %v434
    %v474 = vpop.f32.mrf.mxu0
    %v475 = vadd.f32 0.0, %v474
    %v476 = vpop.f32.mrf.mxu0
    %v477 = vpop.f32.mrf.mxu0
    %v478 = vpop.f32.mrf.mxu0
    %479 = vdwg.mxu0
    %481 = vrot.lane.b32.xlu0 %v429, 64
    %v482 = vpop.permute.xlu0 %481
    %v484 = vsel %vm304, %v427, 0
    %v487 = vsel %vm436, %v482, 0
    %489 = vmatprep.subr.bf16.mxu0 0
    %490 = vmatpush1.bf16.msra.mxu0 0
    %491 = vmatprep.subr.bf16.mxu0 0
    %492 = vmatpush1.bf16.msra.mxu0 0
    %493 = vmatprep.subr.bf16.mxu0 0
    %494 = vmatpush1.bf16.msra.mxu0 0
    %495 = vmatprep.subr.bf16.mxu0 0
    %496 = vmatpush1.bf16.msra.mxu0 0
    %497 = vmatprep.subr.bf16.mxu0 0
    %498 = vmatpush1.bf16.msra.mxu0 0
    %499 = vmatprep.subr.bf16.mxu0 0
    %500 = vmatpush1.bf16.msra.mxu0 0
    %501 = vmatprep.subr.bf16.mxu0 0
    %502 = vmatpush1.bf16.msra.mxu0 0
    %503 = vmatprep.subr.bf16.mxu0 0
    %504 = vmatpush1.bf16.msra.mxu0 %v487
    %505 = vmatprep.subr.bf16.mxu0 0
    %506 = vmatpush2.bf16.msra.mxu0 0
    %507 = vmatprep.subr.bf16.mxu0 0
    %508 = vmatpush2.bf16.msra.mxu0 0
    %509 = vmatprep.subr.bf16.mxu0 0
    %510 = vmatpush2.bf16.msra.mxu0 0
    %511 = vmatprep.subr.bf16.mxu0 0
    %512 = vmatpush2.bf16.msra.mxu0 0
    %513 = vmatprep.subr.bf16.mxu0 0
    %514 = vmatpush2.bf16.msra.mxu0 0
    %515 = vmatprep.subr.bf16.mxu0 0
    %516 = vmatpush2.bf16.msra.mxu0 0
    %517 = vmatprep.subr.bf16.mxu0 0
    %518 = vmatpush2.bf16.msra.mxu0 0
    %519 = vmatprep.subr.bf16.mxu0 0
    %520 = vmatpush2.bf16.msra.mxu0 0
    %521 = vmatprep.mubr.bf16.mxu0 0
    %522 = vmatmul.mubr.bf16.gmra.mxu0 %v484
    %v523 = vpop.f32.mrf.mxu0
    %v524 = vadd.f32 0.0, %v523
    %v525 = vpop.f32.mrf.mxu0
    %v526 = vpop.f32.mrf.mxu0
    %v527 = vpop.f32.mrf.mxu0
    %528 = vdwg.mxu0
    %529 = vrot.lane.b32.xlu0 %v238, 116
    %v530 = vpop.permute.xlu0 %529
    %531 = vrot.lane.b32.xlu0 %v239, 116
    %v532 = vpop.permute.xlu0 %531
    %535 = vrot.lane.b32.xlu0 %v232, 124
    %v536 = vpop.permute.xlu0 %535
    %537 = vrot.lane.b32.xlu0 %v235, 124
    %v538 = vpop.permute.xlu0 %537
    %v541 = vsel %vm256, %v530, %v536
    %v542 = vsel %vm256, %v532, %v538
    %543 = vrot.lane.b32.xlu0 %v149, 8
    %v544 = vpop.permute.xlu0 %543
    %v546 = vmul.f32 %v232, %v544
    %v547 = vmul.f32 %v235, %v544
    %v548 = vmul.f32 %v541, %v150
    %v549 = vmul.f32 %v542, %v150
    %552 = vrot.lane.b32.xlu0 %v548, 8
    %v553 = vpop.permute.xlu0 %552
    %554 = vrot.lane.b32.xlu0 %v549, 8
    %v555 = vpop.permute.xlu0 %554
    %v558 = vadd.f32 %v546, %v553
    %v559 = vadd.f32 %v547, %v555
    %560 = vrot.lane.b32.xlu0 %v238, 84
    %v561 = vpop.permute.xlu0 %560
    %562 = vrot.lane.b32.xlu0 %v239, 84
    %v563 = vpop.permute.xlu0 %562
    %566 = vrot.lane.b32.xlu0 %v232, 92
    %v567 = vpop.permute.xlu0 %566
    %568 = vrot.lane.b32.xlu0 %v235, 92
    %v569 = vpop.permute.xlu0 %568
    %v572 = vsel %vm256, %v561, %v567
    %v573 = vsel %vm256, %v563, %v569
    %574 = vrot.lane.b32.xlu0 %v149, 40
    %v575 = vpop.permute.xlu0 %574
    %v577 = vmul.f32 %v232, %v575
    %v578 = vmul.f32 %v235, %v575
    %v579 = vmul.f32 %v572, %v150
    %v580 = vmul.f32 %v573, %v150
    %583 = vrot.lane.b32.xlu0 %v579, 40
    %v584 = vpop.permute.xlu0 %583
    %585 = vrot.lane.b32.xlu0 %v580, 40
    %v586 = vpop.permute.xlu0 %585
    %v589 = vadd.f32 %v577, %v584
    %v590 = vadd.f32 %v578, %v586
    %v591 = vpack.c.bf16 %v558, %v558
    %v592 = vpack.c.bf16 %v559, %v559
    %v593 = vpack.c.bf16 %v589, %v589
    %v594 = vpack.c.bf16 %v590, %v590
    %596 = vrot.lane.b32.xlu0 %v591, 120
    %v597 = vpop.permute.xlu0 %596
    %599 = vrot.lane.b32.xlu0 %v593, 88
    %v600 = vpop.permute.xlu0 %599
    %v602 = vsel %vm304, %v597, 0
    %v605 = vsel %vm304, %v600, 0
    %607 = vmatprep.subr.bf16.mxu0 0
    %608 = vmatpush1.bf16.xpose.msra.mxu0 0
    %609 = vmatprep.subr.bf16.mxu0 0
    %610 = vmatpush1.bf16.xpose.msra.mxu0 0
    %611 = vmatprep.subr.bf16.mxu0 0
    %612 = vmatpush1.bf16.xpose.msra.mxu0 0
    %613 = vmatprep.subr.bf16.mxu0 0
    %614 = vmatpush1.bf16.xpose.msra.mxu0 0
    %615 = vmatprep.subr.bf16.mxu0 0
    %616 = vmatpush1.bf16.xpose.msra.mxu0 0
    %617 = vmatprep.subr.bf16.mxu0 0
    %618 = vmatpush1.bf16.xpose.msra.mxu0 0
    %619 = vmatprep.subr.bf16.mxu0 0
    %620 = vmatpush1.bf16.xpose.msra.mxu0 0
    %621 = vmatprep.subr.bf16.mxu0 0
    %622 = vmatpush1.bf16.xpose.msra.mxu0 %v605
    %623 = vmatprep.subr.bf16.mxu0 0
    %624 = vmatpush2.bf16.xpose.msra.mxu0 0
    %625 = vmatprep.subr.bf16.mxu0 0
    %626 = vmatpush2.bf16.xpose.msra.mxu0 0
    %627 = vmatprep.subr.bf16.mxu0 0
    %628 = vmatpush2.bf16.xpose.msra.mxu0 0
    %629 = vmatprep.subr.bf16.mxu0 0
    %630 = vmatpush2.bf16.xpose.msra.mxu0 0
    %631 = vmatprep.subr.bf16.mxu0 0
    %632 = vmatpush2.bf16.xpose.msra.mxu0 0
    %633 = vmatprep.subr.bf16.mxu0 0
    %634 = vmatpush2.bf16.xpose.msra.mxu0 0
    %635 = vmatprep.subr.bf16.mxu0 0
    %636 = vmatpush2.bf16.xpose.msra.mxu0 0
    %637 = vmatprep.subr.bf16.mxu0 0
    %638 = vmatpush2.bf16.xpose.msra.mxu0 0
    %639 = vmatprep.mubr.bf16.mxu0 0
    %640 = vmatmul.mubr.bf16.gmra.mxu0 %v602
    %v641 = vpop.f32.mrf.mxu0
    %v642 = vadd.f32 0.0, %v641
    %v643 = vpop.f32.mrf.mxu0
    %v644 = vpop.f32.mrf.mxu0
    %v645 = vpop.f32.mrf.mxu0
    %646 = vdwg.mxu0
    %648 = vrot.lane.b32.xlu0 %v592, 120
    %v649 = vpop.permute.xlu0 %648
    %651 = vrot.lane.b32.xlu0 %v594, 88
    %v652 = vpop.permute.xlu0 %651
    %v654 = vsel %vm304, %v649, 0
    %v657 = vsel %vm304, %v652, 0
    %659 = vmatprep.subr.bf16.mxu0 0
    %660 = vmatpush1.bf16.xpose.msra.mxu0 0
    %661 = vmatprep.subr.bf16.mxu0 0
    %662 = vmatpush1.bf16.xpose.msra.mxu0 0
    %663 = vmatprep.subr.bf16.mxu0 0
    %664 = vmatpush1.bf16.xpose.msra.mxu0 0
    %665 = vmatprep.subr.bf16.mxu0 0
    %666 = vmatpush1.bf16.xpose.msra.mxu0 0
    %667 = vmatprep.subr.bf16.mxu0 0
    %668 = vmatpush1.bf16.xpose.msra.mxu0 0
    %669 = vmatprep.subr.bf16.mxu0 0
    %670 = vmatpush1.bf16.xpose.msra.mxu0 0
    %671 = vmatprep.subr.bf16.mxu0 0
    %672 = vmatpush1.bf16.xpose.msra.mxu0 0
    %673 = vmatprep.subr.bf16.mxu0 0
    %674 = vmatpush1.bf16.xpose.msra.mxu0 %v657
    %675 = vmatprep.subr.bf16.mxu0 0
    %676 = vmatpush2.bf16.xpose.msra.mxu0 0
    %677 = vmatprep.subr.bf16.mxu0 0
    %678 = vmatpush2.bf16.xpose.msra.mxu0 0
    %679 = vmatprep.subr.bf16.mxu0 0
    %680 = vmatpush2.bf16.xpose.msra.mxu0 0
    %681 = vmatprep.subr.bf16.mxu0 0
    %682 = vmatpush2.bf16.xpose.msra.mxu0 0
    %683 = vmatprep.subr.bf16.mxu0 0
    %684 = vmatpush2.bf16.xpose.msra.mxu0 0
    %685 = vmatprep.subr.bf16.mxu0 0
    %686 = vmatpush2.bf16.xpose.msra.mxu0 0
    %687 = vmatprep.subr.bf16.mxu0 0
    %688 = vmatpush2.bf16.xpose.msra.mxu0 0
    %689 = vmatprep.subr.bf16.mxu0 0
    %690 = vmatpush2.bf16.xpose.msra.mxu0 0
    %691 = vmatprep.mubr.bf16.mxu0 0
    %692 = vmatmul.mubr.bf16.gmra.mxu0 %v654
    %v693 = vpop.f32.mrf.mxu0
    %v694 = vadd.f32 0.0, %v693
    %v695 = vpop.f32.mrf.mxu0
    %v696 = vpop.f32.mrf.mxu0
    %v697 = vpop.f32.mrf.mxu0
    %698 = vdwg.mxu0
    %v699 = vmul.f32 %v642, 0.35355338
    %v700 = vmul.f32 %v694, 0.35355338
    %v701 = vadd.f32 %v699, %v147
    %v702 = vadd.f32 %v700, %v148
    %v703 = vsel %vm304, %v701, -inf
    %704 = vmax.xlane.f32.xlu0 %v703
    %v705 = vpop.xlane.xlu0 %704
    %v706 = vsel %vm304, %v702, -inf
    %707 = vmax.xlane.f32.xlu0 %v706
    %v708 = vpop.xlane.xlu0 %707
    %v709 = vsub.f32 %v701, %v705
    %v710 = vsub.f32 %v702, %v708
    %v711 = vmul.f32 %v709, 1.442695
    %v712 = vpow.pop %v711
    %v713 = vmul.f32 %v710, 1.442695
    %v714 = vpow.pop %v713
    %v715 = vsel %vm304, %v712, 0.0
    %716 = vadd.xlane.f32.xlu0 %v715
    %v717 = vpop.xlane.xlu0 %716
    %v718 = vsel %vm304, %v714, 0.0
    %719 = vadd.xlane.f32.xlu0 %v718
    %v720 = vpop.xlane.xlu0 %719
    %v721 = vrcp.pop %v717
    %v722 = vrcp.pop %v720
    %v723 = vmul.f32 %v712, %v721
    %v724 = vmul.f32 %v714, %v722
    %v725 = vpack.c.bf16 %v723, %v723
    %v726 = vpack.c.bf16 %v724, %v724
    %727 = vrot.lane.b32.xlu0 %v428, 56
    %v728 = vpop.permute.xlu0 %727
    %v730 = vsel %vm304, %v725, 0
    %v733 = vsel %vm436, %v728, 0
    %735 = vmatprep.subr.bf16.mxu0 0
    %736 = vmatpush1.bf16.msra.mxu0 0
    %737 = vmatprep.subr.bf16.mxu0 0
    %738 = vmatpush1.bf16.msra.mxu0 0
    %739 = vmatprep.subr.bf16.mxu0 0
    %740 = vmatpush1.bf16.msra.mxu0 0
    %741 = vmatprep.subr.bf16.mxu0 0
    %742 = vmatpush1.bf16.msra.mxu0 0
    %743 = vmatprep.subr.bf16.mxu0 0
    %744 = vmatpush1.bf16.msra.mxu0 0
    %745 = vmatprep.subr.bf16.mxu0 0
    %746 = vmatpush1.bf16.msra.mxu0 0
    %747 = vmatprep.subr.bf16.mxu0 0
    %748 = vmatpush1.bf16.msra.mxu0 0
    %749 = vmatprep.subr.bf16.mxu0 0
    %750 = vmatpush1.bf16.msra.mxu0 %v733
    %751 = vmatprep.subr.bf16.mxu0 0
    %752 = vmatpush2.bf16.msra.mxu0 0
    %753 = vmatprep.subr.bf16.mxu0 0
    %754 = vmatpush2.bf16.msra.mxu0 0
    %755 = vmatprep.subr.bf16.mxu0 0
    %756 = vmatpush2.bf16.msra.mxu0 0
    %757 = vmatprep.subr.bf16.mxu0 0
    %758 = vmatpush2.bf16.msra.mxu0 0
    %759 = vmatprep.subr.bf16.mxu0 0
    %760 = vmatpush2.bf16.msra.mxu0 0
    %761 = vmatprep.subr.bf16.mxu0 0
    %762 = vmatpush2.bf16.msra.mxu0 0
    %763 = vmatprep.subr.bf16.mxu0 0
    %764 = vmatpush2.bf16.msra.mxu0 0
    %765 = vmatprep.subr.bf16.mxu0 0
    %766 = vmatpush2.bf16.msra.mxu0 0
    %767 = vmatprep.mubr.bf16.mxu0 0
    %768 = vmatmul.mubr.bf16.gmra.mxu0 %v730
    %v769 = vpop.f32.mrf.mxu0
    %v770 = vadd.f32 0.0, %v769
    %v771 = vpop.f32.mrf.mxu0
    %v772 = vpop.f32.mrf.mxu0
    %v773 = vpop.f32.mrf.mxu0
    %774 = vdwg.mxu0
    %775 = vrot.lane.b32.xlu0 %v429, 56
    %v776 = vpop.permute.xlu0 %775
    %v778 = vsel %vm304, %v726, 0
    %v781 = vsel %vm436, %v776, 0
    %783 = vmatprep.subr.bf16.mxu0 0
    %784 = vmatpush1.bf16.msra.mxu0 0
    %785 = vmatprep.subr.bf16.mxu0 0
    %786 = vmatpush1.bf16.msra.mxu0 0
    %787 = vmatprep.subr.bf16.mxu0 0
    %788 = vmatpush1.bf16.msra.mxu0 0
    %789 = vmatprep.subr.bf16.mxu0 0
    %790 = vmatpush1.bf16.msra.mxu0 0
    %791 = vmatprep.subr.bf16.mxu0 0
    %792 = vmatpush1.bf16.msra.mxu0 0
    %793 = vmatprep.subr.bf16.mxu0 0
    %794 = vmatpush1.bf16.msra.mxu0 0
    %795 = vmatprep.subr.bf16.mxu0 0
    %796 = vmatpush1.bf16.msra.mxu0 0
    %797 = vmatprep.subr.bf16.mxu0 0
    %798 = vmatpush1.bf16.msra.mxu0 %v781
    %799 = vmatprep.subr.bf16.mxu0 0
    %800 = vmatpush2.bf16.msra.mxu0 0
    %801 = vmatprep.subr.bf16.mxu0 0
    %802 = vmatpush2.bf16.msra.mxu0 0
    %803 = vmatprep.subr.bf16.mxu0 0
    %804 = vmatpush2.bf16.msra.mxu0 0
    %805 = vmatprep.subr.bf16.mxu0 0
    %806 = vmatpush2.bf16.msra.mxu0 0
    %807 = vmatprep.subr.bf16.mxu0 0
    %808 = vmatpush2.bf16.msra.mxu0 0
    %809 = vmatprep.subr.bf16.mxu0 0
    %810 = vmatpush2.bf16.msra.mxu0 0
    %811 = vmatprep.subr.bf16.mxu0 0
    %812 = vmatpush2.bf16.msra.mxu0 0
    %813 = vmatprep.subr.bf16.mxu0 0
    %814 = vmatpush2.bf16.msra.mxu0 0
    %815 = vmatprep.mubr.bf16.mxu0 0
    %816 = vmatmul.mubr.bf16.gmra.mxu0 %v778
    %v817 = vpop.f32.mrf.mxu0
    %v818 = vadd.f32 0.0, %v817
    %v819 = vpop.f32.mrf.mxu0
    %v820 = vpop.f32.mrf.mxu0
    %v821 = vpop.f32.mrf.mxu0
    %822 = vdwg.mxu0
    %823 = vrot.lane.b32.xlu0 %v238, 108
    %v824 = vpop.permute.xlu0 %823
    %825 = vrot.lane.b32.xlu0 %v239, 108
    %v826 = vpop.permute.xlu0 %825
    %829 = vrot.lane.b32.xlu0 %v232, 116
    %v830 = vpop.permute.xlu0 %829
    %831 = vrot.lane.b32.xlu0 %v235, 116
    %v832 = vpop.permute.xlu0 %831
    %v835 = vsel %vm256, %v824, %v830
    %v836 = vsel %vm256, %v826, %v832
    %837 = vrot.lane.b32.xlu0 %v149, 16
    %v838 = vpop.permute.xlu0 %837
    %v840 = vmul.f32 %v232, %v838
    %v841 = vmul.f32 %v235, %v838
    %v842 = vmul.f32 %v835, %v150
    %v843 = vmul.f32 %v836, %v150
    %846 = vrot.lane.b32.xlu0 %v842, 16
    %v847 = vpop.permute.xlu0 %846
    %848 = vrot.lane.b32.xlu0 %v843, 16
    %v849 = vpop.permute.xlu0 %848
    %v852 = vadd.f32 %v840, %v847
    %v853 = vadd.f32 %v841, %v849
    %854 = vrot.lane.b32.xlu0 %v238, 76
    %v855 = vpop.permute.xlu0 %854
    %856 = vrot.lane.b32.xlu0 %v239, 76
    %v857 = vpop.permute.xlu0 %856
    %860 = vrot.lane.b32.xlu0 %v232, 84
    %v861 = vpop.permute.xlu0 %860
    %862 = vrot.lane.b32.xlu0 %v235, 84
    %v863 = vpop.permute.xlu0 %862
    %v866 = vsel %vm256, %v855, %v861
    %v867 = vsel %vm256, %v857, %v863
    %868 = vrot.lane.b32.xlu0 %v149, 48
    %v869 = vpop.permute.xlu0 %868
    %v871 = vmul.f32 %v232, %v869
    %v872 = vmul.f32 %v235, %v869
    %v873 = vmul.f32 %v866, %v150
    %v874 = vmul.f32 %v867, %v150
    %877 = vrot.lane.b32.xlu0 %v873, 48
    %v878 = vpop.permute.xlu0 %877
    %879 = vrot.lane.b32.xlu0 %v874, 48
    %v880 = vpop.permute.xlu0 %879
    %v883 = vadd.f32 %v871, %v878
    %v884 = vadd.f32 %v872, %v880
    %v885 = vpack.c.bf16 %v852, %v852
    %v886 = vpack.c.bf16 %v853, %v853
    %v887 = vpack.c.bf16 %v883, %v883
    %v888 = vpack.c.bf16 %v884, %v884
    %890 = vrot.lane.b32.xlu0 %v885, 112
    %v891 = vpop.permute.xlu0 %890
    %893 = vrot.lane.b32.xlu0 %v887, 80
    %v894 = vpop.permute.xlu0 %893
    %v896 = vsel %vm304, %v891, 0
    %v899 = vsel %vm304, %v894, 0
    %901 = vmatprep.subr.bf16.mxu0 0
    %902 = vmatpush1.bf16.xpose.msra.mxu0 0
    %903 = vmatprep.subr.bf16.mxu0 0
    %904 = vmatpush1.bf16.xpose.msra.mxu0 0
    %905 = vmatprep.subr.bf16.mxu0 0
    %906 = vmatpush1.bf16.xpose.msra.mxu0 0
    %907 = vmatprep.subr.bf16.mxu0 0
    %908 = vmatpush1.bf16.xpose.msra.mxu0 0
    %909 = vmatprep.subr.bf16.mxu0 0
    %910 = vmatpush1.bf16.xpose.msra.mxu0 0
    %911 = vmatprep.subr.bf16.mxu0 0
    %912 = vmatpush1.bf16.xpose.msra.mxu0 0
    %913 = vmatprep.subr.bf16.mxu0 0
    %914 = vmatpush1.bf16.xpose.msra.mxu0 0
    %915 = vmatprep.subr.bf16.mxu0 0
    %916 = vmatpush1.bf16.xpose.msra.mxu0 %v899
    %917 = vmatprep.subr.bf16.mxu0 0
    %918 = vmatpush2.bf16.xpose.msra.mxu0 0
    %919 = vmatprep.subr.bf16.mxu0 0
    %920 = vmatpush2.bf16.xpose.msra.mxu0 0
    %921 = vmatprep.subr.bf16.mxu0 0
    %922 = vmatpush2.bf16.xpose.msra.mxu0 0
    %923 = vmatprep.subr.bf16.mxu0 0
    %924 = vmatpush2.bf16.xpose.msra.mxu0 0
    %925 = vmatprep.subr.bf16.mxu0 0
    %926 = vmatpush2.bf16.xpose.msra.mxu0 0
    %927 = vmatprep.subr.bf16.mxu0 0
    %928 = vmatpush2.bf16.xpose.msra.mxu0 0
    %929 = vmatprep.subr.bf16.mxu0 0
    %930 = vmatpush2.bf16.xpose.msra.mxu0 0
    %931 = vmatprep.subr.bf16.mxu0 0
    %932 = vmatpush2.bf16.xpose.msra.mxu0 0
    %933 = vmatprep.mubr.bf16.mxu0 0
    %934 = vmatmul.mubr.bf16.gmra.mxu0 %v896
    %v935 = vpop.f32.mrf.mxu0
    %v936 = vadd.f32 0.0, %v935
    %v937 = vpop.f32.mrf.mxu0
    %v938 = vpop.f32.mrf.mxu0
    %v939 = vpop.f32.mrf.mxu0
    %940 = vdwg.mxu0
    %942 = vrot.lane.b32.xlu0 %v886, 112
    %v943 = vpop.permute.xlu0 %942
    %945 = vrot.lane.b32.xlu0 %v888, 80
    %v946 = vpop.permute.xlu0 %945
    %v948 = vsel %vm304, %v943, 0
    %v951 = vsel %vm304, %v946, 0
    %953 = vmatprep.subr.bf16.mxu0 0
    %954 = vmatpush1.bf16.xpose.msra.mxu0 0
    %955 = vmatprep.subr.bf16.mxu0 0
    %956 = vmatpush1.bf16.xpose.msra.mxu0 0
    %957 = vmatprep.subr.bf16.mxu0 0
    %958 = vmatpush1.bf16.xpose.msra.mxu0 0
    %959 = vmatprep.subr.bf16.mxu0 0
    %960 = vmatpush1.bf16.xpose.msra.mxu0 0
    %961 = vmatprep.subr.bf16.mxu0 0
    %962 = vmatpush1.bf16.xpose.msra.mxu0 0
    %963 = vmatprep.subr.bf16.mxu0 0
    %964 = vmatpush1.bf16.xpose.msra.mxu0 0
    %965 = vmatprep.subr.bf16.mxu0 0
    %966 = vmatpush1.bf16.xpose.msra.mxu0 0
    %967 = vmatprep.subr.bf16.mxu0 0
    %968 = vmatpush1.bf16.xpose.msra.mxu0 %v951
    %969 = vmatprep.subr.bf16.mxu0 0
    %970 = vmatpush2.bf16.xpose.msra.mxu0 0
    %971 = vmatprep.subr.bf16.mxu0 0
    %972 = vmatpush2.bf16.xpose.msra.mxu0 0
    %973 = vmatprep.subr.bf16.mxu0 0
    %974 = vmatpush2.bf16.xpose.msra.mxu0 0
    %975 = vmatprep.subr.bf16.mxu0 0
    %976 = vmatpush2.bf16.xpose.msra.mxu0 0
    %977 = vmatprep.subr.bf16.mxu0 0
    %978 = vmatpush2.bf16.xpose.msra.mxu0 0
    %979 = vmatprep.subr.bf16.mxu0 0
    %980 = vmatpush2.bf16.xpose.msra.mxu0 0
    %981 = vmatprep.subr.bf16.mxu0 0
    %982 = vmatpush2.bf16.xpose.msra.mxu0 0
    %983 = vmatprep.subr.bf16.mxu0 0
    %984 = vmatpush2.bf16.xpose.msra.mxu0 0
    %985 = vmatprep.mubr.bf16.mxu0 0
    %986 = vmatmul.mubr.bf16.gmra.mxu0 %v948
    %v987 = vpop.f32.mrf.mxu0
    %v988 = vadd.f32 0.0, %v987
    %v989 = vpop.f32.mrf.mxu0
    %v990 = vpop.f32.mrf.mxu0
    %v991 = vpop.f32.mrf.mxu0
    %992 = vdwg.mxu0
    %v993 = vmul.f32 %v936, 0.35355338
    %v994 = vmul.f32 %v988, 0.35355338
    %v995 = vadd.f32 %v993, %v147
    %v996 = vadd.f32 %v994, %v148
    %v997 = vsel %vm304, %v995, -inf
    %998 = vmax.xlane.f32.xlu0 %v997
    %v999 = vpop.xlane.xlu0 %998
    %v1000 = vsel %vm304, %v996, -inf
    %1001 = vmax.xlane.f32.xlu0 %v1000
    %v1002 = vpop.xlane.xlu0 %1001
    %v1003 = vsub.f32 %v995, %v999
    %v1004 = vsub.f32 %v996, %v1002
    %v1005 = vmul.f32 %v1003, 1.442695
    %v1006 = vpow.pop %v1005
    %v1007 = vmul.f32 %v1004, 1.442695
    %v1008 = vpow.pop %v1007
    %v1009 = vsel %vm304, %v1006, 0.0
    %1010 = vadd.xlane.f32.xlu0 %v1009
    %v1011 = vpop.xlane.xlu0 %1010
    %v1012 = vsel %vm304, %v1008, 0.0
    %1013 = vadd.xlane.f32.xlu0 %v1012
    %v1014 = vpop.xlane.xlu0 %1013
    %v1015 = vrcp.pop %v1011
    %v1016 = vrcp.pop %v1014
    %v1017 = vmul.f32 %v1006, %v1015
    %v1018 = vmul.f32 %v1008, %v1016
    %v1019 = vpack.c.bf16 %v1017, %v1017
    %v1020 = vpack.c.bf16 %v1018, %v1018
    %1021 = vrot.lane.b32.xlu0 %v428, 48
    %v1022 = vpop.permute.xlu0 %1021
    %v1024 = vsel %vm304, %v1019, 0
    %v1027 = vsel %vm436, %v1022, 0
    %1029 = vmatprep.subr.bf16.mxu0 0
    %1030 = vmatpush1.bf16.msra.mxu0 0
    %1031 = vmatprep.subr.bf16.mxu0 0
    %1032 = vmatpush1.bf16.msra.mxu0 0
    %1033 = vmatprep.subr.bf16.mxu0 0
    %1034 = vmatpush1.bf16.msra.mxu0 0
    %1035 = vmatprep.subr.bf16.mxu0 0
    %1036 = vmatpush1.bf16.msra.mxu0 0
    %1037 = vmatprep.subr.bf16.mxu0 0
    %1038 = vmatpush1.bf16.msra.mxu0 0
    %1039 = vmatprep.subr.bf16.mxu0 0
    %1040 = vmatpush1.bf16.msra.mxu0 0
    %1041 = vmatprep.subr.bf16.mxu0 0
    %1042 = vmatpush1.bf16.msra.mxu0 0
    %1043 = vmatprep.subr.bf16.mxu0 0
    %1044 = vmatpush1.bf16.msra.mxu0 %v1027
    %1045 = vmatprep.subr.bf16.mxu0 0
    %1046 = vmatpush2.bf16.msra.mxu0 0
    %1047 = vmatprep.subr.bf16.mxu0 0
    %1048 = vmatpush2.bf16.msra.mxu0 0
    %1049 = vmatprep.subr.bf16.mxu0 0
    %1050 = vmatpush2.bf16.msra.mxu0 0
    %1051 = vmatprep.subr.bf16.mxu0 0
    %1052 = vmatpush2.bf16.msra.mxu0 0
    %1053 = vmatprep.subr.bf16.mxu0 0
    %1054 = vmatpush2.bf16.msra.mxu0 0
    %1055 = vmatprep.subr.bf16.mxu0 0
    %1056 = vmatpush2.bf16.msra.mxu0 0
    %1057 = vmatprep.subr.bf16.mxu0 0
    %1058 = vmatpush2.bf16.msra.mxu0 0
    %1059 = vmatprep.subr.bf16.mxu0 0
    %1060 = vmatpush2.bf16.msra.mxu0 0
    %1061 = vmatprep.mubr.bf16.mxu0 0
    %1062 = vmatmul.mubr.bf16.gmra.mxu0 %v1024
    %v1063 = vpop.f32.mrf.mxu0
    %v1064 = vadd.f32 0.0, %v1063
    %v1065 = vpop.f32.mrf.mxu0
    %v1066 = vpop.f32.mrf.mxu0
    %v1067 = vpop.f32.mrf.mxu0
    %1068 = vdwg.mxu0
    %1069 = vrot.lane.b32.xlu0 %v429, 48
    %v1070 = vpop.permute.xlu0 %1069
    %v1072 = vsel %vm304, %v1020, 0
    %v1075 = vsel %vm436, %v1070, 0
    %1077 = vmatprep.subr.bf16.mxu0 0
    %1078 = vmatpush1.bf16.msra.mxu0 0
    %1079 = vmatprep.subr.bf16.mxu0 0
    %1080 = vmatpush1.bf16.msra.mxu0 0
    %1081 = vmatprep.subr.bf16.mxu0 0
    %1082 = vmatpush1.bf16.msra.mxu0 0
    %1083 = vmatprep.subr.bf16.mxu0 0
    %1084 = vmatpush1.bf16.msra.mxu0 0
    %1085 = vmatprep.subr.bf16.mxu0 0
    %1086 = vmatpush1.bf16.msra.mxu0 0
    %1087 = vmatprep.subr.bf16.mxu0 0
    %1088 = vmatpush1.bf16.msra.mxu0 0
    %1089 = vmatprep.subr.bf16.mxu0 0
    %1090 = vmatpush1.bf16.msra.mxu0 0
    %1091 = vmatprep.subr.bf16.mxu0 0
    %1092 = vmatpush1.bf16.msra.mxu0 %v1075
    %1093 = vmatprep.subr.bf16.mxu0 0
    %1094 = vmatpush2.bf16.msra.mxu0 0
    %1095 = vmatprep.subr.bf16.mxu0 0
    %1096 = vmatpush2.bf16.msra.mxu0 0
    %1097 = vmatprep.subr.bf16.mxu0 0
    %1098 = vmatpush2.bf16.msra.mxu0 0
    %1099 = vmatprep.subr.bf16.mxu0 0
    %1100 = vmatpush2.bf16.msra.mxu0 0
    %1101 = vmatprep.subr.bf16.mxu0 0
    %1102 = vmatpush2.bf16.msra.mxu0 0
    %1103 = vmatprep.subr.bf16.mxu0 0
    %1104 = vmatpush2.bf16.msra.mxu0 0
    %1105 = vmatprep.subr.bf16.mxu0 0
    %1106 = vmatpush2.bf16.msra.mxu0 0
    %1107 = vmatprep.subr.bf16.mxu0 0
    %1108 = vmatpush2.bf16.msra.mxu0 0
    %1109 = vmatprep.mubr.bf16.mxu0 0
    %1110 = vmatmul.mubr.bf16.gmra.mxu0 %v1072
    %v1111 = vpop.f32.mrf.mxu0
    %v1112 = vadd.f32 0.0, %v1111
    %v1113 = vpop.f32.mrf.mxu0
    %v1114 = vpop.f32.mrf.mxu0
    %v1115 = vpop.f32.mrf.mxu0
    %1116 = vdwg.mxu0
    %1117 = vrot.lane.b32.xlu0 %v238, 100
    %v1118 = vpop.permute.xlu0 %1117
    %1119 = vrot.lane.b32.xlu0 %v239, 100
    %v1120 = vpop.permute.xlu0 %1119
    %1123 = vrot.lane.b32.xlu0 %v232, 108
    %v1124 = vpop.permute.xlu0 %1123
    %1125 = vrot.lane.b32.xlu0 %v235, 108
    %v1126 = vpop.permute.xlu0 %1125
    %v1129 = vsel %vm256, %v1118, %v1124
    %v1130 = vsel %vm256, %v1120, %v1126
    %1131 = vrot.lane.b32.xlu0 %v149, 24
    %v1132 = vpop.permute.xlu0 %1131
    %v1134 = vmul.f32 %v232, %v1132
    %v1135 = vmul.f32 %v235, %v1132
    %v1136 = vmul.f32 %v1129, %v150
    %v1137 = vmul.f32 %v1130, %v150
    %1140 = vrot.lane.b32.xlu0 %v1136, 24
    %v1141 = vpop.permute.xlu0 %1140
    %1142 = vrot.lane.b32.xlu0 %v1137, 24
    %v1143 = vpop.permute.xlu0 %1142
    %v1146 = vadd.f32 %v1134, %v1141
    %v1147 = vadd.f32 %v1135, %v1143
    %1148 = vrot.lane.b32.xlu0 %v238, 68
    %v1149 = vpop.permute.xlu0 %1148
    %1150 = vrot.lane.b32.xlu0 %v239, 68
    %v1151 = vpop.permute.xlu0 %1150
    %1154 = vrot.lane.b32.xlu0 %v232, 76
    %v1155 = vpop.permute.xlu0 %1154
    %1156 = vrot.lane.b32.xlu0 %v235, 76
    %v1157 = vpop.permute.xlu0 %1156
    %v1160 = vsel %vm256, %v1149, %v1155
    %v1161 = vsel %vm256, %v1151, %v1157
    %1162 = vrot.lane.b32.xlu0 %v149, 56
    %v1163 = vpop.permute.xlu0 %1162
    %v1165 = vmul.f32 %v232, %v1163
    %v1166 = vmul.f32 %v235, %v1163
    %v1167 = vmul.f32 %v1160, %v150
    %v1168 = vmul.f32 %v1161, %v150
    %1171 = vrot.lane.b32.xlu0 %v1167, 56
    %v1172 = vpop.permute.xlu0 %1171
    %1173 = vrot.lane.b32.xlu0 %v1168, 56
    %v1174 = vpop.permute.xlu0 %1173
    %v1177 = vadd.f32 %v1165, %v1172
    %v1178 = vadd.f32 %v1166, %v1174
    %v1179 = vpack.c.bf16 %v1146, %v1146
    %v1180 = vpack.c.bf16 %v1147, %v1147
    %v1181 = vpack.c.bf16 %v1177, %v1177
    %v1182 = vpack.c.bf16 %v1178, %v1178
    %1184 = vrot.lane.b32.xlu0 %v1179, 104
    %v1185 = vpop.permute.xlu0 %1184
    %1187 = vrot.lane.b32.xlu0 %v1181, 72
    %v1188 = vpop.permute.xlu0 %1187
    %v1190 = vsel %vm304, %v1185, 0
    %v1193 = vsel %vm304, %v1188, 0
    %1195 = vmatprep.subr.bf16.mxu0 0
    %1196 = vmatpush1.bf16.xpose.msra.mxu0 0
    %1197 = vmatprep.subr.bf16.mxu0 0
    %1198 = vmatpush1.bf16.xpose.msra.mxu0 0
    %1199 = vmatprep.subr.bf16.mxu0 0
    %1200 = vmatpush1.bf16.xpose.msra.mxu0 0
    %1201 = vmatprep.subr.bf16.mxu0 0
    %1202 = vmatpush1.bf16.xpose.msra.mxu0 0
    %1203 = vmatprep.subr.bf16.mxu0 0
    %1204 = vmatpush1.bf16.xpose.msra.mxu0 0
    %1205 = vmatprep.subr.bf16.mxu0 0
    %1206 = vmatpush1.bf16.xpose.msra.mxu0 0
    %1207 = vmatprep.subr.bf16.mxu0 0
    %1208 = vmatpush1.bf16.xpose.msra.mxu0 0
    %1209 = vmatprep.subr.bf16.mxu0 0
    %1210 = vmatpush1.bf16.xpose.msra.mxu0 %v1193
    %1211 = vmatprep.subr.bf16.mxu0 0
    %1212 = vmatpush2.bf16.xpose.msra.mxu0 0
    %1213 = vmatprep.subr.bf16.mxu0 0
    %1214 = vmatpush2.bf16.xpose.msra.mxu0 0
    %1215 = vmatprep.subr.bf16.mxu0 0
    %1216 = vmatpush2.bf16.xpose.msra.mxu0 0
    %1217 = vmatprep.subr.bf16.mxu0 0
    %1218 = vmatpush2.bf16.xpose.msra.mxu0 0
    %1219 = vmatprep.subr.bf16.mxu0 0
    %1220 = vmatpush2.bf16.xpose.msra.mxu0 0
    %1221 = vmatprep.subr.bf16.mxu0 0
    %1222 = vmatpush2.bf16.xpose.msra.mxu0 0
    %1223 = vmatprep.subr.bf16.mxu0 0
    %1224 = vmatpush2.bf16.xpose.msra.mxu0 0
    %1225 = vmatprep.subr.bf16.mxu0 0
    %1226 = vmatpush2.bf16.xpose.msra.mxu0 0
    %1227 = vmatprep.mubr.bf16.mxu0 0
    %1228 = vmatmul.mubr.bf16.gmra.mxu0 %v1190
    %v1229 = vpop.f32.mrf.mxu0
    %v1230 = vadd.f32 0.0, %v1229
    %v1231 = vpop.f32.mrf.mxu0
    %v1232 = vpop.f32.mrf.mxu0
    %v1233 = vpop.f32.mrf.mxu0
    %1234 = vdwg.mxu0
    %1236 = vrot.lane.b32.xlu0 %v1180, 104
    %v1237 = vpop.permute.xlu0 %1236
    %1239 = vrot.lane.b32.xlu0 %v1182, 72
    %v1240 = vpop.permute.xlu0 %1239
    %v1242 = vsel %vm304, %v1237, 0
    %v1245 = vsel %vm304, %v1240, 0
    %1247 = vmatprep.subr.bf16.mxu0 0
    %1248 = vmatpush1.bf16.xpose.msra.mxu0 0
    %1249 = vmatprep.subr.bf16.mxu0 0
    %1250 = vmatpush1.bf16.xpose.msra.mxu0 0
    %1251 = vmatprep.subr.bf16.mxu0 0
    %1252 = vmatpush1.bf16.xpose.msra.mxu0 0
    %1253 = vmatprep.subr.bf16.mxu0 0
    %1254 = vmatpush1.bf16.xpose.msra.mxu0 0
    %1255 = vmatprep.subr.bf16.mxu0 0
    %1256 = vmatpush1.bf16.xpose.msra.mxu0 0
    %1257 = vmatprep.subr.bf16.mxu0 0
    %1258 = vmatpush1.bf16.xpose.msra.mxu0 0
    %1259 = vmatprep.subr.bf16.mxu0 0
    %1260 = vmatpush1.bf16.xpose.msra.mxu0 0
    %1261 = vmatprep.subr.bf16.mxu0 0
    %1262 = vmatpush1.bf16.xpose.msra.mxu0 %v1245
    %1263 = vmatprep.subr.bf16.mxu0 0
    %1264 = vmatpush2.bf16.xpose.msra.mxu0 0
    %1265 = vmatprep.subr.bf16.mxu0 0
    %1266 = vmatpush2.bf16.xpose.msra.mxu0 0
    %1267 = vmatprep.subr.bf16.mxu0 0
    %1268 = vmatpush2.bf16.xpose.msra.mxu0 0
    %1269 = vmatprep.subr.bf16.mxu0 0
    %1270 = vmatpush2.bf16.xpose.msra.mxu0 0
    %1271 = vmatprep.subr.bf16.mxu0 0
    %1272 = vmatpush2.bf16.xpose.msra.mxu0 0
    %1273 = vmatprep.subr.bf16.mxu0 0
    %1274 = vmatpush2.bf16.xpose.msra.mxu0 0
    %1275 = vmatprep.subr.bf16.mxu0 0
    %1276 = vmatpush2.bf16.xpose.msra.mxu0 0
    %1277 = vmatprep.subr.bf16.mxu0 0
    %1278 = vmatpush2.bf16.xpose.msra.mxu0 0
    %1279 = vmatprep.mubr.bf16.mxu0 0
    %1280 = vmatmul.mubr.bf16.gmra.mxu0 %v1242
    %v1281 = vpop.f32.mrf.mxu0
    %v1282 = vadd.f32 0.0, %v1281
    %v1283 = vpop.f32.mrf.mxu0
    %v1284 = vpop.f32.mrf.mxu0
    %v1285 = vpop.f32.mrf.mxu0
    %1286 = vdwg.mxu0
    %v1287 = vmul.f32 %v1230, 0.35355338
    %v1288 = vmul.f32 %v1282, 0.35355338
    %v1289 = vadd.f32 %v1287, %v147
    %v1290 = vadd.f32 %v1288, %v148
    %v1291 = vsel %vm304, %v1289, -inf
    %1292 = vmax.xlane.f32.xlu0 %v1291
    %v1293 = vpop.xlane.xlu0 %1292
    %v1294 = vsel %vm304, %v1290, -inf
    %1295 = vmax.xlane.f32.xlu0 %v1294
    %v1296 = vpop.xlane.xlu0 %1295
    %v1297 = vsub.f32 %v1289, %v1293
    %v1298 = vsub.f32 %v1290, %v1296
    %v1299 = vmul.f32 %v1297, 1.442695
    %v1300 = vpow.pop %v1299
    %v1301 = vmul.f32 %v1298, 1.442695
    %v1302 = vpow.pop %v1301
    %v1303 = vsel %vm304, %v1300, 0.0
    %1304 = vadd.xlane.f32.xlu0 %v1303
    %v1305 = vpop.xlane.xlu0 %1304
    %v1306 = vsel %vm304, %v1302, 0.0
    %1307 = vadd.xlane.f32.xlu0 %v1306
    %v1308 = vpop.xlane.xlu0 %1307
    %v1309 = vrcp.pop %v1305
    %v1310 = vrcp.pop %v1308
    %v1311 = vmul.f32 %v1300, %v1309
    %v1312 = vmul.f32 %v1302, %v1310
    %v1313 = vpack.c.bf16 %v1311, %v1311
    %v1314 = vpack.c.bf16 %v1312, %v1312
    %1315 = vrot.lane.b32.xlu0 %v428, 40
    %v1316 = vpop.permute.xlu0 %1315
    %v1318 = vsel %vm304, %v1313, 0
    %v1321 = vsel %vm436, %v1316, 0
    %1323 = vmatprep.subr.bf16.mxu0 0
    %1324 = vmatpush1.bf16.msra.mxu0 0
    %1325 = vmatprep.subr.bf16.mxu0 0
    %1326 = vmatpush1.bf16.msra.mxu0 0
    %1327 = vmatprep.subr.bf16.mxu0 0
    %1328 = vmatpush1.bf16.msra.mxu0 0
    %1329 = vmatprep.subr.bf16.mxu0 0
    %1330 = vmatpush1.bf16.msra.mxu0 0
    %1331 = vmatprep.subr.bf16.mxu0 0
    %1332 = vmatpush1.bf16.msra.mxu0 0
    %1333 = vmatprep.subr.bf16.mxu0 0
    %1334 = vmatpush1.bf16.msra.mxu0 0
    %1335 = vmatprep.subr.bf16.mxu0 0
    %1336 = vmatpush1.bf16.msra.mxu0 0
    %1337 = vmatprep.subr.bf16.mxu0 0
    %1338 = vmatpush1.bf16.msra.mxu0 %v1321
    %1339 = vmatprep.subr.bf16.mxu0 0
    %1340 = vmatpush2.bf16.msra.mxu0 0
    %1341 = vmatprep.subr.bf16.mxu0 0
    %1342 = vmatpush2.bf16.msra.mxu0 0
    %1343 = vmatprep.subr.bf16.mxu0 0
    %1344 = vmatpush2.bf16.msra.mxu0 0
    %1345 = vmatprep.subr.bf16.mxu0 0
    %1346 = vmatpush2.bf16.msra.mxu0 0
    %1347 = vmatprep.subr.bf16.mxu0 0
    %1348 = vmatpush2.bf16.msra.mxu0 0
    %1349 = vmatprep.subr.bf16.mxu0 0
    %1350 = vmatpush2.bf16.msra.mxu0 0
    %1351 = vmatprep.subr.bf16.mxu0 0
    %1352 = vmatpush2.bf16.msra.mxu0 0
    %1353 = vmatprep.subr.bf16.mxu0 0
    %1354 = vmatpush2.bf16.msra.mxu0 0
    %1355 = vmatprep.mubr.bf16.mxu0 0
    %1356 = vmatmul.mubr.bf16.gmra.mxu0 %v1318
    %v1357 = vpop.f32.mrf.mxu0
    %v1358 = vadd.f32 0.0, %v1357
    %v1359 = vpop.f32.mrf.mxu0
    %v1360 = vpop.f32.mrf.mxu0
    %v1361 = vpop.f32.mrf.mxu0
    %1362 = vdwg.mxu0
    %1363 = vrot.lane.b32.xlu0 %v429, 40
    %v1364 = vpop.permute.xlu0 %1363
    %v1366 = vsel %vm304, %v1314, 0
    %v1369 = vsel %vm436, %v1364, 0
    %1371 = vmatprep.subr.bf16.mxu0 0
    %1372 = vmatpush1.bf16.msra.mxu0 0
    %1373 = vmatprep.subr.bf16.mxu0 0
    %1374 = vmatpush1.bf16.msra.mxu0 0
    %1375 = vmatprep.subr.bf16.mxu0 0
    %1376 = vmatpush1.bf16.msra.mxu0 0
    %1377 = vmatprep.subr.bf16.mxu0 0
    %1378 = vmatpush1.bf16.msra.mxu0 0
    %1379 = vmatprep.subr.bf16.mxu0 0
    %1380 = vmatpush1.bf16.msra.mxu0 0
    %1381 = vmatprep.subr.bf16.mxu0 0
    %1382 = vmatpush1.bf16.msra.mxu0 0
    %1383 = vmatprep.subr.bf16.mxu0 0
    %1384 = vmatpush1.bf16.msra.mxu0 0
    %1385 = vmatprep.subr.bf16.mxu0 0
    %1386 = vmatpush1.bf16.msra.mxu0 %v1369
    %1387 = vmatprep.subr.bf16.mxu0 0
    %1388 = vmatpush2.bf16.msra.mxu0 0
    %1389 = vmatprep.subr.bf16.mxu0 0
    %1390 = vmatpush2.bf16.msra.mxu0 0
    %1391 = vmatprep.subr.bf16.mxu0 0
    %1392 = vmatpush2.bf16.msra.mxu0 0
    %1393 = vmatprep.subr.bf16.mxu0 0
    %1394 = vmatpush2.bf16.msra.mxu0 0
    %1395 = vmatprep.subr.bf16.mxu0 0
    %1396 = vmatpush2.bf16.msra.mxu0 0
    %1397 = vmatprep.subr.bf16.mxu0 0
    %1398 = vmatpush2.bf16.msra.mxu0 0
    %1399 = vmatprep.subr.bf16.mxu0 0
    %1400 = vmatpush2.bf16.msra.mxu0 0
    %1401 = vmatprep.subr.bf16.mxu0 0
    %1402 = vmatpush2.bf16.msra.mxu0 0
    %1403 = vmatprep.mubr.bf16.mxu0 0
    %1404 = vmatmul.mubr.bf16.gmra.mxu0 %v1366
    %v1405 = vpop.f32.mrf.mxu0
    %v1406 = vadd.f32 0.0, %v1405
    %v1407 = vpop.f32.mrf.mxu0
    %v1408 = vpop.f32.mrf.mxu0
    %v1409 = vpop.f32.mrf.mxu0
    %1410 = vdwg.mxu0
    %1413 = vrot.lane.b32.xlu0 %v770, 8
    %v1414 = vpop.permute.xlu0 %1413
    %1415 = vrot.lane.b32.xlu0 %v818, 8
    %v1416 = vpop.permute.xlu0 %1415
    %1421 = vrot.lane.b32.xlu0 %v1064, 16
    %v1422 = vpop.permute.xlu0 %1421
    %1423 = vrot.lane.b32.xlu0 %v1112, 16
    %v1424 = vpop.permute.xlu0 %1423
    %1429 = vrot.lane.b32.xlu0 %v1358, 24
    %v1430 = vpop.permute.xlu0 %1429
    %1431 = vrot.lane.b32.xlu0 %v1406, 24
    %v1432 = vpop.permute.xlu0 %1431
    %v1435 = vsel %vm304, %v475, %v1414
    %v1436 = vsel %vm304, %v524, %v1416
    %vm1437 = vcmask 130048
    %v1438 = vsel %vm1437, %v1435, %v1422
    %v1439 = vsel %vm1437, %v1436, %v1424
    %vm1440 = vcmask 195584
    %v1441 = vsel %vm1440, %v1438, %v1430
    %v1442 = vsel %vm1440, %v1439, %v1432
    %v1443 = vpack.c.bf16 %v1442, %v1441
    %v1444 = vld [vmem:[%s5] sm:$0xf]
    %v1445 = vld [vmem:[%s5 + $0x4] sm:$0xf]
    %v1446 = vld [vmem:[%s5 + $0x8] sm:$0xf]
    %v1447 = vld [vmem:[%s5 + $0xc] sm:$0xf]
    %v1452 = vunpack.c.l.b16 %v1444
    %v1453 = vunpack.c.l.b16 %v1445
    %v1454 = vunpack.c.l.b16 %v1446
    %v1455 = vunpack.c.l.b16 %v1447
    %v1456 = vpack.c.b16 %v1453, %v1452
    %v1457 = vpack.c.b16 %v1455, %v1454
    %v1461 = vsel %vm154, %v1443, 0
    %1463 = vmatprep.subr.bf16.mxu0 0
    %1464 = vmatpush1.bf16.msra.mxu0 0
    %1465 = vmatprep.subr.bf16.mxu0 0
    %1466 = vmatpush1.bf16.msra.mxu0 0
    %1467 = vmatprep.subr.bf16.mxu0 0
    %1468 = vmatpush1.bf16.msra.mxu0 0
    %1469 = vmatprep.subr.bf16.mxu0 0
    %1470 = vmatpush1.bf16.msra.mxu0 0
    %1471 = vmatprep.subr.bf16.mxu0 0
    %1472 = vmatpush1.bf16.msra.mxu0 0
    %1473 = vmatprep.subr.bf16.mxu0 0
    %1474 = vmatpush1.bf16.msra.mxu0 0
    %1475 = vmatprep.subr.bf16.mxu0 0
    %1476 = vmatpush1.bf16.msra.mxu0 %v1457
    %1477 = vmatprep.subr.bf16.mxu0 0
    %1478 = vmatpush1.bf16.msra.mxu0 %v1456
    %1479 = vmatprep.subr.bf16.mxu0 0
    %1480 = vmatpush2.bf16.msra.mxu0 0
    %1481 = vmatprep.subr.bf16.mxu0 0
    %1482 = vmatpush2.bf16.msra.mxu0 0
    %1483 = vmatprep.subr.bf16.mxu0 0
    %1484 = vmatpush2.bf16.msra.mxu0 0
    %1485 = vmatprep.subr.bf16.mxu0 0
    %1486 = vmatpush2.bf16.msra.mxu0 0
    %1487 = vmatprep.subr.bf16.mxu0 0
    %1488 = vmatpush2.bf16.msra.mxu0 0
    %1489 = vmatprep.subr.bf16.mxu0 0
    %1490 = vmatpush2.bf16.msra.mxu0 0
    %1491 = vmatprep.subr.bf16.mxu0 0
    %1492 = vmatpush2.bf16.msra.mxu0 0
    %1493 = vmatprep.subr.bf16.mxu0 0
    %1494 = vmatpush2.bf16.msra.mxu0 0
    %1495 = vmatprep.mubr.bf16.mxu0 0
    %1496 = vmatmul.mubr.bf16.gmra.mxu0 %v1461
    %v1497 = vpop.f32.mrf.mxu0
    %v1498 = vadd.f32 0.0, %v1497
    %v1499 = vpop.f32.mrf.mxu0
    %v1500 = vpop.f32.mrf.mxu0
    %v1501 = vadd.f32 0.0, %v1500
    %v1502 = vpop.f32.mrf.mxu0
    %1503 = vdwg.mxu0
    %v1504 = vadd.f32 %v97, %v1498
    %v1505 = vadd.f32 %v98, %v1501
    %v1506 = vld [vmem:[%s9] sm:$0x1]
    %v1507 = vmul.f32 %v1504, %v1504
    %v1508 = vmul.f32 %v1505, %v1505
    %v1509 = vsel %vm154, %v1507, 0.0
    %1510 = vadd.xlane.f32.xlu0 %v1509
    %v1511 = vpop.xlane.xlu0 %1510
    %v1512 = vsel %vm154, %v1508, 0.0
    %1513 = vadd.xlane.f32.xlu0 %v1512
    %v1514 = vpop.xlane.xlu0 %1513
    %v1515 = vmul.f32 %v1511, %v161
    %v1516 = vmul.f32 %v1514, %v161
    %v1517 = vadd.f32 %v1515, 1e-05
    %v1518 = vadd.f32 %v1516, 1e-05
    %v1519 = vrsqrt.pop %v1517
    %v1520 = vrsqrt.pop %v1518
    %v1521 = vmul.f32 %v1504, %v1519
    %v1522 = vmul.f32 %v1505, %v1520
    %v1523 = vunpack.c.l.bf16 %v1506
    %v1524 = vlaneseq
    %v1525 = vshrl.u32 %v1524, 7
    %v1526 = vsub.s32 0, %v1525
    %v1527 = vrot.slane %v1523, %v1526
    %v1528 = vmul.f32 %v1521, %v1527
    %v1529 = vmul.f32 %v1522, %v1527
    %v1530 = vpack.c.bf16 %v1529, %v1528
    %v1531 = vld [vmem:[%s6] sm:$0xf]
    %v1532 = vld [vmem:[%s6 + $0x4] sm:$0xf]
    %v1533 = vld [vmem:[%s6 + $0x8] sm:$0xf]
    %v1534 = vld [vmem:[%s6 + $0xc] sm:$0xf]
    %v1539 = vunpack.c.l.b16 %v1531
    %v1540 = vunpack.c.l.b16 %v1532
    %v1541 = vunpack.c.l.b16 %v1533
    %v1542 = vunpack.c.l.b16 %v1534
    %v1543 = vpack.c.b16 %v1540, %v1539
    %v1544 = vpack.c.b16 %v1542, %v1541
    %v1548 = vsel %vm154, %v1530, 0
    %1550 = vmatprep.subr.bf16.mxu0 0
    %1551 = vmatpush1.bf16.msra.mxu0 0
    %1552 = vmatprep.subr.bf16.mxu0 0
    %1553 = vmatpush1.bf16.msra.mxu0 0
    %1554 = vmatprep.subr.bf16.mxu0 0
    %1555 = vmatpush1.bf16.msra.mxu0 0
    %1556 = vmatprep.subr.bf16.mxu0 0
    %1557 = vmatpush1.bf16.msra.mxu0 0
    %1558 = vmatprep.subr.bf16.mxu0 0
    %1559 = vmatpush1.bf16.msra.mxu0 0
    %1560 = vmatprep.subr.bf16.mxu0 0
    %1561 = vmatpush1.bf16.msra.mxu0 0
    %1562 = vmatprep.subr.bf16.mxu0 0
    %1563 = vmatpush1.bf16.msra.mxu0 %v1544
    %1564 = vmatprep.subr.bf16.mxu0 0
    %1565 = vmatpush1.bf16.msra.mxu0 %v1543
    %1566 = vmatprep.subr.bf16.mxu0 0
    %1567 = vmatpush2.bf16.msra.mxu0 0
    %1568 = vmatprep.subr.bf16.mxu0 0
    %1569 = vmatpush2.bf16.msra.mxu0 0
    %1570 = vmatprep.subr.bf16.mxu0 0
    %1571 = vmatpush2.bf16.msra.mxu0 0
    %1572 = vmatprep.subr.bf16.mxu0 0
    %1573 = vmatpush2.bf16.msra.mxu0 0
    %1574 = vmatprep.subr.bf16.mxu0 0
    %1575 = vmatpush2.bf16.msra.mxu0 0
    %1576 = vmatprep.subr.bf16.mxu0 0
    %1577 = vmatpush2.bf16.msra.mxu0 0
    %1578 = vmatprep.subr.bf16.mxu0 0
    %1579 = vmatpush2.bf16.msra.mxu0 0
    %1580 = vmatprep.subr.bf16.mxu0 0
    %1581 = vmatpush2.bf16.msra.mxu0 0
    %1582 = vmatprep.mubr.bf16.mxu0 0
    %1583 = vmatmul.mubr.bf16.gmra.mxu0 %v1548
    %v1584 = vpop.f32.mrf.mxu0
    %v1585 = vadd.f32 0.0, %v1584
    %v1586 = vpop.f32.mrf.mxu0
    %v1587 = vpop.f32.mrf.mxu0
    %v1588 = vadd.f32 0.0, %v1587
    %v1589 = vpop.f32.mrf.mxu0
    %1590 = vdwg.mxu0
    %v1591 = vxor.u32 %v1585, 2147483648
    %v1592 = vxor.u32 %v1588, 2147483648
    %v1593 = vmul.f32 %v1591, 1.442695
    %v1594 = vpow.pop %v1593
    %v1595 = vmul.f32 %v1592, 1.442695
    %v1596 = vpow.pop %v1595
    %v1597 = vadd.f32 %v1594, 1.0
    %v1598 = vadd.f32 %v1596, 1.0
    %v1599 = vrcp.pop %v1597
    %v1600 = vmul.f32 1.0, %v1599
    %v1601 = vrcp.pop %v1598
    %v1602 = vmul.f32 1.0, %v1601
    %v1603 = vmul.f32 %v1585, %v1600
    %v1604 = vmul.f32 %v1588, %v1602
    %1607 = vrot.lane.b32.xlu0 %v1585, 64
    %v1608 = vpop.permute.xlu0 %1607
    %1609 = vrot.lane.b32.xlu0 %v1588, 64
    %v1610 = vpop.permute.xlu0 %1609
    %v1613 = vmul.f32 %v1603, %v1608
    %v1614 = vmul.f32 %v1604, %v1610
    %v1615 = vpack.c.bf16 %v1614, %v1613
    %v1616 = vld [vmem:[%s7] sm:$0xf]
    %v1617 = vld [vmem:[%s7 + $0x4] sm:$0xf]
    %v1618 = vld [vmem:[%s7 + $0x8] sm:$0xf]
    %v1619 = vld [vmem:[%s7 + $0xc] sm:$0xf]
    %v1620 = vld [vmem:[%s7 + $0x10] sm:$0xf]
    %v1621 = vld [vmem:[%s7 + $0x14] sm:$0xf]
    %v1622 = vld [vmem:[%s7 + $0x18] sm:$0xf]
    %v1623 = vld [vmem:[%s7 + $0x1c] sm:$0xf]
    %v1632 = vunpack.c.l.b16 %v1616
    %v1633 = vunpack.c.l.b16 %v1617
    %v1634 = vunpack.c.l.b16 %v1618
    %v1635 = vunpack.c.l.b16 %v1619
    %v1636 = vunpack.c.l.b16 %v1620
    %v1637 = vunpack.c.l.b16 %v1621
    %v1638 = vunpack.c.l.b16 %v1622
    %v1639 = vunpack.c.l.b16 %v1623
    %v1640 = vpack.c.b16 %v1633, %v1632
    %v1641 = vpack.c.b16 %v1635, %v1634
    %v1642 = vpack.c.b16 %v1637, %v1636
    %v1643 = vpack.c.b16 %v1639, %v1638
    %vm1648 = vcmask 523264
    %v1650 = vsel %vm1648, %v1615, 0
    %1652 = vmatprep.subr.bf16.mxu0 0
    %1653 = vmatpush1.bf16.msra.mxu0 0
    %1654 = vmatprep.subr.bf16.mxu0 0
    %1655 = vmatpush1.bf16.msra.mxu0 0
    %1656 = vmatprep.subr.bf16.mxu0 0
    %1657 = vmatpush1.bf16.msra.mxu0 0
    %1658 = vmatprep.subr.bf16.mxu0 0
    %1659 = vmatpush1.bf16.msra.mxu0 0
    %1660 = vmatprep.subr.bf16.mxu0 0
    %1661 = vmatpush1.bf16.msra.mxu0 %v1643
    %1662 = vmatprep.subr.bf16.mxu0 0
    %1663 = vmatpush1.bf16.msra.mxu0 %v1642
    %1664 = vmatprep.subr.bf16.mxu0 0
    %1665 = vmatpush1.bf16.msra.mxu0 %v1641
    %1666 = vmatprep.subr.bf16.mxu0 0
    %1667 = vmatpush1.bf16.msra.mxu0 %v1640
    %1668 = vmatprep.subr.bf16.mxu0 0
    %1669 = vmatpush2.bf16.msra.mxu0 0
    %1670 = vmatprep.subr.bf16.mxu0 0
    %1671 = vmatpush2.bf16.msra.mxu0 0
    %1672 = vmatprep.subr.bf16.mxu0 0
    %1673 = vmatpush2.bf16.msra.mxu0 0
    %1674 = vmatprep.subr.bf16.mxu0 0
    %1675 = vmatpush2.bf16.msra.mxu0 0
    %1676 = vmatprep.subr.bf16.mxu0 0
    %1677 = vmatpush2.bf16.msra.mxu0 0
    %1678 = vmatprep.subr.bf16.mxu0 0
    %1679 = vmatpush2.bf16.msra.mxu0 0
    %1680 = vmatprep.subr.bf16.mxu0 0
    %1681 = vmatpush2.bf16.msra.mxu0 0
    %1682 = vmatprep.subr.bf16.mxu0 0
    %1683 = vmatpush2.bf16.msra.mxu0 0
    %1684 = vmatprep.mubr.bf16.mxu0 0
    %1685 = vmatmul.mubr.bf16.gmra.mxu0 %v1650
    %v1686 = vpop.f32.mrf.mxu0
    %v1687 = vadd.f32 0.0, %v1686
    %v1688 = vpop.f32.mrf.mxu0
    %v1689 = vpop.f32.mrf.mxu0
    %v1690 = vadd.f32 0.0, %v1689
    %v1691 = vpop.f32.mrf.mxu0
    %1692 = vdwg.mxu0
    %v1693 = vadd.f32 %v1504, %v1687
    %v1694 = vadd.f32 %v1505, %v1690
    %v1695 = vpack.c.bf16 %v1694, %v1693
    %v1696 = vunpack.c.l.bf16 %v1695
    %v1697 = vunpack.c.h.bf16 %v1695
    %s1698 = scalar_lea.vmem %s8, 1
    %v1699 = vld [vmem:[%s1698] sm:$0x1]
    %v1700 = vmul.f32 %v1696, %v1696
    %v1701 = vmul.f32 %v1697, %v1697
    %v1702 = vsel %vm154, %v1700, 0.0
    %1703 = vadd.xlane.f32.xlu0 %v1702
    %v1704 = vpop.xlane.xlu0 %1703
    %v1705 = vsel %vm154, %v1701, 0.0
    %1706 = vadd.xlane.f32.xlu0 %v1705
    %v1707 = vpop.xlane.xlu0 %1706
    %v1708 = vmul.f32 %v1704, %v161
    %v1709 = vmul.f32 %v1707, %v161
    %v1710 = vadd.f32 %v1708, 1e-05
    %v1711 = vadd.f32 %v1709, 1e-05
    %v1712 = vrsqrt.pop %v1710
    %v1713 = vrsqrt.pop %v1711
    %v1714 = vmul.f32 %v1696, %v1712
    %v1715 = vmul.f32 %v1697, %v1713
    %v1716 = vunpack.c.l.bf16 %v1699
    %v1717 = vlaneseq
    %v1718 = vshrl.u32 %v1717, 7
    %v1719 = vsub.s32 0, %v1718
    %v1720 = vrot.slane %v1716, %v1719
    %v1721 = vmul.f32 %v1714, %v1720
    %v1722 = vmul.f32 %v1715, %v1720
    %v1723 = vpack.c.bf16 %v1722, %v1721
    %s1724 = scalar_lea.vmem %s4, 16
    %v1725 = vld [vmem:[%s1724] sm:$0xf]
    %v1726 = vld [vmem:[%s1724 + $0x4] sm:$0xf]
    %v1727 = vld [vmem:[%s1724 + $0x8] sm:$0xf]
    %v1728 = vld [vmem:[%s1724 + $0xc] sm:$0xf]
    %v1733 = vunpack.c.l.b16 %v1725
    %v1734 = vunpack.c.l.b16 %v1726
    %v1735 = vunpack.c.l.b16 %v1727
    %v1736 = vunpack.c.l.b16 %v1728
    %v1737 = vpack.c.b16 %v1734, %v1733
    %v1738 = vpack.c.b16 %v1736, %v1735
    %v1742 = vsel %vm154, %v1723, 0
    %1744 = vmatprep.subr.bf16.mxu0 0
    %1745 = vmatpush1.bf16.msra.mxu0 0
    %1746 = vmatprep.subr.bf16.mxu0 0
    %1747 = vmatpush1.bf16.msra.mxu0 0
    %1748 = vmatprep.subr.bf16.mxu0 0
    %1749 = vmatpush1.bf16.msra.mxu0 0
    %1750 = vmatprep.subr.bf16.mxu0 0
    %1751 = vmatpush1.bf16.msra.mxu0 0
    %1752 = vmatprep.subr.bf16.mxu0 0
    %1753 = vmatpush1.bf16.msra.mxu0 0
    %1754 = vmatprep.subr.bf16.mxu0 0
    %1755 = vmatpush1.bf16.msra.mxu0 0
    %1756 = vmatprep.subr.bf16.mxu0 0
    %1757 = vmatpush1.bf16.msra.mxu0 %v1738
    %1758 = vmatprep.subr.bf16.mxu0 0
    %1759 = vmatpush1.bf16.msra.mxu0 %v1737
    %1760 = vmatprep.subr.bf16.mxu0 0
    %1761 = vmatpush2.bf16.msra.mxu0 0
    %1762 = vmatprep.subr.bf16.mxu0 0
    %1763 = vmatpush2.bf16.msra.mxu0 0
    %1764 = vmatprep.subr.bf16.mxu0 0
    %1765 = vmatpush2.bf16.msra.mxu0 0
    %1766 = vmatprep.subr.bf16.mxu0 0
    %1767 = vmatpush2.bf16.msra.mxu0 0
    %1768 = vmatprep.subr.bf16.mxu0 0
    %1769 = vmatpush2.bf16.msra.mxu0 0
    %1770 = vmatprep.subr.bf16.mxu0 0
    %1771 = vmatpush2.bf16.msra.mxu0 0
    %1772 = vmatprep.subr.bf16.mxu0 0
    %1773 = vmatpush2.bf16.msra.mxu0 0
    %1774 = vmatprep.subr.bf16.mxu0 0
    %1775 = vmatpush2.bf16.msra.mxu0 0
    %1776 = vmatprep.mubr.bf16.mxu0 0
    %1777 = vmatmul.mubr.bf16.gmra.mxu0 %v1742
    %v1778 = vpop.f32.mrf.mxu0
    %v1779 = vadd.f32 0.0, %v1778
    %v1780 = vpop.f32.mrf.mxu0
    %v1781 = vpop.f32.mrf.mxu0
    %v1782 = vadd.f32 0.0, %v1781
    %v1783 = vpop.f32.mrf.mxu0
    %1784 = vdwg.mxu0
    %v1785 = vsub.f32 0.0, %v1779
    %v1786 = vsub.f32 0.0, %v1782
    %1789 = vrot.lane.b32.xlu0 %v1785, 124
    %v1790 = vpop.permute.xlu0 %1789
    %1791 = vrot.lane.b32.xlu0 %v1786, 124
    %v1792 = vpop.permute.xlu0 %1791
    %1797 = vrot.lane.b32.xlu0 %v1779, 4
    %v1798 = vpop.permute.xlu0 %1797
    %1799 = vrot.lane.b32.xlu0 %v1782, 4
    %v1800 = vpop.permute.xlu0 %1799
    %v1803 = vsel %vm256, %v1790, %v1798
    %v1804 = vsel %vm256, %v1792, %v1800
    %v1805 = vmul.f32 %v1779, %v149
    %v1806 = vmul.f32 %v1782, %v149
    %v1807 = vmul.f32 %v1803, %v150
    %v1808 = vmul.f32 %v1804, %v150
    %v1809 = vadd.f32 %v1805, %v1807
    %v1810 = vadd.f32 %v1806, %v1808
    %1811 = vrot.lane.b32.xlu0 %v1785, 92
    %v1812 = vpop.permute.xlu0 %1811
    %1813 = vrot.lane.b32.xlu0 %v1786, 92
    %v1814 = vpop.permute.xlu0 %1813
    %1817 = vrot.lane.b32.xlu0 %v1779, 100
    %v1818 = vpop.permute.xlu0 %1817
    %1819 = vrot.lane.b32.xlu0 %v1782, 100
    %v1820 = vpop.permute.xlu0 %1819
    %v1823 = vsel %vm256, %v1812, %v1818
    %v1824 = vsel %vm256, %v1814, %v1820
    %v1825 = vmul.f32 %v1779, %v281
    %v1826 = vmul.f32 %v1782, %v281
    %v1827 = vmul.f32 %v1823, %v150
    %v1828 = vmul.f32 %v1824, %v150
    %1831 = vrot.lane.b32.xlu0 %v1827, 32
    %v1832 = vpop.permute.xlu0 %1831
    %1833 = vrot.lane.b32.xlu0 %v1828, 32
    %v1834 = vpop.permute.xlu0 %1833
    %v1837 = vadd.f32 %v1825, %v1832
    %v1838 = vadd.f32 %v1826, %v1834
    %v1839 = vpack.c.bf16 %v1809, %v1809
    %v1840 = vpack.c.bf16 %v1810, %v1810
    %v1841 = vpack.c.bf16 %v1837, %v1837
    %v1842 = vpack.c.bf16 %v1838, %v1838
    %1844 = vrot.lane.b32.xlu0 %v1841, 96
    %v1845 = vpop.permute.xlu0 %1844
    %v1847 = vsel %vm304, %v1839, 0
    %v1850 = vsel %vm304, %v1845, 0
    %1852 = vmatprep.subr.bf16.mxu0 0
    %1853 = vmatpush1.bf16.xpose.msra.mxu0 0
    %1854 = vmatprep.subr.bf16.mxu0 0
    %1855 = vmatpush1.bf16.xpose.msra.mxu0 0
    %1856 = vmatprep.subr.bf16.mxu0 0
    %1857 = vmatpush1.bf16.xpose.msra.mxu0 0
    %1858 = vmatprep.subr.bf16.mxu0 0
    %1859 = vmatpush1.bf16.xpose.msra.mxu0 0
    %1860 = vmatprep.subr.bf16.mxu0 0
    %1861 = vmatpush1.bf16.xpose.msra.mxu0 0
    %1862 = vmatprep.subr.bf16.mxu0 0
    %1863 = vmatpush1.bf16.xpose.msra.mxu0 0
    %1864 = vmatprep.subr.bf16.mxu0 0
    %1865 = vmatpush1.bf16.xpose.msra.mxu0 0
    %1866 = vmatprep.subr.bf16.mxu0 0
    %1867 = vmatpush1.bf16.xpose.msra.mxu0 %v1850
    %1868 = vmatprep.subr.bf16.mxu0 0
    %1869 = vmatpush2.bf16.xpose.msra.mxu0 0
    %1870 = vmatprep.subr.bf16.mxu0 0
    %1871 = vmatpush2.bf16.xpose.msra.mxu0 0
    %1872 = vmatprep.subr.bf16.mxu0 0
    %1873 = vmatpush2.bf16.xpose.msra.mxu0 0
    %1874 = vmatprep.subr.bf16.mxu0 0
    %1875 = vmatpush2.bf16.xpose.msra.mxu0 0
    %1876 = vmatprep.subr.bf16.mxu0 0
    %1877 = vmatpush2.bf16.xpose.msra.mxu0 0
    %1878 = vmatprep.subr.bf16.mxu0 0
    %1879 = vmatpush2.bf16.xpose.msra.mxu0 0
    %1880 = vmatprep.subr.bf16.mxu0 0
    %1881 = vmatpush2.bf16.xpose.msra.mxu0 0
    %1882 = vmatprep.subr.bf16.mxu0 0
    %1883 = vmatpush2.bf16.xpose.msra.mxu0 0
    %1884 = vmatprep.mubr.bf16.mxu0 0
    %1885 = vmatmul.mubr.bf16.gmra.mxu0 %v1847
    %v1886 = vpop.f32.mrf.mxu0
    %v1887 = vadd.f32 0.0, %v1886
    %v1888 = vpop.f32.mrf.mxu0
    %v1889 = vpop.f32.mrf.mxu0
    %v1890 = vpop.f32.mrf.mxu0
    %1891 = vdwg.mxu0
    %1893 = vrot.lane.b32.xlu0 %v1842, 96
    %v1894 = vpop.permute.xlu0 %1893
    %v1896 = vsel %vm304, %v1840, 0
    %v1899 = vsel %vm304, %v1894, 0
    %1901 = vmatprep.subr.bf16.mxu0 0
    %1902 = vmatpush1.bf16.xpose.msra.mxu0 0
    %1903 = vmatprep.subr.bf16.mxu0 0
    %1904 = vmatpush1.bf16.xpose.msra.mxu0 0
    %1905 = vmatprep.subr.bf16.mxu0 0
    %1906 = vmatpush1.bf16.xpose.msra.mxu0 0
    %1907 = vmatprep.subr.bf16.mxu0 0
    %1908 = vmatpush1.bf16.xpose.msra.mxu0 0
    %1909 = vmatprep.subr.bf16.mxu0 0
    %1910 = vmatpush1.bf16.xpose.msra.mxu0 0
    %1911 = vmatprep.subr.bf16.mxu0 0
    %1912 = vmatpush1.bf16.xpose.msra.mxu0 0
    %1913 = vmatprep.subr.bf16.mxu0 0
    %1914 = vmatpush1.bf16.xpose.msra.mxu0 0
    %1915 = vmatprep.subr.bf16.mxu0 0
    %1916 = vmatpush1.bf16.xpose.msra.mxu0 %v1899
    %1917 = vmatprep.subr.bf16.mxu0 0
    %1918 = vmatpush2.bf16.xpose.msra.mxu0 0
    %1919 = vmatprep.subr.bf16.mxu0 0
    %1920 = vmatpush2.bf16.xpose.msra.mxu0 0
    %1921 = vmatprep.subr.bf16.mxu0 0
    %1922 = vmatpush2.bf16.xpose.msra.mxu0 0
    %1923 = vmatprep.subr.bf16.mxu0 0
    %1924 = vmatpush2.bf16.xpose.msra.mxu0 0
    %1925 = vmatprep.subr.bf16.mxu0 0
    %1926 = vmatpush2.bf16.xpose.msra.mxu0 0
    %1927 = vmatprep.subr.bf16.mxu0 0
    %1928 = vmatpush2.bf16.xpose.msra.mxu0 0
    %1929 = vmatprep.subr.bf16.mxu0 0
    %1930 = vmatpush2.bf16.xpose.msra.mxu0 0
    %1931 = vmatprep.subr.bf16.mxu0 0
    %1932 = vmatpush2.bf16.xpose.msra.mxu0 0
    %1933 = vmatprep.mubr.bf16.mxu0 0
    %1934 = vmatmul.mubr.bf16.gmra.mxu0 %v1896
    %v1935 = vpop.f32.mrf.mxu0
    %v1936 = vadd.f32 0.0, %v1935
    %v1937 = vpop.f32.mrf.mxu0
    %v1938 = vpop.f32.mrf.mxu0
    %v1939 = vpop.f32.mrf.mxu0
    %1940 = vdwg.mxu0
    %v1941 = vmul.f32 %v1887, 0.35355338
    %v1942 = vmul.f32 %v1936, 0.35355338
    %v1943 = vadd.f32 %v1941, %v147
    %v1944 = vadd.f32 %v1942, %v148
    %v1945 = vsel %vm304, %v1943, -inf
    %1946 = vmax.xlane.f32.xlu0 %v1945
    %v1947 = vpop.xlane.xlu0 %1946
    %v1948 = vsel %vm304, %v1944, -inf
    %1949 = vmax.xlane.f32.xlu0 %v1948
    %v1950 = vpop.xlane.xlu0 %1949
    %v1951 = vsub.f32 %v1943, %v1947
    %v1952 = vsub.f32 %v1944, %v1950
    %v1953 = vmul.f32 %v1951, 1.442695
    %v1954 = vpow.pop %v1953
    %v1955 = vmul.f32 %v1952, 1.442695
    %v1956 = vpow.pop %v1955
    %v1957 = vsel %vm304, %v1954, 0.0
    %1958 = vadd.xlane.f32.xlu0 %v1957
    %v1959 = vpop.xlane.xlu0 %1958
    %v1960 = vsel %vm304, %v1956, 0.0
    %1961 = vadd.xlane.f32.xlu0 %v1960
    %v1962 = vpop.xlane.xlu0 %1961
    %v1963 = vrcp.pop %v1959
    %v1964 = vrcp.pop %v1962
    %v1965 = vmul.f32 %v1954, %v1963
    %v1966 = vmul.f32 %v1956, %v1964
    %v1967 = vpack.c.bf16 %v1965, %v1965
    %v1968 = vpack.c.bf16 %v1966, %v1966
    %v1969 = vpack.c.bf16 %v1779, %v1779
    %v1970 = vpack.c.bf16 %v1782, %v1782
    %1972 = vrot.lane.b32.xlu0 %v1969, 64
    %v1973 = vpop.permute.xlu0 %1972
    %v1975 = vsel %vm304, %v1967, 0
    %v1978 = vsel %vm436, %v1973, 0
    %1980 = vmatprep.subr.bf16.mxu0 0
    %1981 = vmatpush1.bf16.msra.mxu0 0
    %1982 = vmatprep.subr.bf16.mxu0 0
    %1983 = vmatpush1.bf16.msra.mxu0 0
    %1984 = vmatprep.subr.bf16.mxu0 0
    %1985 = vmatpush1.bf16.msra.mxu0 0
    %1986 = vmatprep.subr.bf16.mxu0 0
    %1987 = vmatpush1.bf16.msra.mxu0 0
    %1988 = vmatprep.subr.bf16.mxu0 0
    %1989 = vmatpush1.bf16.msra.mxu0 0
    %1990 = vmatprep.subr.bf16.mxu0 0
    %1991 = vmatpush1.bf16.msra.mxu0 0
    %1992 = vmatprep.subr.bf16.mxu0 0
    %1993 = vmatpush1.bf16.msra.mxu0 0
    %1994 = vmatprep.subr.bf16.mxu0 0
    %1995 = vmatpush1.bf16.msra.mxu0 %v1978
    %1996 = vmatprep.subr.bf16.mxu0 0
    %1997 = vmatpush2.bf16.msra.mxu0 0
    %1998 = vmatprep.subr.bf16.mxu0 0
    %1999 = vmatpush2.bf16.msra.mxu0 0
    %2000 = vmatprep.subr.bf16.mxu0 0
    %2001 = vmatpush2.bf16.msra.mxu0 0
    %2002 = vmatprep.subr.bf16.mxu0 0
    %2003 = vmatpush2.bf16.msra.mxu0 0
    %2004 = vmatprep.subr.bf16.mxu0 0
    %2005 = vmatpush2.bf16.msra.mxu0 0
    %2006 = vmatprep.subr.bf16.mxu0 0
    %2007 = vmatpush2.bf16.msra.mxu0 0
    %2008 = vmatprep.subr.bf16.mxu0 0
    %2009 = vmatpush2.bf16.msra.mxu0 0
    %2010 = vmatprep.subr.bf16.mxu0 0
    %2011 = vmatpush2.bf16.msra.mxu0 0
    %2012 = vmatprep.mubr.bf16.mxu0 0
    %2013 = vmatmul.mubr.bf16.gmra.mxu0 %v1975
    %v2014 = vpop.f32.mrf.mxu0
    %v2015 = vadd.f32 0.0, %v2014
    %v2016 = vpop.f32.mrf.mxu0
    %v2017 = vpop.f32.mrf.mxu0
    %v2018 = vpop.f32.mrf.mxu0
    %2019 = vdwg.mxu0
    %2021 = vrot.lane.b32.xlu0 %v1970, 64
    %v2022 = vpop.permute.xlu0 %2021
    %v2024 = vsel %vm304, %v1968, 0
    %v2027 = vsel %vm436, %v2022, 0
    %2029 = vmatprep.subr.bf16.mxu0 0
    %2030 = vmatpush1.bf16.msra.mxu0 0
    %2031 = vmatprep.subr.bf16.mxu0 0
    %2032 = vmatpush1.bf16.msra.mxu0 0
    %2033 = vmatprep.subr.bf16.mxu0 0
    %2034 = vmatpush1.bf16.msra.mxu0 0
    %2035 = vmatprep.subr.bf16.mxu0 0
    %2036 = vmatpush1.bf16.msra.mxu0 0
    %2037 = vmatprep.subr.bf16.mxu0 0
    %2038 = vmatpush1.bf16.msra.mxu0 0
    %2039 = vmatprep.subr.bf16.mxu0 0
    %2040 = vmatpush1.bf16.msra.mxu0 0
    %2041 = vmatprep.subr.bf16.mxu0 0
    %2042 = vmatpush1.bf16.msra.mxu0 0
    %2043 = vmatprep.subr.bf16.mxu0 0
    %2044 = vmatpush1.bf16.msra.mxu0 %v2027
    %2045 = vmatprep.subr.bf16.mxu0 0
    %2046 = vmatpush2.bf16.msra.mxu0 0
    %2047 = vmatprep.subr.bf16.mxu0 0
    %2048 = vmatpush2.bf16.msra.mxu0 0
    %2049 = vmatprep.subr.bf16.mxu0 0
    %2050 = vmatpush2.bf16.msra.mxu0 0
    %2051 = vmatprep.subr.bf16.mxu0 0
    %2052 = vmatpush2.bf16.msra.mxu0 0
    %2053 = vmatprep.subr.bf16.mxu0 0
    %2054 = vmatpush2.bf16.msra.mxu0 0
    %2055 = vmatprep.subr.bf16.mxu0 0
    %2056 = vmatpush2.bf16.msra.mxu0 0
    %2057 = vmatprep.subr.bf16.mxu0 0
    %2058 = vmatpush2.bf16.msra.mxu0 0
    %2059 = vmatprep.subr.bf16.mxu0 0
    %2060 = vmatpush2.bf16.msra.mxu0 0
    %2061 = vmatprep.mubr.bf16.mxu0 0
    %2062 = vmatmul.mubr.bf16.gmra.mxu0 %v2024
    %v2063 = vpop.f32.mrf.mxu0
    %v2064 = vadd.f32 0.0, %v2063
    %v2065 = vpop.f32.mrf.mxu0
    %v2066 = vpop.f32.mrf.mxu0
    %v2067 = vpop.f32.mrf.mxu0
    %2068 = vdwg.mxu0
    %2069 = vrot.lane.b32.xlu0 %v1785, 116
    %v2070 = vpop.permute.xlu0 %2069
    %2071 = vrot.lane.b32.xlu0 %v1786, 116
    %v2072 = vpop.permute.xlu0 %2071
    %2075 = vrot.lane.b32.xlu0 %v1779, 124
    %v2076 = vpop.permute.xlu0 %2075
    %2077 = vrot.lane.b32.xlu0 %v1782, 124
    %v2078 = vpop.permute.xlu0 %2077
    %v2081 = vsel %vm256, %v2070, %v2076
    %v2082 = vsel %vm256, %v2072, %v2078
    %v2083 = vmul.f32 %v1779, %v544
    %v2084 = vmul.f32 %v1782, %v544
    %v2085 = vmul.f32 %v2081, %v150
    %v2086 = vmul.f32 %v2082, %v150
    %2089 = vrot.lane.b32.xlu0 %v2085, 8
    %v2090 = vpop.permute.xlu0 %2089
    %2091 = vrot.lane.b32.xlu0 %v2086, 8
    %v2092 = vpop.permute.xlu0 %2091
    %v2095 = vadd.f32 %v2083, %v2090
    %v2096 = vadd.f32 %v2084, %v2092
    %2097 = vrot.lane.b32.xlu0 %v1785, 84
    %v2098 = vpop.permute.xlu0 %2097
    %2099 = vrot.lane.b32.xlu0 %v1786, 84
    %v2100 = vpop.permute.xlu0 %2099
    %2103 = vrot.lane.b32.xlu0 %v1779, 92
    %v2104 = vpop.permute.xlu0 %2103
    %2105 = vrot.lane.b32.xlu0 %v1782, 92
    %v2106 = vpop.permute.xlu0 %2105
    %v2109 = vsel %vm256, %v2098, %v2104
    %v2110 = vsel %vm256, %v2100, %v2106
    %v2111 = vmul.f32 %v1779, %v575
    %v2112 = vmul.f32 %v1782, %v575
    %v2113 = vmul.f32 %v2109, %v150
    %v2114 = vmul.f32 %v2110, %v150
    %2117 = vrot.lane.b32.xlu0 %v2113, 40
    %v2118 = vpop.permute.xlu0 %2117
    %2119 = vrot.lane.b32.xlu0 %v2114, 40
    %v2120 = vpop.permute.xlu0 %2119
    %v2123 = vadd.f32 %v2111, %v2118
    %v2124 = vadd.f32 %v2112, %v2120
    %v2125 = vpack.c.bf16 %v2095, %v2095
    %v2126 = vpack.c.bf16 %v2096, %v2096
    %v2127 = vpack.c.bf16 %v2123, %v2123
    %v2128 = vpack.c.bf16 %v2124, %v2124
    %2130 = vrot.lane.b32.xlu0 %v2125, 120
    %v2131 = vpop.permute.xlu0 %2130
    %2133 = vrot.lane.b32.xlu0 %v2127, 88
    %v2134 = vpop.permute.xlu0 %2133
    %v2136 = vsel %vm304, %v2131, 0
    %v2139 = vsel %vm304, %v2134, 0
    %2141 = vmatprep.subr.bf16.mxu0 0
    %2142 = vmatpush1.bf16.xpose.msra.mxu0 0
    %2143 = vmatprep.subr.bf16.mxu0 0
    %2144 = vmatpush1.bf16.xpose.msra.mxu0 0
    %2145 = vmatprep.subr.bf16.mxu0 0
    %2146 = vmatpush1.bf16.xpose.msra.mxu0 0
    %2147 = vmatprep.subr.bf16.mxu0 0
    %2148 = vmatpush1.bf16.xpose.msra.mxu0 0
    %2149 = vmatprep.subr.bf16.mxu0 0
    %2150 = vmatpush1.bf16.xpose.msra.mxu0 0
    %2151 = vmatprep.subr.bf16.mxu0 0
    %2152 = vmatpush1.bf16.xpose.msra.mxu0 0
    %2153 = vmatprep.subr.bf16.mxu0 0
    %2154 = vmatpush1.bf16.xpose.msra.mxu0 0
    %2155 = vmatprep.subr.bf16.mxu0 0
    %2156 = vmatpush1.bf16.xpose.msra.mxu0 %v2139
    %2157 = vmatprep.subr.bf16.mxu0 0
    %2158 = vmatpush2.bf16.xpose.msra.mxu0 0
    %2159 = vmatprep.subr.bf16.mxu0 0
    %2160 = vmatpush2.bf16.xpose.msra.mxu0 0
    %2161 = vmatprep.subr.bf16.mxu0 0
    %2162 = vmatpush2.bf16.xpose.msra.mxu0 0
    %2163 = vmatprep.subr.bf16.mxu0 0
    %2164 = vmatpush2.bf16.xpose.msra.mxu0 0
    %2165 = vmatprep.subr.bf16.mxu0 0
    %2166 = vmatpush2.bf16.xpose.msra.mxu0 0
    %2167 = vmatprep.subr.bf16.mxu0 0
    %2168 = vmatpush2.bf16.xpose.msra.mxu0 0
    %2169 = vmatprep.subr.bf16.mxu0 0
    %2170 = vmatpush2.bf16.xpose.msra.mxu0 0
    %2171 = vmatprep.subr.bf16.mxu0 0
    %2172 = vmatpush2.bf16.xpose.msra.mxu0 0
    %2173 = vmatprep.mubr.bf16.mxu0 0
    %2174 = vmatmul.mubr.bf16.gmra.mxu0 %v2136
    %v2175 = vpop.f32.mrf.mxu0
    %v2176 = vadd.f32 0.0, %v2175
    %v2177 = vpop.f32.mrf.mxu0
    %v2178 = vpop.f32.mrf.mxu0
    %v2179 = vpop.f32.mrf.mxu0
    %2180 = vdwg.mxu0
    %2182 = vrot.lane.b32.xlu0 %v2126, 120
    %v2183 = vpop.permute.xlu0 %2182
    %2185 = vrot.lane.b32.xlu0 %v2128, 88
    %v2186 = vpop.permute.xlu0 %2185
    %v2188 = vsel %vm304, %v2183, 0
    %v2191 = vsel %vm304, %v2186, 0
    %2193 = vmatprep.subr.bf16.mxu0 0
    %2194 = vmatpush1.bf16.xpose.msra.mxu0 0
    %2195 = vmatprep.subr.bf16.mxu0 0
    %2196 = vmatpush1.bf16.xpose.msra.mxu0 0
    %2197 = vmatprep.subr.bf16.mxu0 0
    %2198 = vmatpush1.bf16.xpose.msra.mxu0 0
    %2199 = vmatprep.subr.bf16.mxu0 0
    %2200 = vmatpush1.bf16.xpose.msra.mxu0 0
    %2201 = vmatprep.subr.bf16.mxu0 0
    %2202 = vmatpush1.bf16.xpose.msra.mxu0 0
    %2203 = vmatprep.subr.bf16.mxu0 0
    %2204 = vmatpush1.bf16.xpose.msra.mxu0 0
    %2205 = vmatprep.subr.bf16.mxu0 0
    %2206 = vmatpush1.bf16.xpose.msra.mxu0 0
    %2207 = vmatprep.subr.bf16.mxu0 0
    %2208 = vmatpush1.bf16.xpose.msra.mxu0 %v2191
    %2209 = vmatprep.subr.bf16.mxu0 0
    %2210 = vmatpush2.bf16.xpose.msra.mxu0 0
    %2211 = vmatprep.subr.bf16.mxu0 0
    %2212 = vmatpush2.bf16.xpose.msra.mxu0 0
    %2213 = vmatprep.subr.bf16.mxu0 0
    %2214 = vmatpush2.bf16.xpose.msra.mxu0 0
    %2215 = vmatprep.subr.bf16.mxu0 0
    %2216 = vmatpush2.bf16.xpose.msra.mxu0 0
    %2217 = vmatprep.subr.bf16.mxu0 0
    %2218 = vmatpush2.bf16.xpose.msra.mxu0 0
    %2219 = vmatprep.subr.bf16.mxu0 0
    %2220 = vmatpush2.bf16.xpose.msra.mxu0 0
    %2221 = vmatprep.subr.bf16.mxu0 0
    %2222 = vmatpush2.bf16.xpose.msra.mxu0 0
    %2223 = vmatprep.subr.bf16.mxu0 0
    %2224 = vmatpush2.bf16.xpose.msra.mxu0 0
    %2225 = vmatprep.mubr.bf16.mxu0 0
    %2226 = vmatmul.mubr.bf16.gmra.mxu0 %v2188
    %v2227 = vpop.f32.mrf.mxu0
    %v2228 = vadd.f32 0.0, %v2227
    %v2229 = vpop.f32.mrf.mxu0
    %v2230 = vpop.f32.mrf.mxu0
    %v2231 = vpop.f32.mrf.mxu0
    %2232 = vdwg.mxu0
    %v2233 = vmul.f32 %v2176, 0.35355338
    %v2234 = vmul.f32 %v2228, 0.35355338
    %v2235 = vadd.f32 %v2233, %v147
    %v2236 = vadd.f32 %v2234, %v148
    %v2237 = vsel %vm304, %v2235, -inf
    %2238 = vmax.xlane.f32.xlu0 %v2237
    %v2239 = vpop.xlane.xlu0 %2238
    %v2240 = vsel %vm304, %v2236, -inf
    %2241 = vmax.xlane.f32.xlu0 %v2240
    %v2242 = vpop.xlane.xlu0 %2241
    %v2243 = vsub.f32 %v2235, %v2239
    %v2244 = vsub.f32 %v2236, %v2242
    %v2245 = vmul.f32 %v2243, 1.442695
    %v2246 = vpow.pop %v2245
    %v2247 = vmul.f32 %v2244, 1.442695
    %v2248 = vpow.pop %v2247
    %v2249 = vsel %vm304, %v2246, 0.0
    %2250 = vadd.xlane.f32.xlu0 %v2249
    %v2251 = vpop.xlane.xlu0 %2250
    %v2252 = vsel %vm304, %v2248, 0.0
    %2253 = vadd.xlane.f32.xlu0 %v2252
    %v2254 = vpop.xlane.xlu0 %2253
    %v2255 = vrcp.pop %v2251
    %v2256 = vrcp.pop %v2254
    %v2257 = vmul.f32 %v2246, %v2255
    %v2258 = vmul.f32 %v2248, %v2256
    %v2259 = vpack.c.bf16 %v2257, %v2257
    %v2260 = vpack.c.bf16 %v2258, %v2258
    %2261 = vrot.lane.b32.xlu0 %v1969, 56
    %v2262 = vpop.permute.xlu0 %2261
    %v2264 = vsel %vm304, %v2259, 0
    %v2267 = vsel %vm436, %v2262, 0
    %2269 = vmatprep.subr.bf16.mxu0 0
    %2270 = vmatpush1.bf16.msra.mxu0 0
    %2271 = vmatprep.subr.bf16.mxu0 0
    %2272 = vmatpush1.bf16.msra.mxu0 0
    %2273 = vmatprep.subr.bf16.mxu0 0
    %2274 = vmatpush1.bf16.msra.mxu0 0
    %2275 = vmatprep.subr.bf16.mxu0 0
    %2276 = vmatpush1.bf16.msra.mxu0 0
    %2277 = vmatprep.subr.bf16.mxu0 0
    %2278 = vmatpush1.bf16.msra.mxu0 0
    %2279 = vmatprep.subr.bf16.mxu0 0
    %2280 = vmatpush1.bf16.msra.mxu0 0
    %2281 = vmatprep.subr.bf16.mxu0 0
    %2282 = vmatpush1.bf16.msra.mxu0 0
    %2283 = vmatprep.subr.bf16.mxu0 0
    %2284 = vmatpush1.bf16.msra.mxu0 %v2267
    %2285 = vmatprep.subr.bf16.mxu0 0
    %2286 = vmatpush2.bf16.msra.mxu0 0
    %2287 = vmatprep.subr.bf16.mxu0 0
    %2288 = vmatpush2.bf16.msra.mxu0 0
    %2289 = vmatprep.subr.bf16.mxu0 0
    %2290 = vmatpush2.bf16.msra.mxu0 0
    %2291 = vmatprep.subr.bf16.mxu0 0
    %2292 = vmatpush2.bf16.msra.mxu0 0
    %2293 = vmatprep.subr.bf16.mxu0 0
    %2294 = vmatpush2.bf16.msra.mxu0 0
    %2295 = vmatprep.subr.bf16.mxu0 0
    %2296 = vmatpush2.bf16.msra.mxu0 0
    %2297 = vmatprep.subr.bf16.mxu0 0
    %2298 = vmatpush2.bf16.msra.mxu0 0
    %2299 = vmatprep.subr.bf16.mxu0 0
    %2300 = vmatpush2.bf16.msra.mxu0 0
    %2301 = vmatprep.mubr.bf16.mxu0 0
    %2302 = vmatmul.mubr.bf16.gmra.mxu0 %v2264
    %v2303 = vpop.f32.mrf.mxu0
    %v2304 = vadd.f32 0.0, %v2303
    %v2305 = vpop.f32.mrf.mxu0
    %v2306 = vpop.f32.mrf.mxu0
    %v2307 = vpop.f32.mrf.mxu0
    %2308 = vdwg.mxu0
    %2309 = vrot.lane.b32.xlu0 %v1970, 56
    %v2310 = vpop.permute.xlu0 %2309
    %v2312 = vsel %vm304, %v2260, 0
    %v2315 = vsel %vm436, %v2310, 0
    %2317 = vmatprep.subr.bf16.mxu0 0
    %2318 = vmatpush1.bf16.msra.mxu0 0
    %2319 = vmatprep.subr.bf16.mxu0 0
    %2320 = vmatpush1.bf16.msra.mxu0 0
    %2321 = vmatprep.subr.bf16.mxu0 0
    %2322 = vmatpush1.bf16.msra.mxu0 0
    %2323 = vmatprep.subr.bf16.mxu0 0
    %2324 = vmatpush1.bf16.msra.mxu0 0
    %2325 = vmatprep.subr.bf16.mxu0 0
    %2326 = vmatpush1.bf16.msra.mxu0 0
    %2327 = vmatprep.subr.bf16.mxu0 0
    %2328 = vmatpush1.bf16.msra.mxu0 0
    %2329 = vmatprep.subr.bf16.mxu0 0
    %2330 = vmatpush1.bf16.msra.mxu0 0
    %2331 = vmatprep.subr.bf16.mxu0 0
    %2332 = vmatpush1.bf16.msra.mxu0 %v2315
    %2333 = vmatprep.subr.bf16.mxu0 0
    %2334 = vmatpush2.bf16.msra.mxu0 0
    %2335 = vmatprep.subr.bf16.mxu0 0
    %2336 = vmatpush2.bf16.msra.mxu0 0
    %2337 = vmatprep.subr.bf16.mxu0 0
    %2338 = vmatpush2.bf16.msra.mxu0 0
    %2339 = vmatprep.subr.bf16.mxu0 0
    %2340 = vmatpush2.bf16.msra.mxu0 0
    %2341 = vmatprep.subr.bf16.mxu0 0
    %2342 = vmatpush2.bf16.msra.mxu0 0
    %2343 = vmatprep.subr.bf16.mxu0 0
    %2344 = vmatpush2.bf16.msra.mxu0 0
    %2345 = vmatprep.subr.bf16.mxu0 0
    %2346 = vmatpush2.bf16.msra.mxu0 0
    %2347 = vmatprep.subr.bf16.mxu0 0
    %2348 = vmatpush2.bf16.msra.mxu0 0
    %2349 = vmatprep.mubr.bf16.mxu0 0
    %2350 = vmatmul.mubr.bf16.gmra.mxu0 %v2312
    %v2351 = vpop.f32.mrf.mxu0
    %v2352 = vadd.f32 0.0, %v2351
    %v2353 = vpop.f32.mrf.mxu0
    %v2354 = vpop.f32.mrf.mxu0
    %v2355 = vpop.f32.mrf.mxu0
    %2356 = vdwg.mxu0
    %2357 = vrot.lane.b32.xlu0 %v1785, 108
    %v2358 = vpop.permute.xlu0 %2357
    %2359 = vrot.lane.b32.xlu0 %v1786, 108
    %v2360 = vpop.permute.xlu0 %2359
    %2363 = vrot.lane.b32.xlu0 %v1779, 116
    %v2364 = vpop.permute.xlu0 %2363
    %2365 = vrot.lane.b32.xlu0 %v1782, 116
    %v2366 = vpop.permute.xlu0 %2365
    %v2369 = vsel %vm256, %v2358, %v2364
    %v2370 = vsel %vm256, %v2360, %v2366
    %v2371 = vmul.f32 %v1779, %v838
    %v2372 = vmul.f32 %v1782, %v838
    %v2373 = vmul.f32 %v2369, %v150
    %v2374 = vmul.f32 %v2370, %v150
    %2377 = vrot.lane.b32.xlu0 %v2373, 16
    %v2378 = vpop.permute.xlu0 %2377
    %2379 = vrot.lane.b32.xlu0 %v2374, 16
    %v2380 = vpop.permute.xlu0 %2379
    %v2383 = vadd.f32 %v2371, %v2378
    %v2384 = vadd.f32 %v2372, %v2380
    %2385 = vrot.lane.b32.xlu0 %v1785, 76
    %v2386 = vpop.permute.xlu0 %2385
    %2387 = vrot.lane.b32.xlu0 %v1786, 76
    %v2388 = vpop.permute.xlu0 %2387
    %2391 = vrot.lane.b32.xlu0 %v1779, 84
    %v2392 = vpop.permute.xlu0 %2391
    %2393 = vrot.lane.b32.xlu0 %v1782, 84
    %v2394 = vpop.permute.xlu0 %2393
    %v2397 = vsel %vm256, %v2386, %v2392
    %v2398 = vsel %vm256, %v2388, %v2394
    %v2399 = vmul.f32 %v1779, %v869
    %v2400 = vmul.f32 %v1782, %v869
    %v2401 = vmul.f32 %v2397, %v150
    %v2402 = vmul.f32 %v2398, %v150
    %2405 = vrot.lane.b32.xlu0 %v2401, 48
    %v2406 = vpop.permute.xlu0 %2405
    %2407 = vrot.lane.b32.xlu0 %v2402, 48
    %v2408 = vpop.permute.xlu0 %2407
    %v2411 = vadd.f32 %v2399, %v2406
    %v2412 = vadd.f32 %v2400, %v2408
    %v2413 = vpack.c.bf16 %v2383, %v2383
    %v2414 = vpack.c.bf16 %v2384, %v2384
    %v2415 = vpack.c.bf16 %v2411, %v2411
    %v2416 = vpack.c.bf16 %v2412, %v2412
    %2418 = vrot.lane.b32.xlu0 %v2413, 112
    %v2419 = vpop.permute.xlu0 %2418
    %2421 = vrot.lane.b32.xlu0 %v2415, 80
    %v2422 = vpop.permute.xlu0 %2421
    %v2424 = vsel %vm304, %v2419, 0
    %v2427 = vsel %vm304, %v2422, 0
    %2429 = vmatprep.subr.bf16.mxu0 0
    %2430 = vmatpush1.bf16.xpose.msra.mxu0 0
    %2431 = vmatprep.subr.bf16.mxu0 0
    %2432 = vmatpush1.bf16.xpose.msra.mxu0 0
    %2433 = vmatprep.subr.bf16.mxu0 0
    %2434 = vmatpush1.bf16.xpose.msra.mxu0 0
    %2435 = vmatprep.subr.bf16.mxu0 0
    %2436 = vmatpush1.bf16.xpose.msra.mxu0 0
    %2437 = vmatprep.subr.bf16.mxu0 0
    %2438 = vmatpush1.bf16.xpose.msra.mxu0 0
    %2439 = vmatprep.subr.bf16.mxu0 0
    %2440 = vmatpush1.bf16.xpose.msra.mxu0 0
    %2441 = vmatprep.subr.bf16.mxu0 0
    %2442 = vmatpush1.bf16.xpose.msra.mxu0 0
    %2443 = vmatprep.subr.bf16.mxu0 0
    %2444 = vmatpush1.bf16.xpose.msra.mxu0 %v2427
    %2445 = vmatprep.subr.bf16.mxu0 0
    %2446 = vmatpush2.bf16.xpose.msra.mxu0 0
    %2447 = vmatprep.subr.bf16.mxu0 0
    %2448 = vmatpush2.bf16.xpose.msra.mxu0 0
    %2449 = vmatprep.subr.bf16.mxu0 0
    %2450 = vmatpush2.bf16.xpose.msra.mxu0 0
    %2451 = vmatprep.subr.bf16.mxu0 0
    %2452 = vmatpush2.bf16.xpose.msra.mxu0 0
    %2453 = vmatprep.subr.bf16.mxu0 0
    %2454 = vmatpush2.bf16.xpose.msra.mxu0 0
    %2455 = vmatprep.subr.bf16.mxu0 0
    %2456 = vmatpush2.bf16.xpose.msra.mxu0 0
    %2457 = vmatprep.subr.bf16.mxu0 0
    %2458 = vmatpush2.bf16.xpose.msra.mxu0 0
    %2459 = vmatprep.subr.bf16.mxu0 0
    %2460 = vmatpush2.bf16.xpose.msra.mxu0 0
    %2461 = vmatprep.mubr.bf16.mxu0 0
    %2462 = vmatmul.mubr.bf16.gmra.mxu0 %v2424
    %v2463 = vpop.f32.mrf.mxu0
    %v2464 = vadd.f32 0.0, %v2463
    %v2465 = vpop.f32.mrf.mxu0
    %v2466 = vpop.f32.mrf.mxu0
    %v2467 = vpop.f32.mrf.mxu0
    %2468 = vdwg.mxu0
    %2470 = vrot.lane.b32.xlu0 %v2414, 112
    %v2471 = vpop.permute.xlu0 %2470
    %2473 = vrot.lane.b32.xlu0 %v2416, 80
    %v2474 = vpop.permute.xlu0 %2473
    %v2476 = vsel %vm304, %v2471, 0
    %v2479 = vsel %vm304, %v2474, 0
    %2481 = vmatprep.subr.bf16.mxu0 0
    %2482 = vmatpush1.bf16.xpose.msra.mxu0 0
    %2483 = vmatprep.subr.bf16.mxu0 0
    %2484 = vmatpush1.bf16.xpose.msra.mxu0 0
    %2485 = vmatprep.subr.bf16.mxu0 0
    %2486 = vmatpush1.bf16.xpose.msra.mxu0 0
    %2487 = vmatprep.subr.bf16.mxu0 0
    %2488 = vmatpush1.bf16.xpose.msra.mxu0 0
    %2489 = vmatprep.subr.bf16.mxu0 0
    %2490 = vmatpush1.bf16.xpose.msra.mxu0 0
    %2491 = vmatprep.subr.bf16.mxu0 0
    %2492 = vmatpush1.bf16.xpose.msra.mxu0 0
    %2493 = vmatprep.subr.bf16.mxu0 0
    %2494 = vmatpush1.bf16.xpose.msra.mxu0 0
    %2495 = vmatprep.subr.bf16.mxu0 0
    %2496 = vmatpush1.bf16.xpose.msra.mxu0 %v2479
    %2497 = vmatprep.subr.bf16.mxu0 0
    %2498 = vmatpush2.bf16.xpose.msra.mxu0 0
    %2499 = vmatprep.subr.bf16.mxu0 0
    %2500 = vmatpush2.bf16.xpose.msra.mxu0 0
    %2501 = vmatprep.subr.bf16.mxu0 0
    %2502 = vmatpush2.bf16.xpose.msra.mxu0 0
    %2503 = vmatprep.subr.bf16.mxu0 0
    %2504 = vmatpush2.bf16.xpose.msra.mxu0 0
    %2505 = vmatprep.subr.bf16.mxu0 0
    %2506 = vmatpush2.bf16.xpose.msra.mxu0 0
    %2507 = vmatprep.subr.bf16.mxu0 0
    %2508 = vmatpush2.bf16.xpose.msra.mxu0 0
    %2509 = vmatprep.subr.bf16.mxu0 0
    %2510 = vmatpush2.bf16.xpose.msra.mxu0 0
    %2511 = vmatprep.subr.bf16.mxu0 0
    %2512 = vmatpush2.bf16.xpose.msra.mxu0 0
    %2513 = vmatprep.mubr.bf16.mxu0 0
    %2514 = vmatmul.mubr.bf16.gmra.mxu0 %v2476
    %v2515 = vpop.f32.mrf.mxu0
    %v2516 = vadd.f32 0.0, %v2515
    %v2517 = vpop.f32.mrf.mxu0
    %v2518 = vpop.f32.mrf.mxu0
    %v2519 = vpop.f32.mrf.mxu0
    %2520 = vdwg.mxu0
    %v2521 = vmul.f32 %v2464, 0.35355338
    %v2522 = vmul.f32 %v2516, 0.35355338
    %v2523 = vadd.f32 %v2521, %v147
    %v2524 = vadd.f32 %v2522, %v148
    %v2525 = vsel %vm304, %v2523, -inf
    %2526 = vmax.xlane.f32.xlu0 %v2525
    %v2527 = vpop.xlane.xlu0 %2526
    %v2528 = vsel %vm304, %v2524, -inf
    %2529 = vmax.xlane.f32.xlu0 %v2528
    %v2530 = vpop.xlane.xlu0 %2529
    %v2531 = vsub.f32 %v2523, %v2527
    %v2532 = vsub.f32 %v2524, %v2530
    %v2533 = vmul.f32 %v2531, 1.442695
    %v2534 = vpow.pop %v2533
    %v2535 = vmul.f32 %v2532, 1.442695
    %v2536 = vpow.pop %v2535
    %v2537 = vsel %vm304, %v2534, 0.0
    %2538 = vadd.xlane.f32.xlu0 %v2537
    %v2539 = vpop.xlane.xlu0 %2538
    %v2540 = vsel %vm304, %v2536, 0.0
    %2541 = vadd.xlane.f32.xlu0 %v2540
    %v2542 = vpop.xlane.xlu0 %2541
    %v2543 = vrcp.pop %v2539
    %v2544 = vrcp.pop %v2542
    %v2545 = vmul.f32 %v2534, %v2543
    %v2546 = vmul.f32 %v2536, %v2544
    %v2547 = vpack.c.bf16 %v2545, %v2545
    %v2548 = vpack.c.bf16 %v2546, %v2546
    %2549 = vrot.lane.b32.xlu0 %v1969, 48
    %v2550 = vpop.permute.xlu0 %2549
    %v2552 = vsel %vm304, %v2547, 0
    %v2555 = vsel %vm436, %v2550, 0
    %2557 = vmatprep.subr.bf16.mxu0 0
    %2558 = vmatpush1.bf16.msra.mxu0 0
    %2559 = vmatprep.subr.bf16.mxu0 0
    %2560 = vmatpush1.bf16.msra.mxu0 0
    %2561 = vmatprep.subr.bf16.mxu0 0
    %2562 = vmatpush1.bf16.msra.mxu0 0
    %2563 = vmatprep.subr.bf16.mxu0 0
    %2564 = vmatpush1.bf16.msra.mxu0 0
    %2565 = vmatprep.subr.bf16.mxu0 0
    %2566 = vmatpush1.bf16.msra.mxu0 0
    %2567 = vmatprep.subr.bf16.mxu0 0
    %2568 = vmatpush1.bf16.msra.mxu0 0
    %2569 = vmatprep.subr.bf16.mxu0 0
    %2570 = vmatpush1.bf16.msra.mxu0 0
    %2571 = vmatprep.subr.bf16.mxu0 0
    %2572 = vmatpush1.bf16.msra.mxu0 %v2555
    %2573 = vmatprep.subr.bf16.mxu0 0
    %2574 = vmatpush2.bf16.msra.mxu0 0
    %2575 = vmatprep.subr.bf16.mxu0 0
    %2576 = vmatpush2.bf16.msra.mxu0 0
    %2577 = vmatprep.subr.bf16.mxu0 0
    %2578 = vmatpush2.bf16.msra.mxu0 0
    %2579 = vmatprep.subr.bf16.mxu0 0
    %2580 = vmatpush2.bf16.msra.mxu0 0
    %2581 = vmatprep.subr.bf16.mxu0 0
    %2582 = vmatpush2.bf16.msra.mxu0 0
    %2583 = vmatprep.subr.bf16.mxu0 0
    %2584 = vmatpush2.bf16.msra.mxu0 0
    %2585 = vmatprep.subr.bf16.mxu0 0
    %2586 = vmatpush2.bf16.msra.mxu0 0
    %2587 = vmatprep.subr.bf16.mxu0 0
    %2588 = vmatpush2.bf16.msra.mxu0 0
    %2589 = vmatprep.mubr.bf16.mxu0 0
    %2590 = vmatmul.mubr.bf16.gmra.mxu0 %v2552
    %v2591 = vpop.f32.mrf.mxu0
    %v2592 = vadd.f32 0.0, %v2591
    %v2593 = vpop.f32.mrf.mxu0
    %v2594 = vpop.f32.mrf.mxu0
    %v2595 = vpop.f32.mrf.mxu0
    %2596 = vdwg.mxu0
    %2597 = vrot.lane.b32.xlu0 %v1970, 48
    %v2598 = vpop.permute.xlu0 %2597
    %v2600 = vsel %vm304, %v2548, 0
    %v2603 = vsel %vm436, %v2598, 0
    %2605 = vmatprep.subr.bf16.mxu0 0
    %2606 = vmatpush1.bf16.msra.mxu0 0
    %2607 = vmatprep.subr.bf16.mxu0 0
    %2608 = vmatpush1.bf16.msra.mxu0 0
    %2609 = vmatprep.subr.bf16.mxu0 0
    %2610 = vmatpush1.bf16.msra.mxu0 0
    %2611 = vmatprep.subr.bf16.mxu0 0
    %2612 = vmatpush1.bf16.msra.mxu0 0
    %2613 = vmatprep.subr.bf16.mxu0 0
    %2614 = vmatpush1.bf16.msra.mxu0 0
    %2615 = vmatprep.subr.bf16.mxu0 0
    %2616 = vmatpush1.bf16.msra.mxu0 0
    %2617 = vmatprep.subr.bf16.mxu0 0
    %2618 = vmatpush1.bf16.msra.mxu0 0
    %2619 = vmatprep.subr.bf16.mxu0 0
    %2620 = vmatpush1.bf16.msra.mxu0 %v2603
    %2621 = vmatprep.subr.bf16.mxu0 0
    %2622 = vmatpush2.bf16.msra.mxu0 0
    %2623 = vmatprep.subr.bf16.mxu0 0
    %2624 = vmatpush2.bf16.msra.mxu0 0
    %2625 = vmatprep.subr.bf16.mxu0 0
    %2626 = vmatpush2.bf16.msra.mxu0 0
    %2627 = vmatprep.subr.bf16.mxu0 0
    %2628 = vmatpush2.bf16.msra.mxu0 0
    %2629 = vmatprep.subr.bf16.mxu0 0
    %2630 = vmatpush2.bf16.msra.mxu0 0
    %2631 = vmatprep.subr.bf16.mxu0 0
    %2632 = vmatpush2.bf16.msra.mxu0 0
    %2633 = vmatprep.subr.bf16.mxu0 0
    %2634 = vmatpush2.bf16.msra.mxu0 0
    %2635 = vmatprep.subr.bf16.mxu0 0
    %2636 = vmatpush2.bf16.msra.mxu0 0
    %2637 = vmatprep.mubr.bf16.mxu0 0
    %2638 = vmatmul.mubr.bf16.gmra.mxu0 %v2600
    %v2639 = vpop.f32.mrf.mxu0
    %v2640 = vadd.f32 0.0, %v2639
    %v2641 = vpop.f32.mrf.mxu0
    %v2642 = vpop.f32.mrf.mxu0
    %v2643 = vpop.f32.mrf.mxu0
    %2644 = vdwg.mxu0
    %2645 = vrot.lane.b32.xlu0 %v1785, 100
    %v2646 = vpop.permute.xlu0 %2645
    %2647 = vrot.lane.b32.xlu0 %v1786, 100
    %v2648 = vpop.permute.xlu0 %2647
    %2651 = vrot.lane.b32.xlu0 %v1779, 108
    %v2652 = vpop.permute.xlu0 %2651
    %2653 = vrot.lane.b32.xlu0 %v1782, 108
    %v2654 = vpop.permute.xlu0 %2653
    %v2657 = vsel %vm256, %v2646, %v2652
    %v2658 = vsel %vm256, %v2648, %v2654
    %v2659 = vmul.f32 %v1779, %v1132
    %v2660 = vmul.f32 %v1782, %v1132
    %v2661 = vmul.f32 %v2657, %v150
    %v2662 = vmul.f32 %v2658, %v150
    %2665 = vrot.lane.b32.xlu0 %v2661, 24
    %v2666 = vpop.permute.xlu0 %2665
    %2667 = vrot.lane.b32.xlu0 %v2662, 24
    %v2668 = vpop.permute.xlu0 %2667
    %v2671 = vadd.f32 %v2659, %v2666
    %v2672 = vadd.f32 %v2660, %v2668
    %2673 = vrot.lane.b32.xlu0 %v1785, 68
    %v2674 = vpop.permute.xlu0 %2673
    %2675 = vrot.lane.b32.xlu0 %v1786, 68
    %v2676 = vpop.permute.xlu0 %2675
    %2679 = vrot.lane.b32.xlu0 %v1779, 76
    %v2680 = vpop.permute.xlu0 %2679
    %2681 = vrot.lane.b32.xlu0 %v1782, 76
    %v2682 = vpop.permute.xlu0 %2681
    %v2685 = vsel %vm256, %v2674, %v2680
    %v2686 = vsel %vm256, %v2676, %v2682
    %v2687 = vmul.f32 %v1779, %v1163
    %v2688 = vmul.f32 %v1782, %v1163
    %v2689 = vmul.f32 %v2685, %v150
    %v2690 = vmul.f32 %v2686, %v150
    %2693 = vrot.lane.b32.xlu0 %v2689, 56
    %v2694 = vpop.permute.xlu0 %2693
    %2695 = vrot.lane.b32.xlu0 %v2690, 56
    %v2696 = vpop.permute.xlu0 %2695
    %v2699 = vadd.f32 %v2687, %v2694
    %v2700 = vadd.f32 %v2688, %v2696
    %v2701 = vpack.c.bf16 %v2671, %v2671
    %v2702 = vpack.c.bf16 %v2672, %v2672
    %v2703 = vpack.c.bf16 %v2699, %v2699
    %v2704 = vpack.c.bf16 %v2700, %v2700
    %2706 = vrot.lane.b32.xlu0 %v2701, 104
    %v2707 = vpop.permute.xlu0 %2706
    %2709 = vrot.lane.b32.xlu0 %v2703, 72
    %v2710 = vpop.permute.xlu0 %2709
    %v2712 = vsel %vm304, %v2707, 0
    %v2715 = vsel %vm304, %v2710, 0
    %2717 = vmatprep.subr.bf16.mxu0 0
    %2718 = vmatpush1.bf16.xpose.msra.mxu0 0
    %2719 = vmatprep.subr.bf16.mxu0 0
    %2720 = vmatpush1.bf16.xpose.msra.mxu0 0
    %2721 = vmatprep.subr.bf16.mxu0 0
    %2722 = vmatpush1.bf16.xpose.msra.mxu0 0
    %2723 = vmatprep.subr.bf16.mxu0 0
    %2724 = vmatpush1.bf16.xpose.msra.mxu0 0
    %2725 = vmatprep.subr.bf16.mxu0 0
    %2726 = vmatpush1.bf16.xpose.msra.mxu0 0
    %2727 = vmatprep.subr.bf16.mxu0 0
    %2728 = vmatpush1.bf16.xpose.msra.mxu0 0
    %2729 = vmatprep.subr.bf16.mxu0 0
    %2730 = vmatpush1.bf16.xpose.msra.mxu0 0
    %2731 = vmatprep.subr.bf16.mxu0 0
    %2732 = vmatpush1.bf16.xpose.msra.mxu0 %v2715
    %2733 = vmatprep.subr.bf16.mxu0 0
    %2734 = vmatpush2.bf16.xpose.msra.mxu0 0
    %2735 = vmatprep.subr.bf16.mxu0 0
    %2736 = vmatpush2.bf16.xpose.msra.mxu0 0
    %2737 = vmatprep.subr.bf16.mxu0 0
    %2738 = vmatpush2.bf16.xpose.msra.mxu0 0
    %2739 = vmatprep.subr.bf16.mxu0 0
    %2740 = vmatpush2.bf16.xpose.msra.mxu0 0
    %2741 = vmatprep.subr.bf16.mxu0 0
    %2742 = vmatpush2.bf16.xpose.msra.mxu0 0
    %2743 = vmatprep.subr.bf16.mxu0 0
    %2744 = vmatpush2.bf16.xpose.msra.mxu0 0
    %2745 = vmatprep.subr.bf16.mxu0 0
    %2746 = vmatpush2.bf16.xpose.msra.mxu0 0
    %2747 = vmatprep.subr.bf16.mxu0 0
    %2748 = vmatpush2.bf16.xpose.msra.mxu0 0
    %2749 = vmatprep.mubr.bf16.mxu0 0
    %2750 = vmatmul.mubr.bf16.gmra.mxu0 %v2712
    %v2751 = vpop.f32.mrf.mxu0
    %v2752 = vadd.f32 0.0, %v2751
    %v2753 = vpop.f32.mrf.mxu0
    %v2754 = vpop.f32.mrf.mxu0
    %v2755 = vpop.f32.mrf.mxu0
    %2756 = vdwg.mxu0
    %2758 = vrot.lane.b32.xlu0 %v2702, 104
    %v2759 = vpop.permute.xlu0 %2758
    %2761 = vrot.lane.b32.xlu0 %v2704, 72
    %v2762 = vpop.permute.xlu0 %2761
    %v2764 = vsel %vm304, %v2759, 0
    %v2767 = vsel %vm304, %v2762, 0
    %2769 = vmatprep.subr.bf16.mxu0 0
    %2770 = vmatpush1.bf16.xpose.msra.mxu0 0
    %2771 = vmatprep.subr.bf16.mxu0 0
    %2772 = vmatpush1.bf16.xpose.msra.mxu0 0
    %2773 = vmatprep.subr.bf16.mxu0 0
    %2774 = vmatpush1.bf16.xpose.msra.mxu0 0
    %2775 = vmatprep.subr.bf16.mxu0 0
    %2776 = vmatpush1.bf16.xpose.msra.mxu0 0
    %2777 = vmatprep.subr.bf16.mxu0 0
    %2778 = vmatpush1.bf16.xpose.msra.mxu0 0
    %2779 = vmatprep.subr.bf16.mxu0 0
    %2780 = vmatpush1.bf16.xpose.msra.mxu0 0
    %2781 = vmatprep.subr.bf16.mxu0 0
    %2782 = vmatpush1.bf16.xpose.msra.mxu0 0
    %2783 = vmatprep.subr.bf16.mxu0 0
    %2784 = vmatpush1.bf16.xpose.msra.mxu0 %v2767
    %2785 = vmatprep.subr.bf16.mxu0 0
    %2786 = vmatpush2.bf16.xpose.msra.mxu0 0
    %2787 = vmatprep.subr.bf16.mxu0 0
    %2788 = vmatpush2.bf16.xpose.msra.mxu0 0
    %2789 = vmatprep.subr.bf16.mxu0 0
    %2790 = vmatpush2.bf16.xpose.msra.mxu0 0
    %2791 = vmatprep.subr.bf16.mxu0 0
    %2792 = vmatpush2.bf16.xpose.msra.mxu0 0
    %2793 = vmatprep.subr.bf16.mxu0 0
    %2794 = vmatpush2.bf16.xpose.msra.mxu0 0
    %2795 = vmatprep.subr.bf16.mxu0 0
    %2796 = vmatpush2.bf16.xpose.msra.mxu0 0
    %2797 = vmatprep.subr.bf16.mxu0 0
    %2798 = vmatpush2.bf16.xpose.msra.mxu0 0
    %2799 = vmatprep.subr.bf16.mxu0 0
    %2800 = vmatpush2.bf16.xpose.msra.mxu0 0
    %2801 = vmatprep.mubr.bf16.mxu0 0
    %2802 = vmatmul.mubr.bf16.gmra.mxu0 %v2764
    %v2803 = vpop.f32.mrf.mxu0
    %v2804 = vadd.f32 0.0, %v2803
    %v2805 = vpop.f32.mrf.mxu0
    %v2806 = vpop.f32.mrf.mxu0
    %v2807 = vpop.f32.mrf.mxu0
    %2808 = vdwg.mxu0
    %v2809 = vmul.f32 %v2752, 0.35355338
    %v2810 = vmul.f32 %v2804, 0.35355338
    %v2811 = vadd.f32 %v2809, %v147
    %v2812 = vadd.f32 %v2810, %v148
    %v2813 = vsel %vm304, %v2811, -inf
    %2814 = vmax.xlane.f32.xlu0 %v2813
    %v2815 = vpop.xlane.xlu0 %2814
    %v2816 = vsel %vm304, %v2812, -inf
    %2817 = vmax.xlane.f32.xlu0 %v2816
    %v2818 = vpop.xlane.xlu0 %2817
    %v2819 = vsub.f32 %v2811, %v2815
    %v2820 = vsub.f32 %v2812, %v2818
    %v2821 = vmul.f32 %v2819, 1.442695
    %v2822 = vpow.pop %v2821
    %v2823 = vmul.f32 %v2820, 1.442695
    %v2824 = vpow.pop %v2823
    %v2825 = vsel %vm304, %v2822, 0.0
    %2826 = vadd.xlane.f32.xlu0 %v2825
    %v2827 = vpop.xlane.xlu0 %2826
    %v2828 = vsel %vm304, %v2824, 0.0
    %2829 = vadd.xlane.f32.xlu0 %v2828
    %v2830 = vpop.xlane.xlu0 %2829
    %v2831 = vrcp.pop %v2827
    %v2832 = vrcp.pop %v2830
    %v2833 = vmul.f32 %v2822, %v2831
    %v2834 = vmul.f32 %v2824, %v2832
    %v2835 = vpack.c.bf16 %v2833, %v2833
    %v2836 = vpack.c.bf16 %v2834, %v2834
    %2837 = vrot.lane.b32.xlu0 %v1969, 40
    %v2838 = vpop.permute.xlu0 %2837
    %v2840 = vsel %vm304, %v2835, 0
    %v2843 = vsel %vm436, %v2838, 0
    %2845 = vmatprep.subr.bf16.mxu0 0
    %2846 = vmatpush1.bf16.msra.mxu0 0
    %2847 = vmatprep.subr.bf16.mxu0 0
    %2848 = vmatpush1.bf16.msra.mxu0 0
    %2849 = vmatprep.subr.bf16.mxu0 0
    %2850 = vmatpush1.bf16.msra.mxu0 0
    %2851 = vmatprep.subr.bf16.mxu0 0
    %2852 = vmatpush1.bf16.msra.mxu0 0
    %2853 = vmatprep.subr.bf16.mxu0 0
    %2854 = vmatpush1.bf16.msra.mxu0 0
    %2855 = vmatprep.subr.bf16.mxu0 0
    %2856 = vmatpush1.bf16.msra.mxu0 0
    %2857 = vmatprep.subr.bf16.mxu0 0
    %2858 = vmatpush1.bf16.msra.mxu0 0
    %2859 = vmatprep.subr.bf16.mxu0 0
    %2860 = vmatpush1.bf16.msra.mxu0 %v2843
    %2861 = vmatprep.subr.bf16.mxu0 0
    %2862 = vmatpush2.bf16.msra.mxu0 0
    %2863 = vmatprep.subr.bf16.mxu0 0
    %2864 = vmatpush2.bf16.msra.mxu0 0
    %2865 = vmatprep.subr.bf16.mxu0 0
    %2866 = vmatpush2.bf16.msra.mxu0 0
    %2867 = vmatprep.subr.bf16.mxu0 0
    %2868 = vmatpush2.bf16.msra.mxu0 0
    %2869 = vmatprep.subr.bf16.mxu0 0
    %2870 = vmatpush2.bf16.msra.mxu0 0
    %2871 = vmatprep.subr.bf16.mxu0 0
    %2872 = vmatpush2.bf16.msra.mxu0 0
    %2873 = vmatprep.subr.bf16.mxu0 0
    %2874 = vmatpush2.bf16.msra.mxu0 0
    %2875 = vmatprep.subr.bf16.mxu0 0
    %2876 = vmatpush2.bf16.msra.mxu0 0
    %2877 = vmatprep.mubr.bf16.mxu0 0
    %2878 = vmatmul.mubr.bf16.gmra.mxu0 %v2840
    %v2879 = vpop.f32.mrf.mxu0
    %v2880 = vadd.f32 0.0, %v2879
    %v2881 = vpop.f32.mrf.mxu0
    %v2882 = vpop.f32.mrf.mxu0
    %v2883 = vpop.f32.mrf.mxu0
    %2884 = vdwg.mxu0
    %2885 = vrot.lane.b32.xlu0 %v1970, 40
    %v2886 = vpop.permute.xlu0 %2885
    %v2888 = vsel %vm304, %v2836, 0
    %v2891 = vsel %vm436, %v2886, 0
    %2893 = vmatprep.subr.bf16.mxu0 0
    %2894 = vmatpush1.bf16.msra.mxu0 0
    %2895 = vmatprep.subr.bf16.mxu0 0
    %2896 = vmatpush1.bf16.msra.mxu0 0
    %2897 = vmatprep.subr.bf16.mxu0 0
    %2898 = vmatpush1.bf16.msra.mxu0 0
    %2899 = vmatprep.subr.bf16.mxu0 0
    %2900 = vmatpush1.bf16.msra.mxu0 0
    %2901 = vmatprep.subr.bf16.mxu0 0
    %2902 = vmatpush1.bf16.msra.mxu0 0
    %2903 = vmatprep.subr.bf16.mxu0 0
    %2904 = vmatpush1.bf16.msra.mxu0 0
    %2905 = vmatprep.subr.bf16.mxu0 0
    %2906 = vmatpush1.bf16.msra.mxu0 0
    %2907 = vmatprep.subr.bf16.mxu0 0
    %2908 = vmatpush1.bf16.msra.mxu0 %v2891
    %2909 = vmatprep.subr.bf16.mxu0 0
    %2910 = vmatpush2.bf16.msra.mxu0 0
    %2911 = vmatprep.subr.bf16.mxu0 0
    %2912 = vmatpush2.bf16.msra.mxu0 0
    %2913 = vmatprep.subr.bf16.mxu0 0
    %2914 = vmatpush2.bf16.msra.mxu0 0
    %2915 = vmatprep.subr.bf16.mxu0 0
    %2916 = vmatpush2.bf16.msra.mxu0 0
    %2917 = vmatprep.subr.bf16.mxu0 0
    %2918 = vmatpush2.bf16.msra.mxu0 0
    %2919 = vmatprep.subr.bf16.mxu0 0
    %2920 = vmatpush2.bf16.msra.mxu0 0
    %2921 = vmatprep.subr.bf16.mxu0 0
    %2922 = vmatpush2.bf16.msra.mxu0 0
    %2923 = vmatprep.subr.bf16.mxu0 0
    %2924 = vmatpush2.bf16.msra.mxu0 0
    %2925 = vmatprep.mubr.bf16.mxu0 0
    %2926 = vmatmul.mubr.bf16.gmra.mxu0 %v2888
    %v2927 = vpop.f32.mrf.mxu0
    %v2928 = vadd.f32 0.0, %v2927
    %v2929 = vpop.f32.mrf.mxu0
    %v2930 = vpop.f32.mrf.mxu0
    %v2931 = vpop.f32.mrf.mxu0
    %2932 = vdwg.mxu0
    %2935 = vrot.lane.b32.xlu0 %v2304, 8
    %v2936 = vpop.permute.xlu0 %2935
    %2937 = vrot.lane.b32.xlu0 %v2352, 8
    %v2938 = vpop.permute.xlu0 %2937
    %2943 = vrot.lane.b32.xlu0 %v2592, 16
    %v2944 = vpop.permute.xlu0 %2943
    %2945 = vrot.lane.b32.xlu0 %v2640, 16
    %v2946 = vpop.permute.xlu0 %2945
    %2951 = vrot.lane.b32.xlu0 %v2880, 24
    %v2952 = vpop.permute.xlu0 %2951
    %2953 = vrot.lane.b32.xlu0 %v2928, 24
    %v2954 = vpop.permute.xlu0 %2953
    %v2957 = vsel %vm304, %v2015, %v2936
    %v2958 = vsel %vm304, %v2064, %v2938
    %v2959 = vsel %vm1437, %v2957, %v2944
    %v2960 = vsel %vm1437, %v2958, %v2946
    %v2961 = vsel %vm1440, %v2959, %v2952
    %v2962 = vsel %vm1440, %v2960, %v2954
    %v2963 = vpack.c.bf16 %v2962, %v2961
    %s2964 = scalar_lea.vmem %s5, 16
    %v2965 = vld [vmem:[%s2964] sm:$0xf]
    %v2966 = vld [vmem:[%s2964 + $0x4] sm:$0xf]
    %v2967 = vld [vmem:[%s2964 + $0x8] sm:$0xf]
    %v2968 = vld [vmem:[%s2964 + $0xc] sm:$0xf]
    %v2973 = vunpack.c.l.b16 %v2965
    %v2974 = vunpack.c.l.b16 %v2966
    %v2975 = vunpack.c.l.b16 %v2967
    %v2976 = vunpack.c.l.b16 %v2968
    %v2977 = vpack.c.b16 %v2974, %v2973
    %v2978 = vpack.c.b16 %v2976, %v2975
    %v2982 = vsel %vm154, %v2963, 0
    %2984 = vmatprep.subr.bf16.mxu0 0
    %2985 = vmatpush1.bf16.msra.mxu0 0
    %2986 = vmatprep.subr.bf16.mxu0 0
    %2987 = vmatpush1.bf16.msra.mxu0 0
    %2988 = vmatprep.subr.bf16.mxu0 0
    %2989 = vmatpush1.bf16.msra.mxu0 0
    %2990 = vmatprep.subr.bf16.mxu0 0
    %2991 = vmatpush1.bf16.msra.mxu0 0
    %2992 = vmatprep.subr.bf16.mxu0 0
    %2993 = vmatpush1.bf16.msra.mxu0 0
    %2994 = vmatprep.subr.bf16.mxu0 0
    %2995 = vmatpush1.bf16.msra.mxu0 0
    %2996 = vmatprep.subr.bf16.mxu0 0
    %2997 = vmatpush1.bf16.msra.mxu0 %v2978
    %2998 = vmatprep.subr.bf16.mxu0 0
    %2999 = vmatpush1.bf16.msra.mxu0 %v2977
    %3000 = vmatprep.subr.bf16.mxu0 0
    %3001 = vmatpush2.bf16.msra.mxu0 0
    %3002 = vmatprep.subr.bf16.mxu0 0
    %3003 = vmatpush2.bf16.msra.mxu0 0
    %3004 = vmatprep.subr.bf16.mxu0 0
    %3005 = vmatpush2.bf16.msra.mxu0 0
    %3006 = vmatprep.subr.bf16.mxu0 0
    %3007 = vmatpush2.bf16.msra.mxu0 0
    %3008 = vmatprep.subr.bf16.mxu0 0
    %3009 = vmatpush2.bf16.msra.mxu0 0
    %3010 = vmatprep.subr.bf16.mxu0 0
    %3011 = vmatpush2.bf16.msra.mxu0 0
    %3012 = vmatprep.subr.bf16.mxu0 0
    %3013 = vmatpush2.bf16.msra.mxu0 0
    %3014 = vmatprep.subr.bf16.mxu0 0
    %3015 = vmatpush2.bf16.msra.mxu0 0
    %3016 = vmatprep.mubr.bf16.mxu0 0
    %3017 = vmatmul.mubr.bf16.gmra.mxu0 %v2982
    %v3018 = vpop.f32.mrf.mxu0
    %v3019 = vadd.f32 0.0, %v3018
    %v3020 = vpop.f32.mrf.mxu0
    %v3021 = vpop.f32.mrf.mxu0
    %v3022 = vadd.f32 0.0, %v3021
    %v3023 = vpop.f32.mrf.mxu0
    %3024 = vdwg.mxu0
    %v3025 = vadd.f32 %v1696, %v3019
    %v3026 = vadd.f32 %v1697, %v3022
    %s3027 = scalar_lea.vmem %s9, 1
    %v3028 = vld [vmem:[%s3027] sm:$0x1]
    %v3029 = vmul.f32 %v3025, %v3025
    %v3030 = vmul.f32 %v3026, %v3026
    %v3031 = vsel %vm154, %v3029, 0.0
    %3032 = vadd.xlane.f32.xlu0 %v3031
    %v3033 = vpop.xlane.xlu0 %3032
    %v3034 = vsel %vm154, %v3030, 0.0
    %3035 = vadd.xlane.f32.xlu0 %v3034
    %v3036 = vpop.xlane.xlu0 %3035
    %v3037 = vmul.f32 %v3033, %v161
    %v3038 = vmul.f32 %v3036, %v161
    %v3039 = vadd.f32 %v3037, 1e-05
    %v3040 = vadd.f32 %v3038, 1e-05
    %v3041 = vrsqrt.pop %v3039
    %v3042 = vrsqrt.pop %v3040
    %v3043 = vmul.f32 %v3025, %v3041
    %v3044 = vmul.f32 %v3026, %v3042
    %v3045 = vunpack.c.l.bf16 %v3028
    %v3046 = vlaneseq
    %v3047 = vshrl.u32 %v3046, 7
    %v3048 = vsub.s32 0, %v3047
    %v3049 = vrot.slane %v3045, %v3048
    %v3050 = vmul.f32 %v3043, %v3049
    %v3051 = vmul.f32 %v3044, %v3049
    %v3052 = vpack.c.bf16 %v3051, %v3050
    %s3053 = scalar_lea.vmem %s6, 16
    %v3054 = vld [vmem:[%s3053] sm:$0xf]
    %v3055 = vld [vmem:[%s3053 + $0x4] sm:$0xf]
    %v3056 = vld [vmem:[%s3053 + $0x8] sm:$0xf]
    %v3057 = vld [vmem:[%s3053 + $0xc] sm:$0xf]
    %v3062 = vunpack.c.l.b16 %v3054
    %v3063 = vunpack.c.l.b16 %v3055
    %v3064 = vunpack.c.l.b16 %v3056
    %v3065 = vunpack.c.l.b16 %v3057
    %v3066 = vpack.c.b16 %v3063, %v3062
    %v3067 = vpack.c.b16 %v3065, %v3064
    %v3071 = vsel %vm154, %v3052, 0
    %3073 = vmatprep.subr.bf16.mxu0 0
    %3074 = vmatpush1.bf16.msra.mxu0 0
    %3075 = vmatprep.subr.bf16.mxu0 0
    %3076 = vmatpush1.bf16.msra.mxu0 0
    %3077 = vmatprep.subr.bf16.mxu0 0
    %3078 = vmatpush1.bf16.msra.mxu0 0
    %3079 = vmatprep.subr.bf16.mxu0 0
    %3080 = vmatpush1.bf16.msra.mxu0 0
    %3081 = vmatprep.subr.bf16.mxu0 0
    %3082 = vmatpush1.bf16.msra.mxu0 0
    %3083 = vmatprep.subr.bf16.mxu0 0
    %3084 = vmatpush1.bf16.msra.mxu0 0
    %3085 = vmatprep.subr.bf16.mxu0 0
    %3086 = vmatpush1.bf16.msra.mxu0 %v3067
    %3087 = vmatprep.subr.bf16.mxu0 0
    %3088 = vmatpush1.bf16.msra.mxu0 %v3066
    %3089 = vmatprep.subr.bf16.mxu0 0
    %3090 = vmatpush2.bf16.msra.mxu0 0
    %3091 = vmatprep.subr.bf16.mxu0 0
    %3092 = vmatpush2.bf16.msra.mxu0 0
    %3093 = vmatprep.subr.bf16.mxu0 0
    %3094 = vmatpush2.bf16.msra.mxu0 0
    %3095 = vmatprep.subr.bf16.mxu0 0
    %3096 = vmatpush2.bf16.msra.mxu0 0
    %3097 = vmatprep.subr.bf16.mxu0 0
    %3098 = vmatpush2.bf16.msra.mxu0 0
    %3099 = vmatprep.subr.bf16.mxu0 0
    %3100 = vmatpush2.bf16.msra.mxu0 0
    %3101 = vmatprep.subr.bf16.mxu0 0
    %3102 = vmatpush2.bf16.msra.mxu0 0
    %3103 = vmatprep.subr.bf16.mxu0 0
    %3104 = vmatpush2.bf16.msra.mxu0 0
    %3105 = vmatprep.mubr.bf16.mxu0 0
    %3106 = vmatmul.mubr.bf16.gmra.mxu0 %v3071
    %v3107 = vpop.f32.mrf.mxu0
    %v3108 = vadd.f32 0.0, %v3107
    %v3109 = vpop.f32.mrf.mxu0
    %v3110 = vpop.f32.mrf.mxu0
    %v3111 = vadd.f32 0.0, %v3110
    %v3112 = vpop.f32.mrf.mxu0
    %3113 = vdwg.mxu0
    %v3114 = vxor.u32 %v3108, 2147483648
    %v3115 = vxor.u32 %v3111, 2147483648
    %v3116 = vmul.f32 %v3114, 1.442695
    %v3117 = vpow.pop %v3116
    %v3118 = vmul.f32 %v3115, 1.442695
    %v3119 = vpow.pop %v3118
    %v3120 = vadd.f32 %v3117, 1.0
    %v3121 = vadd.f32 %v3119, 1.0
    %v3122 = vrcp.pop %v3120
    %v3123 = vmul.f32 1.0, %v3122
    %v3124 = vrcp.pop %v3121
    %v3125 = vmul.f32 1.0, %v3124
    %v3126 = vmul.f32 %v3108, %v3123
    %v3127 = vmul.f32 %v3111, %v3125
    %3130 = vrot.lane.b32.xlu0 %v3108, 64
    %v3131 = vpop.permute.xlu0 %3130
    %3132 = vrot.lane.b32.xlu0 %v3111, 64
    %v3133 = vpop.permute.xlu0 %3132
    %v3136 = vmul.f32 %v3126, %v3131
    %v3137 = vmul.f32 %v3127, %v3133
    %v3138 = vpack.c.bf16 %v3137, %v3136
    %s3139 = scalar_lea.vmem %s7, 32
    %v3140 = vld [vmem:[%s3139] sm:$0xf]
    %v3141 = vld [vmem:[%s3139 + $0x4] sm:$0xf]
    %v3142 = vld [vmem:[%s3139 + $0x8] sm:$0xf]
    %v3143 = vld [vmem:[%s3139 + $0xc] sm:$0xf]
    %v3144 = vld [vmem:[%s3139 + $0x10] sm:$0xf]
    %v3145 = vld [vmem:[%s3139 + $0x14] sm:$0xf]
    %v3146 = vld [vmem:[%s3139 + $0x18] sm:$0xf]
    %v3147 = vld [vmem:[%s3139 + $0x1c] sm:$0xf]
    %v3156 = vunpack.c.l.b16 %v3140
    %v3157 = vunpack.c.l.b16 %v3141
    %v3158 = vunpack.c.l.b16 %v3142
    %v3159 = vunpack.c.l.b16 %v3143
    %v3160 = vunpack.c.l.b16 %v3144
    %v3161 = vunpack.c.l.b16 %v3145
    %v3162 = vunpack.c.l.b16 %v3146
    %v3163 = vunpack.c.l.b16 %v3147
    %v3164 = vpack.c.b16 %v3157, %v3156
    %v3165 = vpack.c.b16 %v3159, %v3158
    %v3166 = vpack.c.b16 %v3161, %v3160
    %v3167 = vpack.c.b16 %v3163, %v3162
    %v3173 = vsel %vm1648, %v3138, 0
    %3175 = vmatprep.subr.bf16.mxu0 0
    %3176 = vmatpush1.bf16.msra.mxu0 0
    %3177 = vmatprep.subr.bf16.mxu0 0
    %3178 = vmatpush1.bf16.msra.mxu0 0
    %3179 = vmatprep.subr.bf16.mxu0 0
    %3180 = vmatpush1.bf16.msra.mxu0 0
    %3181 = vmatprep.subr.bf16.mxu0 0
    %3182 = vmatpush1.bf16.msra.mxu0 0
    %3183 = vmatprep.subr.bf16.mxu0 0
    %3184 = vmatpush1.bf16.msra.mxu0 %v3167
    %3185 = vmatprep.subr.bf16.mxu0 0
    %3186 = vmatpush1.bf16.msra.mxu0 %v3166
    %3187 = vmatprep.subr.bf16.mxu0 0
    %3188 = vmatpush1.bf16.msra.mxu0 %v3165
    %3189 = vmatprep.subr.bf16.mxu0 0
    %3190 = vmatpush1.bf16.msra.mxu0 %v3164
    %3191 = vmatprep.subr.bf16.mxu0 0
    %3192 = vmatpush2.bf16.msra.mxu0 0
    %3193 = vmatprep.subr.bf16.mxu0 0
    %3194 = vmatpush2.bf16.msra.mxu0 0
    %3195 = vmatprep.subr.bf16.mxu0 0
    %3196 = vmatpush2.bf16.msra.mxu0 0
    %3197 = vmatprep.subr.bf16.mxu0 0
    %3198 = vmatpush2.bf16.msra.mxu0 0
    %3199 = vmatprep.subr.bf16.mxu0 0
    %3200 = vmatpush2.bf16.msra.mxu0 0
    %3201 = vmatprep.subr.bf16.mxu0 0
    %3202 = vmatpush2.bf16.msra.mxu0 0
    %3203 = vmatprep.subr.bf16.mxu0 0
    %3204 = vmatpush2.bf16.msra.mxu0 0
    %3205 = vmatprep.subr.bf16.mxu0 0
    %3206 = vmatpush2.bf16.msra.mxu0 0
    %3207 = vmatprep.mubr.bf16.mxu0 0
    %3208 = vmatmul.mubr.bf16.gmra.mxu0 %v3173
    %v3209 = vpop.f32.mrf.mxu0
    %v3210 = vadd.f32 0.0, %v3209
    %v3211 = vpop.f32.mrf.mxu0
    %v3212 = vpop.f32.mrf.mxu0
    %v3213 = vadd.f32 0.0, %v3212
    %v3214 = vpop.f32.mrf.mxu0
    %3215 = vdwg.mxu0
    %v3216 = vadd.f32 %v3025, %v3210
    %v3217 = vadd.f32 %v3026, %v3213
    %v3218 = vpack.c.bf16 %v3217, %v3216
    %v3220 = vunpack.c.l.b16 %v3218
    %v3221 = vunpack.c.h.b16 %v3218
    %v3222 = vpack.c.b16 %v3220, %v3220
    %v3223 = vpack.c.b16 %v3221, %v3221
    %vm3226 = vcmask 257024
    %3227 = vst.msk [vmem:[#allocation11] sm:$0xf] %vm3226, %v3222
    %3228 = vst.msk [vmem:[#allocation11 + $0x4] sm:$0xf] %vm3226, %v3223
    %v3229 = vunpack.c.l.bf16 %v3218
    %v3230 = vunpack.c.h.bf16 %v3218
    %v3231 = vld [vmem:[%s10] sm:$0x1]
    %v3232 = vmul.f32 %v3229, %v3229
    %v3233 = vmul.f32 %v3230, %v3230
    %v3234 = vsel %vm154, %v3232, 0.0
    %3235 = vadd.xlane.f32.xlu0 %v3234
    %v3236 = vpop.xlane.xlu0 %3235
    %v3237 = vsel %vm154, %v3233, 0.0
    %3238 = vadd.xlane.f32.xlu0 %v3237
    %v3239 = vpop.xlane.xlu0 %3238
    %v3240 = vmul.f32 %v3236, %v161
    %v3241 = vmul.f32 %v3239, %v161
    %v3242 = vadd.f32 %v3240, 1e-05
    %v3243 = vadd.f32 %v3241, 1e-05
    %v3244 = vrsqrt.pop %v3242
    %v3245 = vrsqrt.pop %v3243
    %v3246 = vmul.f32 %v3229, %v3244
    %v3247 = vmul.f32 %v3230, %v3245
    %v3248 = vunpack.c.l.bf16 %v3231
    %v3249 = vlaneseq
    %v3250 = vshrl.u32 %v3249, 7
    %v3251 = vsub.s32 0, %v3250
    %v3252 = vrot.slane %v3248, %v3251
    %v3253 = vmul.f32 %v3246, %v3252
    %v3254 = vmul.f32 %v3247, %v3252
    %v3255 = vpack.c.bf16 %v3254, %v3253
    %v3256 = vld [vmem:[%s11] sm:$0xf]
    %v3257 = vld [vmem:[%s11 + $0x4] sm:$0xf]
    %v3258 = vld [vmem:[%s11 + $0x8] sm:$0xf]
    %v3259 = vld [vmem:[%s11 + $0xc] sm:$0xf]
    %v3264 = vunpack.c.l.b16 %v3256
    %v3265 = vunpack.c.l.b16 %v3257
    %v3266 = vunpack.c.l.b16 %v3258
    %v3267 = vunpack.c.l.b16 %v3259
    %v3268 = vpack.c.b16 %v3265, %v3264
    %v3269 = vpack.c.b16 %v3267, %v3266
    %v3273 = vsel %vm154, %v3255, 0
    %3275 = vmatprep.subr.bf16.mxu0 0
    %3276 = vmatpush1.bf16.msra.mxu0 0
    %3277 = vmatprep.subr.bf16.mxu0 0
    %3278 = vmatpush1.bf16.msra.mxu0 0
    %3279 = vmatprep.subr.bf16.mxu0 0
    %3280 = vmatpush1.bf16.msra.mxu0 0
    %3281 = vmatprep.subr.bf16.mxu0 0
    %3282 = vmatpush1.bf16.msra.mxu0 0
    %3283 = vmatprep.subr.bf16.mxu0 0
    %3284 = vmatpush1.bf16.msra.mxu0 0
    %3285 = vmatprep.subr.bf16.mxu0 0
    %3286 = vmatpush1.bf16.msra.mxu0 0
    %3287 = vmatprep.subr.bf16.mxu0 0
    %3288 = vmatpush1.bf16.msra.mxu0 %v3269
    %3289 = vmatprep.subr.bf16.mxu0 0
    %3290 = vmatpush1.bf16.msra.mxu0 %v3268
    %3291 = vmatprep.subr.bf16.mxu0 0
    %3292 = vmatpush2.bf16.msra.mxu0 0
    %3293 = vmatprep.subr.bf16.mxu0 0
    %3294 = vmatpush2.bf16.msra.mxu0 0
    %3295 = vmatprep.subr.bf16.mxu0 0
    %3296 = vmatpush2.bf16.msra.mxu0 0
    %3297 = vmatprep.subr.bf16.mxu0 0
    %3298 = vmatpush2.bf16.msra.mxu0 0
    %3299 = vmatprep.subr.bf16.mxu0 0
    %3300 = vmatpush2.bf16.msra.mxu0 0
    %3301 = vmatprep.subr.bf16.mxu0 0
    %3302 = vmatpush2.bf16.msra.mxu0 0
    %3303 = vmatprep.subr.bf16.mxu0 0
    %3304 = vmatpush2.bf16.msra.mxu0 0
    %3305 = vmatprep.subr.bf16.mxu0 0
    %3306 = vmatpush2.bf16.msra.mxu0 0
    %3307 = vmatprep.mubr.bf16.mxu0 0
    %3308 = vmatmul.mubr.bf16.gmra.mxu0 %v3273
    %v3309 = vpop.f32.mrf.mxu0
    %v3310 = vadd.f32 0.0, %v3309
    %v3311 = vpop.f32.mrf.mxu0
    %v3312 = vpop.f32.mrf.mxu0
    %v3313 = vadd.f32 0.0, %v3312
    %v3314 = vpop.f32.mrf.mxu0
    %3315 = vdwg.mxu0
    %3316 = vst [vmem:[#allocation10] sm:$0xff] %v3310
    %3317 = vst [vmem:[#allocation10 + $0x8] sm:$0xff] %v3313
    // Predicated region
    $region66: #{tpu_custom_call.1} parent=1 // pred_check
      _
    $region67: #{tpu_custom_call.1} parent=1 // pred_check_branch
      %3319 = sbr.rel (0) target = $region69
    $region68: #{tpu_custom_call.1} parent=1 // pred_region
      %s3321 = ssub.s32 256, 256
      %3322 = vsyncadd [#allocation4], %s3321
      %s3323 = sshll.u32 [#allocation10], 4
      %s3324 = int_to_ptr.vmem [resolvable:$true] %s3323
      %3329 = dma.vmem_to_hbm [thread:$0]  %s3324, 256, %s12, [#allocation4], 128, 128, 8
    $region69: #{tpu_custom_call.1} parent=1 // pred_fallthru
      _
    // Predicated region
    $region70: #{tpu_custom_call.1} parent=1 // pred_check
      _
    $region71: #{tpu_custom_call.1} parent=1 // pred_check_branch
      %3331 = sbr.rel (0) target = $region73
    $region72: #{tpu_custom_call.1} parent=1 // pred_region
      %s3333 = ssub.s32 128, 128
      %3334 = vsyncadd [#allocation12], %s3333
      %s3335 = sshll.u32 [#allocation11], 4
      %s3336 = int_to_ptr.vmem [resolvable:$true] %s3335
      %3341 = dma.vmem_to_hbm [thread:$0]  %s3336, 128, %s13, [#allocation12], 64, 64, 4
    $region73: #{tpu_custom_call.1} parent=1 // pred_fallthru
      _
    // Predicated region
    $region74: #{tpu_custom_call.1} parent=1 // pred_check
      _
    $region75: #{tpu_custom_call.1} parent=1 // pred_check_branch
      %3343 = sbr.rel (0) target = $region77
    $region76: #{tpu_custom_call.1} parent=1 // pred_region
      %3344 = dma.done [#allocation4], 256
    $region77: #{tpu_custom_call.1} parent=1 // pred_fallthru
      _
    // Predicated region
    $region78: #{tpu_custom_call.1} parent=1 // pred_check
      _
    $region79: #{tpu_custom_call.1} parent=1 // pred_check_branch
      %3346 = sbr.rel (0) target = $region81
    $region80: #{tpu_custom_call.1} parent=1 // pred_region
      %3347 = dma.done [#allocation12], 128
    $region81: #{tpu_custom_call.1} parent=1 // pred_fallthru
      _
    %3348 = vsyncpa [#allocation3], 1
    %3349 = vsyncpa [#allocation6], 1
    %3350 = vsyncpa [#allocation9], 1
    %3351 = vsyncpa [#allocation4], 1
    %3352 = vsyncpa [#allocation12], 1

</llo_original>
